<compile_context>
chip_gen: v7x
topology: tpu7x:2x2x1
jax: 0.10.0
libtpu: 0.0.40
codegen_flags: <defaults>
</compile_context>

<pallas_src>
import functools
import numpy as np
import jax
import jax.numpy as jnp
from jax.experimental import pallas as pl
from jax.experimental.pallas import tpu as pltpu


# ----------------------------------------------------------------------------
# frequency-mode selection (identical to the PyTorch helper)
# ----------------------------------------------------------------------------
def get_frequency_modes(seq_len, modes=64, mode_select_method="random"):
    modes = min(modes, seq_len // 2)
    if mode_select_method == "random":
        index = list(range(0, seq_len // 2))
        np.random.shuffle(index)
        index = index[:modes]
    else:
        index = list(range(0, modes))
    index.sort()
    return index, modes


# ----------------------------------------------------------------------------
# Pallas kernels
# ----------------------------------------------------------------------------
def _proj_kernel(x_ref, w_ref, o_ref):
    # (tm, Din) @ (Din, Dout): bf16 MXU inputs (cast in wrapper), f32 accumulation.
    o_ref[...] = jnp.dot(x_ref[...], w_ref[...], preferred_element_type=jnp.float32)


def fused_proj_pallas(x2d_bf16, w_bf16, tm=512):
    """All projections in one matmul: x2d (M, Din) @ w (Din, Dout), bf16 in / f32 out."""
    M, Din = x2d_bf16.shape
    Dout = w_bf16.shape[1]
    gm = pl.cdiv(M, tm)
    mp = gm * tm
    if mp != M:
        x2d_bf16 = jnp.pad(x2d_bf16, ((0, mp - M), (0, 0)))
    out = pl.pallas_call(
        _proj_kernel,
        out_shape=jax.ShapeDtypeStruct((mp, Dout), jnp.float32),
        grid=(gm,),
        in_specs=[pl.BlockSpec((tm, Din), lambda i: (i, 0)),
                  pl.BlockSpec((Din, Dout), lambda i: (0, 0))],
        out_specs=pl.BlockSpec((tm, Dout), lambda i: (i, 0)),
        compiler_params=pltpu.CompilerParams(dimension_semantics=("parallel",)),
    )(x2d_bf16, w_bf16)
    return out[:M] if mp != M else out


def _gcn_kernel(a_ref, y_ref, o_ref):
    # a: (N, N), y: (N, B*T*D) lane-dense; bf16 MXU inputs, f32 accumulation.
    o_ref[...] = jnp.dot(a_ref[...], y_ref[...], preferred_element_type=jnp.float32)


def gcn_pallas(a_bf16, y_bf16):
    """a_norm (N, N) @ y (N, B*T*D), single full block (grid=1)."""
    N, L = y_bf16.shape
    return pl.pallas_call(
        _gcn_kernel,
        out_shape=jax.ShapeDtypeStruct((N, L), jnp.float32),
        grid=(1,),
        in_specs=[pl.BlockSpec((N, N), lambda i: (0, 0)),
                  pl.BlockSpec((N, L), lambda i: (0, 0))],
        out_specs=pl.BlockSpec((N, L), lambda i: (0, 0)),
    )(a_bf16, y_bf16)


def _freq_kernel(qkv_ref, w_ref, or_ref, oi_ref, *, scale, branch_ids):
    """One grid step = one attention branch (0 = spatial 'sp', 1 = temporal 'te').

    qkv_ref: (6, m, d, g)   stacked [Qr, Qi, Kr, Ki, Vr, Vi], g = groups on lanes
    w_ref  : (m-1, m, d, 1) un-broadcast |weights| (lane-broadcast in-kernel)
    or_ref / oi_ref: (m, d, g) real / imag outputs
    """
    qr, qi = qkv_ref[0], qkv_ref[1]
    kr, ki = qkv_ref[2], qkv_ref[3]
    vr, vi = qkv_ref[4], qkv_ref[5]
    kabs = jnp.sqrt(kr * kr + ki * ki) * scale      # (m, d, g)
    qabs = jnp.sqrt(qr * qr + qi * qi)              # (m, d, g)
    w = w_ref[...]                                  # (m-1, m, d, 1)
    n_modes = qr.shape[0]

    def sp_branch():
        # mag[i, n, d, g]: i == 0 -> |K_0||Q_n| ; i >= 1 -> |K_i| |wQ[i-1, n]|
        mag0 = kabs[0][None] * qabs                         # (n, d, g)      i = 0
        magr = kabs[1:, None] * w                           # (i-1, n, d, g) i >= 1
        mx = jnp.maximum(mag0, jnp.max(magr, axis=0))       # (n, d, g)
        e0 = jnp.exp(mag0 - mx)
        er = jnp.exp(magr - mx[None])
        inv = pl.reciprocal(e0 + jnp.sum(er, axis=0), approx=True)
        abar0 = jnp.mean(e0 * inv, axis=0)                  # (d, g)
        abarr = jnp.mean(er * inv[None], axis=1)            # (i-1, d, g)
        abar = jnp.concatenate([abar0[None], abarr], axis=0)  # (m, d, g) (small)
        or_ref[...] = vr * abar
        oi_ref[...] = vi * abar

    def te_branch():
        # mag[i, m, d, g]: i == 0 -> |K_m||Q_m| ; i >= 1 -> |K_m| |wQt[i-1, m]| * mask
        mag0 = kabs * qabs                                  # (m, d, g)      i = 0
        magr = kabs[None] * w                               # (i-1, m, d, g) i >= 1
        mx = jnp.maximum(mag0, jnp.max(magr, axis=0))       # (m, d, g)
        e0 = jnp.exp(mag0 - mx)
        er = jnp.exp(magr - mx[None])
        inv = pl.reciprocal(e0 + jnp.sum(er, axis=0), approx=True)
        abar = (e0 * inv + jnp.sum(er * inv[None], axis=0)) * (1.0 / n_modes)
        or_ref[...] = vr * abar
        oi_ref[...] = vi * abar

    bodies = (sp_branch, te_branch)
    if len(branch_ids) == 1:
        bodies[branch_ids[0]]()
    else:
        for step, bid in enumerate(branch_ids):
            pl.when(pl.program_id(0) == step)(bodies[bid])


def freq_attention_pallas(qkv_list, w_list, scale):
    """qkv_list[b]: (6, m, hd, g) f32; w_list[b]: (m-1, m, hd) f32.
    Returns [(out_real, out_imag)] per branch, each (m, hd, g)."""
    same = all(q.shape == qkv_list[0].shape for q in qkv_list)
    if same:
        groups = [tuple(range(len(qkv_list)))]        # one call, one branch per step
    else:
        groups = [(b,) for b in range(len(qkv_list))]  # fallback: one call per branch
    results = [None] * len(qkv_list)
    for branch_ids in groups:
        qkv = jnp.stack([qkv_list[b] for b in branch_ids], axis=0)      # (nb, 6, m, d, g)
        w = jnp.stack([w_list[b] for b in branch_ids], axis=0)[..., None]  # (nb, m-1, m, d, 1)
        nb, _, m, d, g = qkv.shape
        out_r, out_i = pl.pallas_call(
            functools.partial(_freq_kernel, scale=scale, branch_ids=branch_ids),
            out_shape=(jax.ShapeDtypeStruct((nb, m, d, g), jnp.float32),
                       jax.ShapeDtypeStruct((nb, m, d, g), jnp.float32)),
            grid=(nb,),
            in_specs=[pl.BlockSpec((None, 6, m, d, g), lambda i: (i, 0, 0, 0, 0)),
                      pl.BlockSpec((None, m - 1, m, d, 1), lambda i: (i, 0, 0, 0, 0))],
            out_specs=(pl.BlockSpec((None, m, d, g), lambda i: (i, 0, 0, 0)),
                       pl.BlockSpec((None, m, d, g), lambda i: (i, 0, 0, 0))),
            compiler_params=pltpu.CompilerParams(dimension_semantics=("parallel",)),
        )(qkv, w)
        for j, b in enumerate(branch_ids):
            results[b] = (out_r[j], out_i[j])
    return results


# ----------------------------------------------------------------------------
# layout helpers (glue): put the flattened group axis on lanes (128 groups)
# ----------------------------------------------------------------------------
def _freq_layout(z):
    # z: (A, C, h, hd, m) real -> (m, hd, A*C*h)
    a, c, hh, d, m = z.shape
    return z.transpose(4, 3, 0, 1, 2).reshape(m, d, a * c * hh)


def _freq_unlayout(z, shape5):
    # inverse of _freq_layout: (m, hd, G) -> (A, C, h, hd, m)
    a, c, hh, d, m = shape5
    return z.reshape(m, d, a, c, hh).transpose(2, 3, 4, 1, 0)


# ----------------------------------------------------------------------------
# Pallas forward pass (kernels for the hot paths, JAX glue for FFT/reshape)
# ----------------------------------------------------------------------------
def attention_forward_pallas(x, adj, params, cfg):
    B, T, N, D = x.shape
    h = cfg["num_heads"]
    hd = D // h
    scale = hd ** (-0.5)
    idx_sp = jnp.array(cfg["index_sp"], jnp.int32)
    idx_te = jnp.array(cfg["index_te"], jnp.int32)
    modes, mT = len(cfg["index_sp"]), len(cfg["index_te"])

    # ---- fused projections: [gcn fc1@mlp, geo_q, geo_k, geo_v, t_q, t_k, t_v] ----
    w12 = jnp.dot(params["gcn_fc1_w"], params["gcn_mlp_w"])               # (D, D)
    w_all = jnp.concatenate(
        [w12, params["geo_q_w"], params["geo_k_w"], params["geo_v_w"],
         params["t_q_w"], params["t_k_w"], params["t_v_w"]], axis=1)      # (D, 7D)
    n_proj = 7
    dout = w_all.shape[1]
    dout_pad = ((dout + 127) // 128) * 128                                # 224 -> 256 lanes
    if dout_pad != dout:
        w_all = jnp.pad(w_all, ((0, 0), (0, dout_pad - dout)))
    y_flat = fused_proj_pallas(x.reshape(-1, D).astype(jnp.bfloat16),
                               w_all.astype(jnp.bfloat16))
    y_all = y_flat[:, : n_proj * D].reshape(B, T, N, n_proj, D)
    y_gcn = y_all[..., 0, :]
    gq, gk, gv = y_all[..., 1, :], y_all[..., 2, :], y_all[..., 3, :]
    tq, tk, tv = y_all[..., 4, :], y_all[..., 5, :], y_all[..., 6, :]

    # ---- GCN branch: a_norm @ (x @ W1 @ W2) + b2, lane-dense over B*T*D ----
    deg = adj.sum(axis=1)
    a_norm = (adj / deg[:, None]).astype(jnp.bfloat16)
    y_nl = y_gcn.transpose(2, 0, 1, 3).reshape(N, B * T * D).astype(jnp.bfloat16)
    gcn_out = (gcn_pallas(a_norm, y_nl).reshape(N, B, T, D).transpose(1, 2, 0, 3)
               + params["gcn_mlp_b"])

    # ---- spatial frequency branch ('sp') ----
    to_sp = lambda t: t.reshape(B, T, N, h, hd).transpose(0, 1, 3, 4, 2)   # (B,T,h,hd,N)
    q_ = to_sp(gq) / jnp.linalg.norm(gq)
    k_ = to_sp(gk) / jnp.linalg.norm(gk)
    v_ = to_sp(gv)
    Qs = jnp.fft.rfft(q_, axis=-1)[..., idx_sp]        # (B,T,h,hd,modes) complex64
    Ks = jnp.fft.rfft(k_, axis=-1)[..., idx_sp]
    Vs = jnp.fft.rfft(v_, axis=-1)[..., idx_sp]
    qkv_sp = jnp.stack([_freq_layout(jnp.real(Qs)), _freq_layout(jnp.imag(Qs)),
                        _freq_layout(jnp.real(Ks)), _freq_layout(jnp.imag(Ks)),
                        _freq_layout(jnp.real(Vs)), _freq_layout(jnp.imag(Vs))], axis=0)
    w_sp = jnp.abs(params["weights_Q"]).transpose(1, 0, 2)                 # (modes-1, modes, hd)

    # ---- temporal frequency branch ('te') ----
    # NOTE: replicates PyTorch's raw reshape(B, N, T, h, hd) memory reinterpretation.
    to_te = lambda t: t.reshape(B, N, T, h, hd).transpose(0, 1, 3, 4, 2)   # (B,N,h,hd,T)
    q_ = to_te(tq); q_ = q_ / jnp.linalg.norm(q_)
    k_ = to_te(tk); k_ = k_ / jnp.linalg.norm(k_)
    v_ = to_te(tv)
    Qt = jnp.fft.rfft(q_, axis=-1)[..., idx_te]        # (B,N,h,hd,mT) complex64
    Kt = jnp.fft.rfft(k_, axis=-1)[..., idx_te]
    Vt = jnp.fft.rfft(v_, axis=-1)[..., idx_te]
    qkv_te = jnp.stack([_freq_layout(jnp.real(Qt)), _freq_layout(jnp.imag(Qt)),
                        _freq_layout(jnp.real(Kt)), _freq_layout(jnp.imag(Kt)),
                        _freq_layout(jnp.real(Vt)), _freq_layout(jnp.imag(Vt))], axis=0)
    mask = jnp.tril(jnp.ones((mT, mT), jnp.float32))
    w_te = (jnp.abs(params["weights_Q_t"]).transpose(1, 0, 2)
            * mask[:, 1:].T[:, :, None])                                   # (mT-1, mT, hd)

    (sp_r, sp_i), (te_r, te_i) = freq_attention_pallas(
        [qkv_sp, qkv_te], [w_sp, w_te], scale)

    sp_c = (_freq_unlayout(sp_r, (B, T, h, hd, modes))
            + 1j * _freq_unlayout(sp_i, (B, T, h, hd, modes))).astype(jnp.complex64)
    out_ft = jnp.zeros((B, T, h, hd, N // 2 + 1), jnp.complex64).at[..., idx_sp].set(sp_c)
    sp_x = jnp.fft.irfft(out_ft, n=N, axis=-1).transpose(0, 1, 4, 2, 3).reshape(B, T, N, D)

    te_c = (_freq_unlayout(te_r, (B, N, h, hd, mT))
            + 1j * _freq_unlayout(te_i, (B, N, h, hd, mT))).astype(jnp.complex64)
    out_ft = jnp.zeros((B, N, h, hd, T // 2 + 1), jnp.complex64).at[..., idx_te].set(te_c)
    te_x = jnp.fft.irfft(out_ft, n=T, axis=-1).transpose(0, 4, 1, 2, 3).reshape(B, T, N, D)

    # proj_drop(p=0) is identity
    return gcn_out + sp_x + te_x


# ----------------------------------------------------------------------------
# plain-JAX reference (faithful to the PyTorch module; correctness oracle)
# ----------------------------------------------------------------------------
def _softmax(x, axis):
    m = jnp.max(x, axis=axis, keepdims=True)
    e = jnp.exp(x - m)
    return e / jnp.sum(e, axis=axis, keepdims=True)


def linear4d_ref(x, w):
    return jnp.einsum("btnd,de->btne", x, w)


def gcn_ref(x, a_norm, w1, w2, b2):
    ax = jnp.einsum("btkd,nk->btnd", x, a_norm)
    hh = jnp.einsum("btnd,de->btne", ax, w1)
    return jnp.einsum("btnd,de->btne", hh, w2) + b2.reshape(1, 1, 1, -1)


def freq_sp_ref(Qr, Qi, Kr, Ki, Vr, Vi, wq_pad, scale):
    G, modes, hd = Qr.shape
    sel0 = (jnp.arange(modes) == 0)
    qc_r = jnp.where(sel0, Qr[..., None], wq_pad[None])       # (G, n, d, i)
    qc_i = jnp.where(sel0, Qi[..., None], 0.0)
    re = (Kr[:, None] * qc_r + Ki[:, None] * qc_i) * scale
    im = (Ki[:, None] * qc_r - Kr[:, None] * qc_i) * scale
    att = _softmax(jnp.sqrt(re * re + im * im), axis=-1)
    abar = jnp.mean(att, axis=1)                              # mean over n
    return Vr * abar, Vi * abar


def freq_te_ref(Qr, Qi, Kr, Ki, Vr, Vi, wqt_pad, mask, scale):
    sel0 = (jnp.arange(Qr.shape[-1]) == 0)
    qc_r = jnp.where(sel0, Qr[..., None], wqt_pad[None])      # (G, d, m, i)
    qc_i = jnp.where(sel0, Qi[..., None], 0.0)
    re = (Kr[..., None] * qc_r + Ki[..., None] * qc_i) * scale
    im = (Ki[..., None] * qc_r - Kr[..., None] * qc_i) * scale
    re = re * mask
    im = im * mask
    att = _softmax(jnp.sqrt(re * re + im * im), axis=-1)
    abar = jnp.mean(att, axis=-1)
    return Vr * abar, Vi * abar


def attention_forward_ref(x, adj, params, cfg):
    B, T, N, D = x.shape
    h = cfg["num_heads"]
    hd = D // h
    scale = hd ** (-0.5)
    idx_sp = jnp.array(cfg["index_sp"], jnp.int32)
    idx_te = jnp.array(cfg["index_te"], jnp.int32)
    modes, mT = len(cfg["index_sp"]), len(cfg["index_te"])

    deg = adj.sum(axis=1)
    a_norm = adj / deg[:, None]
    gcn_out = gcn_ref(x, a_norm, params["gcn_fc1_w"], params["gcn_mlp_w"], params["gcn_mlp_b"])

    # spatial
    gq, gk, gv = (linear4d_ref(x, params["geo_q_w"]),
                  linear4d_ref(x, params["geo_k_w"]),
                  linear4d_ref(x, params["geo_v_w"]))
    to_sp = lambda t: t.reshape(B, T, N, h, hd).transpose(0, 1, 3, 4, 2)
    q_ = to_sp(gq) / jnp.linalg.norm(gq)
    k_ = to_sp(gk) / jnp.linalg.norm(gk)
    v_ = to_sp(gv)
    Qs = jnp.fft.rfft(q_, axis=-1)[..., idx_sp]
    Ks = jnp.fft.rfft(k_, axis=-1)[..., idx_sp]
    Vs = jnp.fft.rfft(v_, axis=-1)[..., idx_sp]
    G = B * T * h
    Qr = jnp.real(Qs).transpose(0, 1, 2, 4, 3).reshape(G, modes, hd)
    Qi = jnp.imag(Qs).transpose(0, 1, 2, 4, 3).reshape(G, modes, hd)
    Kr, Ki = jnp.real(Ks).reshape(G, hd, modes), jnp.imag(Ks).reshape(G, hd, modes)
    Vr, Vi = jnp.real(Vs).reshape(G, hd, modes), jnp.imag(Vs).reshape(G, hd, modes)
    wq_pad = jnp.pad(params["weights_Q"], ((0, 0), (1, 0), (0, 0))).transpose(0, 2, 1)
    o_r, o_i = freq_sp_ref(Qr, Qi, Kr, Ki, Vr, Vi, wq_pad, scale)
    out_c = (o_r + 1j * o_i).reshape(B, T, h, hd, modes).astype(jnp.complex64)
    out_ft = jnp.zeros((B, T, h, hd, N // 2 + 1), jnp.complex64).at[..., idx_sp].set(out_c)
    sp_x = jnp.fft.irfft(out_ft, n=N, axis=-1).transpose(0, 1, 4, 2, 3).reshape(B, T, N, D)

    # temporal
    tq, tk, tv = (linear4d_ref(x, params["t_q_w"]),
                  linear4d_ref(x, params["t_k_w"]),
                  linear4d_ref(x, params["t_v_w"]))
    to_te = lambda t: t.reshape(B, N, T, h, hd).transpose(0, 1, 3, 4, 2)
    q_ = to_te(tq); q_ = q_ / jnp.linalg.norm(q_)
    k_ = to_te(tk); k_ = k_ / jnp.linalg.norm(k_)
    v_ = to_te(tv)
    Qs = jnp.fft.rfft(q_, axis=-1)[..., idx_te]
    Ks = jnp.fft.rfft(k_, axis=-1)[..., idx_te]
    Vs = jnp.fft.rfft(v_, axis=-1)[..., idx_te]
    Gt = B * N * h
    Qr, Qi = jnp.real(Qs).reshape(Gt, hd, mT), jnp.imag(Qs).reshape(Gt, hd, mT)
    Kr, Ki = jnp.real(Ks).reshape(Gt, hd, mT), jnp.imag(Ks).reshape(Gt, hd, mT)
    Vr, Vi = jnp.real(Vs).reshape(Gt, hd, mT), jnp.imag(Vs).reshape(Gt, hd, mT)
    wqt_pad = jnp.pad(params["weights_Q_t"], ((0, 0), (1, 0), (0, 0))).transpose(2, 0, 1)
    mask = jnp.tril(jnp.ones((mT, mT), jnp.float32))
    o_r, o_i = freq_te_ref(Qr, Qi, Kr, Ki, Vr, Vi, wqt_pad, mask, scale)
    out_c = (o_r + 1j * o_i).reshape(B, N, h, hd, mT).astype(jnp.complex64)
    out_ft = jnp.zeros((B, N, h, hd, T // 2 + 1), jnp.complex64).at[..., idx_te].set(out_c)
    te_x = jnp.fft.irfft(out_ft, n=T, axis=-1).transpose(0, 4, 1, 2, 3).reshape(B, T, N, D)

    return gcn_out + sp_x + te_x


# ----------------------------------------------------------------------------
# deterministic parameter construction
# ----------------------------------------------------------------------------
def make_params(key, D, modes, mT, hd):
    ks = jax.random.split(key, 12)
    bound = 1.0 / np.sqrt(D)
    u = lambda k, shape: jax.random.uniform(k, shape, jnp.float32, -bound, bound)
    return {
        "gcn_fc1_w": u(ks[0], (D, D)),
        "gcn_mlp_w": u(ks[1], (D, D)),
        "gcn_mlp_b": u(ks[2], (D,)),
        "geo_q_w": u(ks[3], (D, D)),
        "geo_k_w": u(ks[4], (D, D)),
        "geo_v_w": u(ks[5], (D, D)),
        "t_q_w": u(ks[6], (D, D)),
        "t_k_w": u(ks[7], (D, D)),
        "t_v_w": u(ks[8], (D, D)),
        "weights_Q": jax.random.normal(ks[9], (modes, modes - 1, hd), jnp.float32),
        "weights_Q_t": jax.random.normal(ks[10], (mT, mT - 1, hd), jnp.float32),
        # weights_att exists in the module but is never used in forward -> omitted.
    }


if __name__ == "__main__":
    np.random.seed(0)
    # args: num_nodes=16, input_window=192 -> seq_len_t = 16; dim=32, heads=4.
    B, T, N, D = 2, 16, 16, 32
    num_heads = 4
    hd = D // num_heads

    index_sp, modes = get_frequency_modes(N, modes=32, mode_select_method="random")
    index_te, mT = get_frequency_modes(T, modes=T // 2, mode_select_method="random")
    cfg = {"num_heads": num_heads, "index_sp": index_sp, "index_te": index_te}

    key = jax.random.PRNGKey(0)
    kx, kadj, kp = jax.random.split(key, 3)
    x = jax.random.normal(kx, (B, T, N, D), jnp.float32)
    adj = jnp.abs(jax.random.normal(kadj, (N, N), jnp.float32)) + jnp.eye(N, dtype=jnp.float32)
    params = make_params(kp, D, modes, mT, hd)

    fwd_pallas = jax.jit(functools.partial(attention_forward_pallas, cfg=cfg))
    fwd_ref = jax.jit(functools.partial(attention_forward_ref, cfg=cfg))

    out = fwd_pallas(x, adj, params)
    jax.block_until_ready(out)
    assert out.shape == (B, T, N, D) and out.dtype == jnp.float32
    assert bool(jnp.all(jnp.isfinite(out)))

    ref = fwd_ref(x, adj, params)
    jax.block_until_ready(ref)
    np.testing.assert_allclose(np.asarray(out), np.asarray(ref), rtol=2e-2, atol=2e-2)

    print("KERNEL_OK")
</pallas_src>

<mosaic_0001>
module attributes {stable_mosaic.version = 11 : i64} {
  func.func @_proj_kernel(%arg0: i32, %arg1: memref<512x32xbf16, #tpu.memory_space<vmem>>, %arg2: memref<32x256xbf16, #tpu.memory_space<vmem>>, %arg3: memref<512x256xf32, #tpu.memory_space<vmem>>) attributes {dimension_semantics = [#tpu.dimension_semantics<parallel>], iteration_bounds = array<i64: 1>, scalar_prefetch = 0 : i64, scratch_operands = 0 : i64, tpu.core_type = #tpu.core_type<tc>, window_params = [{transform_indices = @transform_0, window_bounds = array<i64: 512, 32>}, {pipeline_mode = #tpu.pipeline_mode<synchronous>, transform_indices = @transform_1, window_bounds = array<i64: 32, 256>}, {transform_indices = @transform_2, window_bounds = array<i64: 512, 256>}]} {
    %c0 = arith.constant 0 : index
    %c0_0 = arith.constant 0 : index
    %0 = vector.load %arg1[%c0, %c0_0] : memref<512x32xbf16, #tpu.memory_space<vmem>>, vector<512x32xbf16>
    %c0_1 = arith.constant 0 : index
    %c0_2 = arith.constant 0 : index
    %1 = vector.load %arg2[%c0_1, %c0_2] : memref<32x256xbf16, #tpu.memory_space<vmem>>, vector<32x256xbf16>
    %cst = arith.constant dense<0.000000e+00> : vector<512x256xf32>
    %2 = tpu.matmul %0, %1, %cst {dimension_numbers = #tpu.dot_dimension_numbers<[1], [0], [0], [1], [0, 0, 1, 1], [], []>} : vector<512x32xbf16>, vector<32x256xbf16>, vector<512x256xf32> -> vector<512x256xf32>
    %c0_3 = arith.constant 0 : index
    %c0_4 = arith.constant 0 : index
    %3 = vector.load %arg3[%c0_3, %c0_4] : memref<512x256xf32, #tpu.memory_space<vmem>>, vector<512x256xf32>
    tpu.vector_store %arg3[%c0_3, %c0_4], %2 {strides = array<i32>} : memref<512x256xf32, #tpu.memory_space<vmem>>, vector<512x256xf32>,
    return
  }
  func.func @transform_0(%arg0: i32) -> (i32, i32) {
    %c0_i32 = arith.constant 0 : i32
    %c0_i32_0 = arith.constant 0 : i32
    return %arg0, %c0_i32 : i32, i32
  }
  func.func @transform_1(%arg0: i32) -> (i32, i32) {
    %c0_i32 = arith.constant 0 : i32
    %c0_i32_0 = arith.constant 0 : i32
    %c0_i32_1 = arith.constant 0 : i32
    return %c0_i32, %c0_i32_0 : i32, i32
  }
  func.func @transform_2(%arg0: i32) -> (i32, i32) {
    %c0_i32 = arith.constant 0 : i32
    %c0_i32_0 = arith.constant 0 : i32
    return %arg0, %c0_i32 : i32, i32
  }
}

module attributes {stable_mosaic.version = 11 : i64} {
  func.func @_gcn_kernel(%arg0: i32, %arg1: memref<16x16xbf16, #tpu.memory_space<vmem>>, %arg2: memref<16x1024xbf16, #tpu.memory_space<vmem>>, %arg3: memref<16x1024xf32, #tpu.memory_space<vmem>>) attributes {dimension_semantics = [#tpu.dimension_semantics<arbitrary>], iteration_bounds = array<i64: 1>, scalar_prefetch = 0 : i64, scratch_operands = 0 : i64, tpu.core_type = #tpu.core_type<tc>, window_params = [{pipeline_mode = #tpu.pipeline_mode<synchronous>, transform_indices = @transform_0, window_bounds = array<i64: 16, 16>}, {pipeline_mode = #tpu.pipeline_mode<synchronous>, transform_indices = @transform_1, window_bounds = array<i64: 16, 1024>}, {pipeline_mode = #tpu.pipeline_mode<synchronous>, transform_indices = @transform_2, window_bounds = array<i64: 16, 1024>}]} {
    %c0 = arith.constant 0 : index
    %c0_0 = arith.constant 0 : index
    %0 = vector.load %arg1[%c0, %c0_0] : memref<16x16xbf16, #tpu.memory_space<vmem>>, vector<16x16xbf16>
    %c0_1 = arith.constant 0 : index
    %c0_2 = arith.constant 0 : index
    %1 = vector.load %arg2[%c0_1, %c0_2] : memref<16x1024xbf16, #tpu.memory_space<vmem>>, vector<16x1024xbf16>
    %cst = arith.constant dense<0.000000e+00> : vector<16x1024xf32>
    %2 = tpu.matmul %0, %1, %cst {dimension_numbers = #tpu.dot_dimension_numbers<[1], [0], [0], [1], [0, 0, 1, 1], [], []>} : vector<16x16xbf16>, vector<16x1024xbf16>, vector<16x1024xf32> -> vector<16x1024xf32>
    %c0_3 = arith.constant 0 : index
    %c0_4 = arith.constant 0 : index
    %3 = vector.load %arg3[%c0_3, %c0_4] : memref<16x1024xf32, #tpu.memory_space<vmem>>, vector<16x1024xf32>
    tpu.vector_store %arg3[%c0_3, %c0_4], %2 {strides = array<i32>} : memref<16x1024xf32, #tpu.memory_space<vmem>>, vector<16x1024xf32>,
    return
  }
  func.func @transform_0(%arg0: i32) -> (i32, i32) {
    %c0_i32 = arith.constant 0 : i32
    %c0_i32_0 = arith.constant 0 : i32
    %c0_i32_1 = arith.constant 0 : i32
    return %c0_i32, %c0_i32_0 : i32, i32
  }
  func.func @transform_1(%arg0: i32) -> (i32, i32) {
    %c0_i32 = arith.constant 0 : i32
    %c0_i32_0 = arith.constant 0 : i32
    %c0_i32_1 = arith.constant 0 : i32
    return %c0_i32, %c0_i32_0 : i32, i32
  }
  func.func @transform_2(%arg0: i32) -> (i32, i32) {
    %c0_i32 = arith.constant 0 : i32
    %c0_i32_0 = arith.constant 0 : i32
    %c0_i32_1 = arith.constant 0 : i32
    return %c0_i32, %c0_i32_0 : i32, i32
  }
}

module attributes {stable_mosaic.version = 11 : i64} {
  func.func @_freq_kernel(%arg0: i32, %arg1: memref<1x6x8x8x128xf32, #tpu.memory_space<vmem>>, %arg2: memref<1x7x8x8x1xf32, #tpu.memory_space<vmem>>, %arg3: memref<1x8x8x128xf32, #tpu.memory_space<vmem>>, %arg4: memref<1x8x8x128xf32, #tpu.memory_space<vmem>>) attributes {dimension_semantics = [#tpu.dimension_semantics<parallel>], iteration_bounds = array<i64: 2>, scalar_prefetch = 0 : i64, scratch_operands = 0 : i64, tpu.core_type = #tpu.core_type<tc>, window_params = [{transform_indices = @transform_0, window_bounds = array<i64: 1, 6, 8, 8, 128>}, {transform_indices = @transform_1, window_bounds = array<i64: 1, 7, 8, 8, 1>}, {transform_indices = @transform_2, window_bounds = array<i64: 1, 8, 8, 128>}, {transform_indices = @transform_3, window_bounds = array<i64: 1, 8, 8, 128>}]} {
    %c0 = arith.constant 0 : index
    %c0_0 = arith.constant 0 : index
    %c0_1 = arith.constant 0 : index
    %c0_2 = arith.constant 0 : index
    %c0_3 = arith.constant 0 : index
    %0 = vector.load %arg1[%c0, %c0_0, %c0_1, %c0_2, %c0_3] : memref<1x6x8x8x128xf32, #tpu.memory_space<vmem>>, vector<1x1x8x8x128xf32>
    %1 = vector.shape_cast %0 : vector<1x1x8x8x128xf32> to vector<8x8x128xf32>
    %c0_4 = arith.constant 0 : index
    %c1 = arith.constant 1 : index
    %c0_5 = arith.constant 0 : index
    %c0_6 = arith.constant 0 : index
    %c0_7 = arith.constant 0 : index
    %2 = vector.load %arg1[%c0_4, %c1, %c0_5, %c0_6, %c0_7] : memref<1x6x8x8x128xf32, #tpu.memory_space<vmem>>, vector<1x1x8x8x128xf32>
    %3 = vector.shape_cast %2 : vector<1x1x8x8x128xf32> to vector<8x8x128xf32>
    %c0_8 = arith.constant 0 : index
    %c2 = arith.constant 2 : index
    %c0_9 = arith.constant 0 : index
    %c0_10 = arith.constant 0 : index
    %c0_11 = arith.constant 0 : index
    %4 = vector.load %arg1[%c0_8, %c2, %c0_9, %c0_10, %c0_11] : memref<1x6x8x8x128xf32, #tpu.memory_space<vmem>>, vector<1x1x8x8x128xf32>
    %5 = vector.shape_cast %4 : vector<1x1x8x8x128xf32> to vector<8x8x128xf32>
    %c0_12 = arith.constant 0 : index
    %c3 = arith.constant 3 : index
    %c0_13 = arith.constant 0 : index
    %c0_14 = arith.constant 0 : index
    %c0_15 = arith.constant 0 : index
    %6 = vector.load %arg1[%c0_12, %c3, %c0_13, %c0_14, %c0_15] : memref<1x6x8x8x128xf32, #tpu.memory_space<vmem>>, vector<1x1x8x8x128xf32>
    %7 = vector.shape_cast %6 : vector<1x1x8x8x128xf32> to vector<8x8x128xf32>
    %c0_16 = arith.constant 0 : index
    %c4 = arith.constant 4 : index
    %c0_17 = arith.constant 0 : index
    %c0_18 = arith.constant 0 : index
    %c0_19 = arith.constant 0 : index
    %8 = vector.load %arg1[%c0_16, %c4, %c0_17, %c0_18, %c0_19] : memref<1x6x8x8x128xf32, #tpu.memory_space<vmem>>, vector<1x1x8x8x128xf32>
    %9 = vector.shape_cast %8 : vector<1x1x8x8x128xf32> to vector<8x8x128xf32>
    %c0_20 = arith.constant 0 : index
    %c5 = arith.constant 5 : index
    %c0_21 = arith.constant 0 : index
    %c0_22 = arith.constant 0 : index
    %c0_23 = arith.constant 0 : index
    %10 = vector.load %arg1[%c0_20, %c5, %c0_21, %c0_22, %c0_23] : memref<1x6x8x8x128xf32, #tpu.memory_space<vmem>>, vector<1x1x8x8x128xf32>
    %11 = vector.shape_cast %10 : vector<1x1x8x8x128xf32> to vector<8x8x128xf32>
    %12 = arith.mulf %5, %5 : vector<8x8x128xf32>
    %13 = arith.mulf %7, %7 : vector<8x8x128xf32>
    %14 = arith.addf %12, %13 : vector<8x8x128xf32>
    %15 = math.sqrt %14 : vector<8x8x128xf32>
    %cst = arith.constant 0.353553385 : f32
    %16 = vector.broadcast %cst : f32 to vector<8x8x128xf32>
    %17 = arith.mulf %15, %16 : vector<8x8x128xf32>
    %18 = arith.mulf %1, %1 : vector<8x8x128xf32>
    %19 = arith.mulf %3, %3 : vector<8x8x128xf32>
    %20 = arith.addf %18, %19 : vector<8x8x128xf32>
    %21 = math.sqrt %20 : vector<8x8x128xf32>
    %c0_24 = arith.constant 0 : index
    %c0_25 = arith.constant 0 : index
    %c0_26 = arith.constant 0 : index
    %c0_27 = arith.constant 0 : index
    %c0_28 = arith.constant 0 : index
    %22 = vector.load %arg2[%c0_24, %c0_25, %c0_26, %c0_27, %c0_28] : memref<1x7x8x8x1xf32, #tpu.memory_space<vmem>>, vector<1x7x8x8x1xf32>
    %23 = vector.shape_cast %22 : vector<1x7x8x8x1xf32> to vector<7x8x8x1xf32>
    %c0_i32 = arith.constant 0 : i32
    %24 = arith.cmpi eq, %arg0, %c0_i32 : i32
    %25 = arith.extui %24 : i1 to i32
    %c0_i32_29 = arith.constant 0 : i32
    %26 = arith.cmpi ne, %25, %c0_i32_29 : i32
    scf.if %26 {
      %30 = vector.extract_strided_slice %17 {offsets = [0, 0, 0], sizes = [1, 8, 128], strides = [1, 1, 1]} : vector<8x8x128xf32> to vector<1x8x128xf32>
      %31 = vector.shape_cast %30 : vector<1x8x128xf32> to vector<8x128xf32>
      %32 = vector.shape_cast %31 : vector<8x128xf32> to vector<1x8x128xf32>
      %33 = vector.broadcast %32 : vector<1x8x128xf32> to vector<8x8x128xf32>
      %34 = arith.mulf %33, %21 : vector<8x8x128xf32>
      %35 = vector.extract_strided_slice %17 {offsets = [1, 0, 0], sizes = [7, 8, 128], strides = [1, 1, 1]} : vector<8x8x128xf32> to vector<7x8x128xf32>
      %36 = vector.shape_cast %35 : vector<7x8x128xf32> to vector<7x1x8x128xf32>
      %37 = vector.broadcast %36 : vector<7x1x8x128xf32> to vector<7x8x8x128xf32>
      %38 = vector.broadcast %23 : vector<7x8x8x1xf32> to vector<7x8x8x128xf32>
      %39 = arith.mulf %37, %38 : vector<7x8x8x128xf32>
      %cst_31 = arith.constant dense<0xFF800000> : vector<8x8x128xf32>
      %40 = vector.multi_reduction <maximumf>, %39, %cst_31 [0] : vector<7x8x8x128xf32> to vector<8x8x128xf32>
      %41 = arith.maximumf %34, %40 : vector<8x8x128xf32>
      %42 = arith.subf %34, %41 : vector<8x8x128xf32>
      %43 = math.exp %42 : vector<8x8x128xf32>
      %44 = vector.shape_cast %41 : vector<8x8x128xf32> to vector<1x8x8x128xf32>
      %45 = vector.broadcast %44 : vector<1x8x8x128xf32> to vector<7x8x8x128xf32>
      %46 = arith.subf %39, %45 : vector<7x8x8x128xf32>
      %47 = math.exp %46 : vector<7x8x8x128xf32>
      %cst_32 = arith.constant dense<0.000000e+00> : vector<8x8x128xf32>
      %48 = vector.multi_reduction <add>, %47, %cst_32 [0] : vector<7x8x8x128xf32> to vector<8x8x128xf32>
      %49 = arith.addf %43, %48 : vector<8x8x128xf32>
      %50 = tpu.reciprocal %49 {approx = true} : vector<8x8x128xf32> -> vector<8x8x128xf32>
      %51 = arith.mulf %43, %50 : vector<8x8x128xf32>
      %cst_33 = arith.constant dense<0.000000e+00> : vector<8x128xf32>
      %52 = vector.multi_reduction <add>, %51, %cst_33 [0] : vector<8x8x128xf32> to vector<8x128xf32>
      %cst_34 = arith.constant 8.000000e+00 : f32
      %53 = vector.broadcast %cst_34 : f32 to vector<8x128xf32>
      %54 = arith.divf %52, %53 : vector<8x128xf32>
      %55 = vector.shape_cast %50 : vector<8x8x128xf32> to vector<1x8x8x128xf32>
      %56 = vector.broadcast %55 : vector<1x8x8x128xf32> to vector<7x8x8x128xf32>
      %57 = arith.mulf %47, %56 : vector<7x8x8x128xf32>
      %cst_35 = arith.constant dense<0.000000e+00> : vector<7x8x128xf32>
      %58 = vector.multi_reduction <add>, %57, %cst_35 [1] : vector<7x8x8x128xf32> to vector<7x8x128xf32>
      %cst_36 = arith.constant 8.000000e+00 : f32
      %59 = vector.broadcast %cst_36 : f32 to vector<7x8x128xf32>
      %60 = arith.divf %58, %59 : vector<7x8x128xf32>
      %61 = vector.shape_cast %54 : vector<8x128xf32> to vector<1x8x128xf32>
      %62 = tpu.concatenate %61, %60 in 0 : vector<1x8x128xf32>, vector<7x8x128xf32> -> vector<8x8x128xf32>
      %63 = arith.mulf %9, %62 : vector<8x8x128xf32>
      %c0_37 = arith.constant 0 : index
      %c0_38 = arith.constant 0 : index
      %c0_39 = arith.constant 0 : index
      %c0_40 = arith.constant 0 : index
      %64 = vector.load %arg3[%c0_37, %c0_38, %c0_39, %c0_40] : memref<1x8x8x128xf32, #tpu.memory_space<vmem>>, vector<1x8x8x128xf32>
      %65 = vector.shape_cast %64 : vector<1x8x8x128xf32> to vector<8x8x128xf32>
      %66 = vector.shape_cast %63 : vector<8x8x128xf32> to vector<1x8x8x128xf32>
      tpu.vector_store %arg3[%c0_37, %c0_38, %c0_39, %c0_40], %66 {strides = array<i32>} : memref<1x8x8x128xf32, #tpu.memory_space<vmem>>, vector<1x8x8x128xf32>,
      %67 = arith.mulf %11, %62 : vector<8x8x128xf32>
      %c0_41 = arith.constant 0 : index
      %c0_42 = arith.constant 0 : index
      %c0_43 = arith.constant 0 : index
      %c0_44 = arith.constant 0 : index
      %68 = vector.load %arg4[%c0_41, %c0_42, %c0_43, %c0_44] : memref<1x8x8x128xf32, #tpu.memory_space<vmem>>, vector<1x8x8x128xf32>
      %69 = vector.shape_cast %68 : vector<1x8x8x128xf32> to vector<8x8x128xf32>
      %70 = vector.shape_cast %67 : vector<8x8x128xf32> to vector<1x8x8x128xf32>
      tpu.vector_store %arg4[%c0_41, %c0_42, %c0_43, %c0_44], %70 {strides = array<i32>} : memref<1x8x8x128xf32, #tpu.memory_space<vmem>>, vector<1x8x8x128xf32>,
    } else {
    }
    %c1_i32 = arith.constant 1 : i32
    %27 = arith.cmpi eq, %arg0, %c1_i32 : i32
    %28 = arith.extui %27 : i1 to i32
    %c0_i32_30 = arith.constant 0 : i32
    %29 = arith.cmpi ne, %28, %c0_i32_30 : i32
    scf.if %29 {
      %30 = arith.mulf %17, %21 : vector<8x8x128xf32>
      %31 = vector.shape_cast %17 : vector<8x8x128xf32> to vector<1x8x8x128xf32>
      %32 = vector.broadcast %31 : vector<1x8x8x128xf32> to vector<7x8x8x128xf32>
      %33 = vector.broadcast %23 : vector<7x8x8x1xf32> to vector<7x8x8x128xf32>
      %34 = arith.mulf %32, %33 : vector<7x8x8x128xf32>
      %cst_31 = arith.constant dense<0xFF800000> : vector<8x8x128xf32>
      %35 = vector.multi_reduction <maximumf>, %34, %cst_31 [0] : vector<7x8x8x128xf32> to vector<8x8x128xf32>
      %36 = arith.maximumf %30, %35 : vector<8x8x128xf32>
      %37 = arith.subf %30, %36 : vector<8x8x128xf32>
      %38 = math.exp %37 : vector<8x8x128xf32>
      %39 = vector.shape_cast %36 : vector<8x8x128xf32> to vector<1x8x8x128xf32>
      %40 = vector.broadcast %39 : vector<1x8x8x128xf32> to vector<7x8x8x128xf32>
      %41 = arith.subf %34, %40 : vector<7x8x8x128xf32>
      %42 = math.exp %41 : vector<7x8x8x128xf32>
      %cst_32 = arith.constant dense<0.000000e+00> : vector<8x8x128xf32>
      %43 = vector.multi_reduction <add>, %42, %cst_32 [0] : vector<7x8x8x128xf32> to vector<8x8x128xf32>
      %44 = arith.addf %38, %43 : vector<8x8x128xf32>
      %45 = tpu.reciprocal %44 {approx = true} : vector<8x8x128xf32> -> vector<8x8x128xf32>
      %46 = arith.mulf %38, %45 : vector<8x8x128xf32>
      %47 = vector.shape_cast %45 : vector<8x8x128xf32> to vector<1x8x8x128xf32>
      %48 = vector.broadcast %47 : vector<1x8x8x128xf32> to vector<7x8x8x128xf32>
      %49 = arith.mulf %42, %48 : vector<7x8x8x128xf32>
      %cst_33 = arith.constant dense<0.000000e+00> : vector<8x8x128xf32>
      %50 = vector.multi_reduction <add>, %49, %cst_33 [0] : vector<7x8x8x128xf32> to vector<8x8x128xf32>
      %51 = arith.addf %46, %50 : vector<8x8x128xf32>
      %cst_34 = arith.constant 1.250000e-01 : f32
      %52 = vector.broadcast %cst_34 : f32 to vector<8x8x128xf32>
      %53 = arith.mulf %51, %52 : vector<8x8x128xf32>
      %54 = arith.mulf %9, %53 : vector<8x8x128xf32>
      %c0_35 = arith.constant 0 : index
      %c0_36 = arith.constant 0 : index
      %c0_37 = arith.constant 0 : index
      %c0_38 = arith.constant 0 : index
      %55 = vector.load %arg3[%c0_35, %c0_36, %c0_37, %c0_38] : memref<1x8x8x128xf32, #tpu.memory_space<vmem>>, vector<1x8x8x128xf32>
      %56 = vector.shape_cast %55 : vector<1x8x8x128xf32> to vector<8x8x128xf32>
      %57 = vector.shape_cast %54 : vector<8x8x128xf32> to vector<1x8x8x128xf32>
      tpu.vector_store %arg3[%c0_35, %c0_36, %c0_37, %c0_38], %57 {strides = array<i32>} : memref<1x8x8x128xf32, #tpu.memory_space<vmem>>, vector<1x8x8x128xf32>,
      %58 = arith.mulf %11, %53 : vector<8x8x128xf32>
      %c0_39 = arith.constant 0 : index
      %c0_40 = arith.constant 0 : index
      %c0_41 = arith.constant 0 : index
      %c0_42 = arith.constant 0 : index
      %59 = vector.load %arg4[%c0_39, %c0_40, %c0_41, %c0_42] : memref<1x8x8x128xf32, #tpu.memory_space<vmem>>, vector<1x8x8x128xf32>
      %60 = vector.shape_cast %59 : vector<1x8x8x128xf32> to vector<8x8x128xf32>
      %61 = vector.shape_cast %58 : vector<8x8x128xf32> to vector<1x8x8x128xf32>
      tpu.vector_store %arg4[%c0_39, %c0_40, %c0_41, %c0_42], %61 {strides = array<i32>} : memref<1x8x8x128xf32, #tpu.memory_space<vmem>>, vector<1x8x8x128xf32>,
    } else {
    }
    return
  }
  func.func @transform_0(%arg0: i32) -> (i32, i32, i32, i32, i32) {
    %c0_i32 = arith.constant 0 : i32
    %c0_i32_0 = arith.constant 0 : i32
    %c0_i32_1 = arith.constant 0 : i32
    %c0_i32_2 = arith.constant 0 : i32
    %c0_i32_3 = arith.constant 0 : i32
    return %arg0, %c0_i32, %c0_i32_0, %c0_i32_1, %c0_i32_2 : i32, i32, i32, i32, i32
  }
  func.func @transform_1(%arg0: i32) -> (i32, i32, i32, i32, i32) {
    %c0_i32 = arith.constant 0 : i32
    %c0_i32_0 = arith.constant 0 : i32
    %c0_i32_1 = arith.constant 0 : i32
    %c0_i32_2 = arith.constant 0 : i32
    %c0_i32_3 = arith.constant 0 : i32
    return %arg0, %c0_i32, %c0_i32_0, %c0_i32_1, %c0_i32_2 : i32, i32, i32, i32, i32
  }
  func.func @transform_2(%arg0: i32) -> (i32, i32, i32, i32) {
    %c0_i32 = arith.constant 0 : i32
    %c0_i32_0 = arith.constant 0 : i32
    %c0_i32_1 = arith.constant 0 : i32
    %c0_i32_2 = arith.constant 0 : i32
    return %arg0, %c0_i32, %c0_i32_0, %c0_i32_1 : i32, i32, i32, i32
  }
  func.func @transform_3(%arg0: i32) -> (i32, i32, i32, i32) {
    %c0_i32 = arith.constant 0 : i32
    %c0_i32_0 = arith.constant 0 : i32
    %c0_i32_1 = arith.constant 0 : i32
    %c0_i32_2 = arith.constant 0 : i32
    return %arg0, %c0_i32, %c0_i32_0, %c0_i32_1 : i32, i32, i32, i32
  }
}

</mosaic_0001>

<llo_original>
// kernel: attention_forward_pallas.3
$region0: #{attention_forward_pallas.3}
  #allocation0 [shape = 'u32[]', space=smem, size = 0x4, offset = 0x4, fixed_abs, tag = 'smem constant byte address 0x4 - core index']
  #allocation1 [shape = 'u32[144,128]{1,0:T(1,128)}', space=vmem, size = 0x12000, scoped, tag = 'internal scratch']
  %s0 = inlined_call_operand.vmem [shape: bf16[512,32], index: 0, kind: input, shape index: {}]
  %s1 = inlined_call_operand.vmem [shape: bf16[32,256], index: 1, kind: input, shape index: {}]
  %s2 = inlined_call_operand.vmem [shape: f32[512,256], index: 2, kind: output, shape index: {}]
  %s3 = sld [smem:[#allocation0]]
  $region18: #{attention_forward_pallas.3} parent=0
    _
  %s5 = ssub.s32 1, %s3
  %s6 = scalar_select 0, %s5, %s3
  // Predicated region
  $region2: #{attention_forward_pallas.3} parent=0 // pred_check
    _
  $region3: #{attention_forward_pallas.3} parent=0 // pred_check_branch
    %8 = sbr.rel (0) target = $region5
  $region4: #{attention_forward_pallas.3} parent=0 // pred_region
    _
  $region5: #{attention_forward_pallas.3} parent=0 // pred_fallthru
    _
  // Predicated region
  $region6: #{attention_forward_pallas.3} parent=0 // pred_check
    _
  $region7: #{attention_forward_pallas.3} parent=0 // pred_check_branch
    %10 = sbr.rel (0) target = $region9
  $region8: #{attention_forward_pallas.3} parent=0 // pred_region
    _
  $region9: #{attention_forward_pallas.3} parent=0 // pred_fallthru
    _
  %v12 = vld [vmem:[%s0] sm:$0xf]
  %v13 = vld [vmem:[%s0 + $0x4] sm:$0xf]
  %v14 = vld [vmem:[%s0 + $0x8] sm:$0xf]
  %v15 = vld [vmem:[%s0 + $0xc] sm:$0xf]
  %v16 = vld [vmem:[%s0 + $0x10] sm:$0xf]
  %v17 = vld [vmem:[%s0 + $0x14] sm:$0xf]
  %v18 = vld [vmem:[%s0 + $0x18] sm:$0xf]
  %v19 = vld [vmem:[%s0 + $0x1c] sm:$0xf]
  %v20 = vld [vmem:[%s0 + $0x20] sm:$0xf]
  %v21 = vld [vmem:[%s0 + $0x24] sm:$0xf]
  %v22 = vld [vmem:[%s0 + $0x28] sm:$0xf]
  %v23 = vld [vmem:[%s0 + $0x2c] sm:$0xf]
  %v24 = vld [vmem:[%s0 + $0x30] sm:$0xf]
  %v25 = vld [vmem:[%s0 + $0x34] sm:$0xf]
  %v26 = vld [vmem:[%s0 + $0x38] sm:$0xf]
  %v27 = vld [vmem:[%s0 + $0x3c] sm:$0xf]
  %v28 = vld [vmem:[%s0 + $0x40] sm:$0xf]
  %v29 = vld [vmem:[%s0 + $0x44] sm:$0xf]
  %v30 = vld [vmem:[%s0 + $0x48] sm:$0xf]
  %v31 = vld [vmem:[%s0 + $0x4c] sm:$0xf]
  %v32 = vld [vmem:[%s0 + $0x50] sm:$0xf]
  %v33 = vld [vmem:[%s0 + $0x54] sm:$0xf]
  %v34 = vld [vmem:[%s0 + $0x58] sm:$0xf]
  %v35 = vld [vmem:[%s0 + $0x5c] sm:$0xf]
  %v36 = vld [vmem:[%s0 + $0x60] sm:$0xf]
  %v37 = vld [vmem:[%s0 + $0x64] sm:$0xf]
  %v38 = vld [vmem:[%s0 + $0x68] sm:$0xf]
  %v39 = vld [vmem:[%s0 + $0x6c] sm:$0xf]
  %v40 = vld [vmem:[%s0 + $0x70] sm:$0xf]
  %v41 = vld [vmem:[%s0 + $0x74] sm:$0xf]
  %v42 = vld [vmem:[%s0 + $0x78] sm:$0xf]
  %v43 = vld [vmem:[%s0 + $0x7c] sm:$0xf]
  %v44 = vld [vmem:[%s0 + $0x80] sm:$0xf]
  %v45 = vld [vmem:[%s0 + $0x84] sm:$0xf]
  %v46 = vld [vmem:[%s0 + $0x88] sm:$0xf]
  %v47 = vld [vmem:[%s0 + $0x8c] sm:$0xf]
  %v48 = vld [vmem:[%s0 + $0x90] sm:$0xf]
  %v49 = vld [vmem:[%s0 + $0x94] sm:$0xf]
  %v50 = vld [vmem:[%s0 + $0x98] sm:$0xf]
  %v51 = vld [vmem:[%s0 + $0x9c] sm:$0xf]
  %v52 = vld [vmem:[%s0 + $0xa0] sm:$0xf]
  %v53 = vld [vmem:[%s0 + $0xa4] sm:$0xf]
  %v54 = vld [vmem:[%s0 + $0xa8] sm:$0xf]
  %v55 = vld [vmem:[%s0 + $0xac] sm:$0xf]
  %v56 = vld [vmem:[%s0 + $0xb0] sm:$0xf]
  %v57 = vld [vmem:[%s0 + $0xb4] sm:$0xf]
  %v58 = vld [vmem:[%s0 + $0xb8] sm:$0xf]
  %v59 = vld [vmem:[%s0 + $0xbc] sm:$0xf]
  %v60 = vld [vmem:[%s0 + $0xc0] sm:$0xf]
  %v61 = vld [vmem:[%s0 + $0xc4] sm:$0xf]
  %v62 = vld [vmem:[%s0 + $0xc8] sm:$0xf]
  %v63 = vld [vmem:[%s0 + $0xcc] sm:$0xf]
  %v64 = vld [vmem:[%s0 + $0xd0] sm:$0xf]
  %v65 = vld [vmem:[%s0 + $0xd4] sm:$0xf]
  %v66 = vld [vmem:[%s0 + $0xd8] sm:$0xf]
  %v67 = vld [vmem:[%s0 + $0xdc] sm:$0xf]
  %v68 = vld [vmem:[%s0 + $0xe0] sm:$0xf]
  %v69 = vld [vmem:[%s0 + $0xe4] sm:$0xf]
  %v70 = vld [vmem:[%s0 + $0xe8] sm:$0xf]
  %v71 = vld [vmem:[%s0 + $0xec] sm:$0xf]
  %v72 = vld [vmem:[%s0 + $0xf0] sm:$0xf]
  %v73 = vld [vmem:[%s0 + $0xf4] sm:$0xf]
  %v74 = vld [vmem:[%s0 + $0xf8] sm:$0xf]
  %v75 = vld [vmem:[%s0 + $0xfc] sm:$0xf]
  %v76 = vld [vmem:[%s1] sm:$0xff]
  %v77 = vld [vmem:[%s1 + $0x8] sm:$0xff]
  %v78 = vld [vmem:[%s1 + $0x10] sm:$0xff]
  %v79 = vld [vmem:[%s1 + $0x18] sm:$0xff]
  %v144 = vunpack.c.l.b16 %v12
  %v145 = vunpack.c.l.b16 %v13
  %v146 = vunpack.c.l.b16 %v14
  %v147 = vunpack.c.l.b16 %v15
  %v148 = vunpack.c.l.b16 %v16
  %v149 = vunpack.c.l.b16 %v17
  %v150 = vunpack.c.l.b16 %v18
  %v151 = vunpack.c.l.b16 %v19
  %v152 = vunpack.c.l.b16 %v20
  %v153 = vunpack.c.l.b16 %v21
  %v154 = vunpack.c.l.b16 %v22
  %v155 = vunpack.c.l.b16 %v23
  %v156 = vunpack.c.l.b16 %v24
  %v157 = vunpack.c.l.b16 %v25
  %v158 = vunpack.c.l.b16 %v26
  %v159 = vunpack.c.l.b16 %v27
  %v160 = vunpack.c.l.b16 %v28
  %v161 = vunpack.c.l.b16 %v29
  %v162 = vunpack.c.l.b16 %v30
  %v163 = vunpack.c.l.b16 %v31
  %v164 = vunpack.c.l.b16 %v32
  %v165 = vunpack.c.l.b16 %v33
  %v166 = vunpack.c.l.b16 %v34
  %v167 = vunpack.c.l.b16 %v35
  %v168 = vunpack.c.l.b16 %v36
  %v169 = vunpack.c.l.b16 %v37
  %v170 = vunpack.c.l.b16 %v38
  %v171 = vunpack.c.l.b16 %v39
  %v172 = vunpack.c.l.b16 %v40
  %v173 = vunpack.c.l.b16 %v41
  %v174 = vunpack.c.l.b16 %v42
  %v175 = vunpack.c.l.b16 %v43
  %v176 = vunpack.c.l.b16 %v44
  %v177 = vunpack.c.l.b16 %v45
  %v178 = vunpack.c.l.b16 %v46
  %v179 = vunpack.c.l.b16 %v47
  %v180 = vunpack.c.l.b16 %v48
  %v181 = vunpack.c.l.b16 %v49
  %v182 = vunpack.c.l.b16 %v50
  %v183 = vunpack.c.l.b16 %v51
  %v184 = vunpack.c.l.b16 %v52
  %v185 = vunpack.c.l.b16 %v53
  %v186 = vunpack.c.l.b16 %v54
  %v187 = vunpack.c.l.b16 %v55
  %v188 = vunpack.c.l.b16 %v56
  %v189 = vunpack.c.l.b16 %v57
  %v190 = vunpack.c.l.b16 %v58
  %v191 = vunpack.c.l.b16 %v59
  %v192 = vunpack.c.l.b16 %v60
  %v193 = vunpack.c.l.b16 %v61
  %v194 = vunpack.c.l.b16 %v62
  %v195 = vunpack.c.l.b16 %v63
  %v196 = vunpack.c.l.b16 %v64
  %v197 = vunpack.c.l.b16 %v65
  %v198 = vunpack.c.l.b16 %v66
  %v199 = vunpack.c.l.b16 %v67
  %v200 = vunpack.c.l.b16 %v68
  %v201 = vunpack.c.l.b16 %v69
  %v202 = vunpack.c.l.b16 %v70
  %v203 = vunpack.c.l.b16 %v71
  %v204 = vunpack.c.l.b16 %v72
  %v205 = vunpack.c.l.b16 %v73
  %v206 = vunpack.c.l.b16 %v74
  %v207 = vunpack.c.l.b16 %v75
  %v208 = vpack.c.b16 %v145, %v144
  %v209 = vpack.c.b16 %v147, %v146
  %v210 = vpack.c.b16 %v149, %v148
  %v211 = vpack.c.b16 %v151, %v150
  %v212 = vpack.c.b16 %v153, %v152
  %v213 = vpack.c.b16 %v155, %v154
  %v214 = vpack.c.b16 %v157, %v156
  %v215 = vpack.c.b16 %v159, %v158
  %v216 = vpack.c.b16 %v161, %v160
  %v217 = vpack.c.b16 %v163, %v162
  %v218 = vpack.c.b16 %v165, %v164
  %v219 = vpack.c.b16 %v167, %v166
  %v220 = vpack.c.b16 %v169, %v168
  %v221 = vpack.c.b16 %v171, %v170
  %v222 = vpack.c.b16 %v173, %v172
  %v223 = vpack.c.b16 %v175, %v174
  %v224 = vpack.c.b16 %v177, %v176
  %v225 = vpack.c.b16 %v179, %v178
  %v226 = vpack.c.b16 %v181, %v180
  %v227 = vpack.c.b16 %v183, %v182
  %v228 = vpack.c.b16 %v185, %v184
  %v229 = vpack.c.b16 %v187, %v186
  %v230 = vpack.c.b16 %v189, %v188
  %v231 = vpack.c.b16 %v191, %v190
  %v232 = vpack.c.b16 %v193, %v192
  %v233 = vpack.c.b16 %v195, %v194
  %v234 = vpack.c.b16 %v197, %v196
  %v235 = vpack.c.b16 %v199, %v198
  %v236 = vpack.c.b16 %v201, %v200
  %v237 = vpack.c.b16 %v203, %v202
  %v238 = vpack.c.b16 %v205, %v204
  %v239 = vpack.c.b16 %v207, %v206
  %v244 = vunpack.c.l.b16 %v76
  %v245 = vunpack.c.h.b16 %v76
  %v246 = vunpack.c.l.b16 %v77
  %v247 = vunpack.c.h.b16 %v77
  %v248 = vunpack.c.l.b16 %v78
  %v249 = vunpack.c.h.b16 %v78
  %v250 = vunpack.c.l.b16 %v79
  %v251 = vunpack.c.h.b16 %v79
  %v252 = vpack.c.b16 %v246, %v244
  %v253 = vpack.c.b16 %v247, %v245
  %v254 = vpack.c.b16 %v250, %v248
  %v255 = vpack.c.b16 %v251, %v249
  %vm260 = vcmask 261120
  %v262 = vsel %vm260, %v208, 0
  %v265 = vsel %vm260, %v209, 0
  %v268 = vsel %vm260, %v210, 0
  %v271 = vsel %vm260, %v211, 0
  %v274 = vsel %vm260, %v212, 0
  %v277 = vsel %vm260, %v213, 0
  %v280 = vsel %vm260, %v214, 0
  %v283 = vsel %vm260, %v215, 0
  %v286 = vsel %vm260, %v216, 0
  %v289 = vsel %vm260, %v217, 0
  %v292 = vsel %vm260, %v218, 0
  %v295 = vsel %vm260, %v219, 0
  %v298 = vsel %vm260, %v220, 0
  %v301 = vsel %vm260, %v221, 0
  %v304 = vsel %vm260, %v222, 0
  %v307 = vsel %vm260, %v223, 0
  %v310 = vsel %vm260, %v224, 0
  %v313 = vsel %vm260, %v225, 0
  %v316 = vsel %vm260, %v226, 0
  %v319 = vsel %vm260, %v227, 0
  %v322 = vsel %vm260, %v228, 0
  %v325 = vsel %vm260, %v229, 0
  %v328 = vsel %vm260, %v230, 0
  %v331 = vsel %vm260, %v231, 0
  %v334 = vsel %vm260, %v232, 0
  %v337 = vsel %vm260, %v233, 0
  %v340 = vsel %vm260, %v234, 0
  %v343 = vsel %vm260, %v235, 0
  %v346 = vsel %vm260, %v236, 0
  %v349 = vsel %vm260, %v237, 0
  %v352 = vsel %vm260, %v238, 0
  %v355 = vsel %vm260, %v239, 0
  %357 = vmatprep.subr.bf16.mxu0 %v253
  %358 = vmatpush1.bf16.msra.mxu0 %v252
  %359 = vmatprep.subr.bf16.mxu0 %v255
  %360 = vmatpush1.bf16.msra.mxu0 %v254
  %361 = vmatprep.subr.bf16.mxu0 0
  %362 = vmatpush1.bf16.msra.mxu0 0
  %363 = vmatprep.subr.bf16.mxu0 0
  %364 = vmatpush1.bf16.msra.mxu0 0
  %365 = vmatprep.subr.bf16.mxu0 0
  %366 = vmatpush1.bf16.msra.mxu0 0
  %367 = vmatprep.subr.bf16.mxu0 0
  %368 = vmatpush1.bf16.msra.mxu0 0
  %369 = vmatprep.subr.bf16.mxu0 0
  %370 = vmatpush1.bf16.msra.mxu0 0
  %371 = vmatprep.subr.bf16.mxu0 0
  %372 = vmatpush1.bf16.msra.mxu0 0
  %373 = vmatprep.subr.bf16.mxu0 0
  %374 = vmatpush1.bf16.msra.mxu0 0
  %375 = vmatprep.subr.bf16.mxu0 0
  %376 = vmatpush1.bf16.msra.mxu0 0
  %377 = vmatprep.subr.bf16.mxu0 0
  %378 = vmatpush1.bf16.msra.mxu0 0
  %379 = vmatprep.subr.bf16.mxu0 0
  %380 = vmatpush1.bf16.msra.mxu0 0
  %381 = vmatprep.subr.bf16.mxu0 0
  %382 = vmatpush1.bf16.msra.mxu0 0
  %383 = vmatprep.subr.bf16.mxu0 0
  %384 = vmatpush1.bf16.msra.mxu0 0
  %385 = vmatprep.subr.bf16.mxu0 0
  %386 = vmatpush1.bf16.msra.mxu0 0
  %387 = vmatprep.subr.bf16.mxu0 0
  %388 = vmatpush1.bf16.msra.mxu0 0
  %389 = vmatprep.mubr.bf16.mxu0 0
  %390 = vmatmul.mubr.bf16.gmra.mrb[0].mxu0 %v262
  %v391 = vpop.f32.mrb[0].mxu0
  %v392 = vadd.f32 0.0, %v391
  %v393 = vpop.f32.mrb[0].mxu0
  %v394 = vadd.f32 0.0, %v393
  %v395 = vpop.f32.mrb[0].mxu0
  %v396 = vadd.f32 0.0, %v395
  %v397 = vpop.f32.mrb[0].mxu0
  %v398 = vadd.f32 0.0, %v397
  %399 = vmatprep.mubr.bf16.mxu0 0
  %400 = vmatmul.mubr.bf16.gmra.mrb[0].mxu0 %v265
  %v401 = vpop.f32.mrb[0].mxu0
  %v402 = vadd.f32 0.0, %v401
  %v403 = vpop.f32.mrb[0].mxu0
  %v404 = vadd.f32 0.0, %v403
  %v405 = vpop.f32.mrb[0].mxu0
  %v406 = vadd.f32 0.0, %v405
  %v407 = vpop.f32.mrb[0].mxu0
  %v408 = vadd.f32 0.0, %v407
  %409 = vmatprep.mubr.bf16.mxu0 0
  %410 = vmatmul.mubr.bf16.gmra.mrb[0].mxu0 %v268
  %v411 = vpop.f32.mrb[0].mxu0
  %v412 = vadd.f32 0.0, %v411
  %v413 = vpop.f32.mrb[0].mxu0
  %v414 = vadd.f32 0.0, %v413
  %v415 = vpop.f32.mrb[0].mxu0
  %v416 = vadd.f32 0.0, %v415
  %v417 = vpop.f32.mrb[0].mxu0
  %v418 = vadd.f32 0.0, %v417
  %419 = vmatprep.mubr.bf16.mxu0 0
  %420 = vmatmul.mubr.bf16.gmra.mrb[0].mxu0 %v271
  %v421 = vpop.f32.mrb[0].mxu0
  %v422 = vadd.f32 0.0, %v421
  %v423 = vpop.f32.mrb[0].mxu0
  %v424 = vadd.f32 0.0, %v423
  %v425 = vpop.f32.mrb[0].mxu0
  %v426 = vadd.f32 0.0, %v425
  %v427 = vpop.f32.mrb[0].mxu0
  %v428 = vadd.f32 0.0, %v427
  %429 = vmatprep.mubr.bf16.mxu0 0
  %430 = vmatmul.mubr.bf16.gmra.mrb[0].mxu0 %v274
  %v431 = vpop.f32.mrb[0].mxu0
  %v432 = vadd.f32 0.0, %v431
  %v433 = vpop.f32.mrb[0].mxu0
  %v434 = vadd.f32 0.0, %v433
  %v435 = vpop.f32.mrb[0].mxu0
  %v436 = vadd.f32 0.0, %v435
  %v437 = vpop.f32.mrb[0].mxu0
  %v438 = vadd.f32 0.0, %v437
  %439 = vmatprep.mubr.bf16.mxu0 0
  %440 = vmatmul.mubr.bf16.gmra.mrb[0].mxu0 %v277
  %v441 = vpop.f32.mrb[0].mxu0
  %v442 = vadd.f32 0.0, %v441
  %v443 = vpop.f32.mrb[0].mxu0
  %v444 = vadd.f32 0.0, %v443
  %v445 = vpop.f32.mrb[0].mxu0
  %v446 = vadd.f32 0.0, %v445
  %v447 = vpop.f32.mrb[0].mxu0
  %v448 = vadd.f32 0.0, %v447
  %449 = vmatprep.mubr.bf16.mxu0 0
  %450 = vmatmul.mubr.bf16.gmra.mrb[0].mxu0 %v280
  %v451 = vpop.f32.mrb[0].mxu0
  %v452 = vadd.f32 0.0, %v451
  %v453 = vpop.f32.mrb[0].mxu0
  %v454 = vadd.f32 0.0, %v453
  %v455 = vpop.f32.mrb[0].mxu0
  %v456 = vadd.f32 0.0, %v455
  %v457 = vpop.f32.mrb[0].mxu0
  %v458 = vadd.f32 0.0, %v457
  %459 = vmatprep.mubr.bf16.mxu0 0
  %460 = vmatmul.mubr.bf16.gmra.mrb[0].mxu0 %v283
  %v461 = vpop.f32.mrb[0].mxu0
  %v462 = vadd.f32 0.0, %v461
  %v463 = vpop.f32.mrb[0].mxu0
  %v464 = vadd.f32 0.0, %v463
  %v465 = vpop.f32.mrb[0].mxu0
  %v466 = vadd.f32 0.0, %v465
  %v467 = vpop.f32.mrb[0].mxu0
  %v468 = vadd.f32 0.0, %v467
  %469 = vmatprep.mubr.bf16.mxu0 0
  %470 = vmatmul.mubr.bf16.gmra.mrb[0].mxu0 %v286
  %v471 = vpop.f32.mrb[0].mxu0
  %v472 = vadd.f32 0.0, %v471
  %v473 = vpop.f32.mrb[0].mxu0
  %v474 = vadd.f32 0.0, %v473
  %v475 = vpop.f32.mrb[0].mxu0
  %v476 = vadd.f32 0.0, %v475
  %v477 = vpop.f32.mrb[0].mxu0
  %v478 = vadd.f32 0.0, %v477
  %479 = vmatprep.mubr.bf16.mxu0 0
  %480 = vmatmul.mubr.bf16.gmra.mrb[0].mxu0 %v289
  %v481 = vpop.f32.mrb[0].mxu0
  %v482 = vadd.f32 0.0, %v481
  %v483 = vpop.f32.mrb[0].mxu0
  %v484 = vadd.f32 0.0, %v483
  %v485 = vpop.f32.mrb[0].mxu0
  %v486 = vadd.f32 0.0, %v485
  %v487 = vpop.f32.mrb[0].mxu0
  %v488 = vadd.f32 0.0, %v487
  %489 = vmatprep.mubr.bf16.mxu0 0
  %490 = vmatmul.mubr.bf16.gmra.mrb[0].mxu0 %v292
  %v491 = vpop.f32.mrb[0].mxu0
  %v492 = vadd.f32 0.0, %v491
  %v493 = vpop.f32.mrb[0].mxu0
  %v494 = vadd.f32 0.0, %v493
  %v495 = vpop.f32.mrb[0].mxu0
  %v496 = vadd.f32 0.0, %v495
  %v497 = vpop.f32.mrb[0].mxu0
  %v498 = vadd.f32 0.0, %v497
  %499 = vmatprep.mubr.bf16.mxu0 0
  %500 = vmatmul.mubr.bf16.gmra.mrb[0].mxu0 %v295
  %v501 = vpop.f32.mrb[0].mxu0
  %v502 = vadd.f32 0.0, %v501
  %v503 = vpop.f32.mrb[0].mxu0
  %v504 = vadd.f32 0.0, %v503
  %v505 = vpop.f32.mrb[0].mxu0
  %v506 = vadd.f32 0.0, %v505
  %v507 = vpop.f32.mrb[0].mxu0
  %v508 = vadd.f32 0.0, %v507
  %509 = vmatprep.mubr.bf16.mxu0 0
  %510 = vmatmul.mubr.bf16.gmra.mrb[0].mxu0 %v298
  %v511 = vpop.f32.mrb[0].mxu0
  %v512 = vadd.f32 0.0, %v511
  %v513 = vpop.f32.mrb[0].mxu0
  %v514 = vadd.f32 0.0, %v513
  %v515 = vpop.f32.mrb[0].mxu0
  %v516 = vadd.f32 0.0, %v515
  %v517 = vpop.f32.mrb[0].mxu0
  %v518 = vadd.f32 0.0, %v517
  %519 = vmatprep.mubr.bf16.mxu0 0
  %520 = vmatmul.mubr.bf16.gmra.mrb[0].mxu0 %v301
  %v521 = vpop.f32.mrb[0].mxu0
  %v522 = vadd.f32 0.0, %v521
  %v523 = vpop.f32.mrb[0].mxu0
  %v524 = vadd.f32 0.0, %v523
  %v525 = vpop.f32.mrb[0].mxu0
  %v526 = vadd.f32 0.0, %v525
  %v527 = vpop.f32.mrb[0].mxu0
  %v528 = vadd.f32 0.0, %v527
  %529 = vmatprep.mubr.bf16.mxu0 0
  %530 = vmatmul.mubr.bf16.gmra.mrb[0].mxu0 %v304
  %v531 = vpop.f32.mrb[0].mxu0
  %v532 = vadd.f32 0.0, %v531
  %v533 = vpop.f32.mrb[0].mxu0
  %v534 = vadd.f32 0.0, %v533
  %v535 = vpop.f32.mrb[0].mxu0
  %v536 = vadd.f32 0.0, %v535
  %v537 = vpop.f32.mrb[0].mxu0
  %v538 = vadd.f32 0.0, %v537
  %539 = vmatprep.mubr.bf16.mxu0 0
  %540 = vmatmul.mubr.bf16.gmra.mrb[0].mxu0 %v307
  %v541 = vpop.f32.mrb[0].mxu0
  %v542 = vadd.f32 0.0, %v541
  %v543 = vpop.f32.mrb[0].mxu0
  %v544 = vadd.f32 0.0, %v543
  %v545 = vpop.f32.mrb[0].mxu0
  %v546 = vadd.f32 0.0, %v545
  %v547 = vpop.f32.mrb[0].mxu0
  %v548 = vadd.f32 0.0, %v547
  %549 = vmatprep.mubr.bf16.mxu0 0
  %550 = vmatmul.mubr.bf16.gmra.mrb[0].mxu0 %v310
  %v551 = vpop.f32.mrb[0].mxu0
  %v552 = vadd.f32 0.0, %v551
  %v553 = vpop.f32.mrb[0].mxu0
  %v554 = vadd.f32 0.0, %v553
  %v555 = vpop.f32.mrb[0].mxu0
  %v556 = vadd.f32 0.0, %v555
  %v557 = vpop.f32.mrb[0].mxu0
  %v558 = vadd.f32 0.0, %v557
  %559 = vmatprep.mubr.bf16.mxu0 0
  %560 = vmatmul.mubr.bf16.gmra.mrb[0].mxu0 %v313
  %v561 = vpop.f32.mrb[0].mxu0
  %v562 = vadd.f32 0.0, %v561
  %v563 = vpop.f32.mrb[0].mxu0
  %v564 = vadd.f32 0.0, %v563
  %v565 = vpop.f32.mrb[0].mxu0
  %v566 = vadd.f32 0.0, %v565
  %v567 = vpop.f32.mrb[0].mxu0
  %v568 = vadd.f32 0.0, %v567
  %569 = vmatprep.mubr.bf16.mxu0 0
  %570 = vmatmul.mubr.bf16.gmra.mrb[0].mxu0 %v316
  %v571 = vpop.f32.mrb[0].mxu0
  %v572 = vadd.f32 0.0, %v571
  %v573 = vpop.f32.mrb[0].mxu0
  %v574 = vadd.f32 0.0, %v573
  %v575 = vpop.f32.mrb[0].mxu0
  %v576 = vadd.f32 0.0, %v575
  %v577 = vpop.f32.mrb[0].mxu0
  %v578 = vadd.f32 0.0, %v577
  %579 = vmatprep.mubr.bf16.mxu0 0
  %580 = vmatmul.mubr.bf16.gmra.mrb[0].mxu0 %v319
  %v581 = vpop.f32.mrb[0].mxu0
  %v582 = vadd.f32 0.0, %v581
  %v583 = vpop.f32.mrb[0].mxu0
  %v584 = vadd.f32 0.0, %v583
  %v585 = vpop.f32.mrb[0].mxu0
  %v586 = vadd.f32 0.0, %v585
  %v587 = vpop.f32.mrb[0].mxu0
  %v588 = vadd.f32 0.0, %v587
  %589 = vmatprep.mubr.bf16.mxu0 0
  %590 = vmatmul.mubr.bf16.gmra.mrb[0].mxu0 %v322
  %v591 = vpop.f32.mrb[0].mxu0
  %v592 = vadd.f32 0.0, %v591
  %v593 = vpop.f32.mrb[0].mxu0
  %v594 = vadd.f32 0.0, %v593
  %v595 = vpop.f32.mrb[0].mxu0
  %v596 = vadd.f32 0.0, %v595
  %v597 = vpop.f32.mrb[0].mxu0
  %v598 = vadd.f32 0.0, %v597
  %599 = vmatprep.mubr.bf16.mxu0 0
  %600 = vmatmul.mubr.bf16.gmra.mrb[0].mxu0 %v325
  %v601 = vpop.f32.mrb[0].mxu0
  %v602 = vadd.f32 0.0, %v601
  %v603 = vpop.f32.mrb[0].mxu0
  %v604 = vadd.f32 0.0, %v603
  %v605 = vpop.f32.mrb[0].mxu0
  %v606 = vadd.f32 0.0, %v605
  %v607 = vpop.f32.mrb[0].mxu0
  %v608 = vadd.f32 0.0, %v607
  %609 = vmatprep.mubr.bf16.mxu0 0
  %610 = vmatmul.mubr.bf16.gmra.mrb[0].mxu0 %v328
  %v611 = vpop.f32.mrb[0].mxu0
  %v612 = vadd.f32 0.0, %v611
  %v613 = vpop.f32.mrb[0].mxu0
  %v614 = vadd.f32 0.0, %v613
  %v615 = vpop.f32.mrb[0].mxu0
  %v616 = vadd.f32 0.0, %v615
  %v617 = vpop.f32.mrb[0].mxu0
  %v618 = vadd.f32 0.0, %v617
  %619 = vmatprep.mubr.bf16.mxu0 0
  %620 = vmatmul.mubr.bf16.gmra.mrb[0].mxu0 %v331
  %v621 = vpop.f32.mrb[0].mxu0
  %v622 = vadd.f32 0.0, %v621
  %v623 = vpop.f32.mrb[0].mxu0
  %v624 = vadd.f32 0.0, %v623
  %v625 = vpop.f32.mrb[0].mxu0
  %v626 = vadd.f32 0.0, %v625
  %v627 = vpop.f32.mrb[0].mxu0
  %v628 = vadd.f32 0.0, %v627
  %629 = vmatprep.mubr.bf16.mxu0 0
  %630 = vmatmul.mubr.bf16.gmra.mrb[0].mxu0 %v334
  %v631 = vpop.f32.mrb[0].mxu0
  %v632 = vadd.f32 0.0, %v631
  %v633 = vpop.f32.mrb[0].mxu0
  %v634 = vadd.f32 0.0, %v633
  %v635 = vpop.f32.mrb[0].mxu0
  %v636 = vadd.f32 0.0, %v635
  %v637 = vpop.f32.mrb[0].mxu0
  %v638 = vadd.f32 0.0, %v637
  %639 = vmatprep.mubr.bf16.mxu0 0
  %640 = vmatmul.mubr.bf16.gmra.mrb[0].mxu0 %v337
  %v641 = vpop.f32.mrb[0].mxu0
  %v642 = vadd.f32 0.0, %v641
  %v643 = vpop.f32.mrb[0].mxu0
  %v644 = vadd.f32 0.0, %v643
  %v645 = vpop.f32.mrb[0].mxu0
  %v646 = vadd.f32 0.0, %v645
  %v647 = vpop.f32.mrb[0].mxu0
  %v648 = vadd.f32 0.0, %v647
  %649 = vmatprep.mubr.bf16.mxu0 0
  %650 = vmatmul.mubr.bf16.gmra.mrb[0].mxu0 %v340
  %v651 = vpop.f32.mrb[0].mxu0
  %v652 = vadd.f32 0.0, %v651
  %v653 = vpop.f32.mrb[0].mxu0
  %v654 = vadd.f32 0.0, %v653
  %v655 = vpop.f32.mrb[0].mxu0
  %v656 = vadd.f32 0.0, %v655
  %v657 = vpop.f32.mrb[0].mxu0
  %v658 = vadd.f32 0.0, %v657
  %659 = vmatprep.mubr.bf16.mxu0 0
  %660 = vmatmul.mubr.bf16.gmra.mrb[0].mxu0 %v343
  %v661 = vpop.f32.mrb[0].mxu0
  %v662 = vadd.f32 0.0, %v661
  %v663 = vpop.f32.mrb[0].mxu0
  %v664 = vadd.f32 0.0, %v663
  %v665 = vpop.f32.mrb[0].mxu0
  %v666 = vadd.f32 0.0, %v665
  %v667 = vpop.f32.mrb[0].mxu0
  %v668 = vadd.f32 0.0, %v667
  %669 = vmatprep.mubr.bf16.mxu0 0
  %670 = vmatmul.mubr.bf16.gmra.mrb[0].mxu0 %v346
  %v671 = vpop.f32.mrb[0].mxu0
  %v672 = vadd.f32 0.0, %v671
  %v673 = vpop.f32.mrb[0].mxu0
  %v674 = vadd.f32 0.0, %v673
  %v675 = vpop.f32.mrb[0].mxu0
  %v676 = vadd.f32 0.0, %v675
  %v677 = vpop.f32.mrb[0].mxu0
  %v678 = vadd.f32 0.0, %v677
  %679 = vmatprep.mubr.bf16.mxu0 0
  %680 = vmatmul.mubr.bf16.gmra.mrb[0].mxu0 %v349
  %v681 = vpop.f32.mrb[0].mxu0
  %v682 = vadd.f32 0.0, %v681
  %v683 = vpop.f32.mrb[0].mxu0
  %v684 = vadd.f32 0.0, %v683
  %v685 = vpop.f32.mrb[0].mxu0
  %v686 = vadd.f32 0.0, %v685
  %v687 = vpop.f32.mrb[0].mxu0
  %v688 = vadd.f32 0.0, %v687
  %689 = vmatprep.mubr.bf16.mxu0 0
  %690 = vmatmul.mubr.bf16.gmra.mrb[0].mxu0 %v352
  %v691 = vpop.f32.mrb[0].mxu0
  %v692 = vadd.f32 0.0, %v691
  %v693 = vpop.f32.mrb[0].mxu0
  %v694 = vadd.f32 0.0, %v693
  %v695 = vpop.f32.mrb[0].mxu0
  %v696 = vadd.f32 0.0, %v695
  %v697 = vpop.f32.mrb[0].mxu0
  %v698 = vadd.f32 0.0, %v697
  %699 = vmatprep.mubr.bf16.mxu0 0
  %700 = vmatmul.mubr.bf16.gmra.mrb[0].mxu0 %v355
  %v701 = vpop.f32.mrb[0].mxu0
  %v702 = vadd.f32 0.0, %v701
  %v703 = vpop.f32.mrb[0].mxu0
  %v704 = vadd.f32 0.0, %v703
  %v705 = vpop.f32.mrb[0].mxu0
  %v706 = vadd.f32 0.0, %v705
  %v707 = vpop.f32.mrb[0].mxu0
  %v708 = vadd.f32 0.0, %v707
  %709 = vdwg.mxu0
  %710 = vst [vmem:[%s2] sm:$0xff] %v392
  %711 = vst [vmem:[%s2 + $0x8] sm:$0xff] %v394
  %712 = vst [vmem:[%s2 + $0x10] sm:$0xff] %v396
  %713 = vst [vmem:[%s2 + $0x18] sm:$0xff] %v398
  %714 = vst [vmem:[%s2 + $0x20] sm:$0xff] %v402
  %715 = vst [vmem:[%s2 + $0x28] sm:$0xff] %v404
  %716 = vst [vmem:[%s2 + $0x30] sm:$0xff] %v406
  %717 = vst [vmem:[%s2 + $0x38] sm:$0xff] %v408
  %718 = vst [vmem:[%s2 + $0x40] sm:$0xff] %v412
  %719 = vst [vmem:[%s2 + $0x48] sm:$0xff] %v414
  %720 = vst [vmem:[%s2 + $0x50] sm:$0xff] %v416
  %721 = vst [vmem:[%s2 + $0x58] sm:$0xff] %v418
  %722 = vst [vmem:[%s2 + $0x60] sm:$0xff] %v422
  %723 = vst [vmem:[%s2 + $0x68] sm:$0xff] %v424
  %724 = vst [vmem:[%s2 + $0x70] sm:$0xff] %v426
  %725 = vst [vmem:[%s2 + $0x78] sm:$0xff] %v428
  %726 = vst [vmem:[%s2 + $0x80] sm:$0xff] %v432
  %727 = vst [vmem:[%s2 + $0x88] sm:$0xff] %v434
  %728 = vst [vmem:[%s2 + $0x90] sm:$0xff] %v436
  %729 = vst [vmem:[%s2 + $0x98] sm:$0xff] %v438
  %730 = vst [vmem:[%s2 + $0xa0] sm:$0xff] %v442
  %731 = vst [vmem:[%s2 + $0xa8] sm:$0xff] %v444
  %732 = vst [vmem:[%s2 + $0xb0] sm:$0xff] %v446
  %733 = vst [vmem:[%s2 + $0xb8] sm:$0xff] %v448
  %734 = vst [vmem:[%s2 + $0xc0] sm:$0xff] %v452
  %735 = vst [vmem:[%s2 + $0xc8] sm:$0xff] %v454
  %736 = vst [vmem:[%s2 + $0xd0] sm:$0xff] %v456
  %737 = vst [vmem:[%s2 + $0xd8] sm:$0xff] %v458
  %738 = vst [vmem:[%s2 + $0xe0] sm:$0xff] %v462
  %739 = vst [vmem:[%s2 + $0xe8] sm:$0xff] %v464
  %740 = vst [vmem:[%s2 + $0xf0] sm:$0xff] %v466
  %741 = vst [vmem:[%s2 + $0xf8] sm:$0xff] %v468
  %742 = vst [vmem:[%s2 + $0x100] sm:$0xff] %v472
  %743 = vst [vmem:[%s2 + $0x108] sm:$0xff] %v474
  %744 = vst [vmem:[%s2 + $0x110] sm:$0xff] %v476
  %745 = vst [vmem:[%s2 + $0x118] sm:$0xff] %v478
  %746 = vst [vmem:[%s2 + $0x120] sm:$0xff] %v482
  %747 = vst [vmem:[%s2 + $0x128] sm:$0xff] %v484
  %748 = vst [vmem:[%s2 + $0x130] sm:$0xff] %v486
  %749 = vst [vmem:[%s2 + $0x138] sm:$0xff] %v488
  %750 = vst [vmem:[%s2 + $0x140] sm:$0xff] %v492
  %751 = vst [vmem:[%s2 + $0x148] sm:$0xff] %v494
  %752 = vst [vmem:[%s2 + $0x150] sm:$0xff] %v496
  %753 = vst [vmem:[%s2 + $0x158] sm:$0xff] %v498
  %754 = vst [vmem:[%s2 + $0x160] sm:$0xff] %v502
  %755 = vst [vmem:[%s2 + $0x168] sm:$0xff] %v504
  %756 = vst [vmem:[%s2 + $0x170] sm:$0xff] %v506
  %757 = vst [vmem:[%s2 + $0x178] sm:$0xff] %v508
  %758 = vst [vmem:[%s2 + $0x180] sm:$0xff] %v512
  %759 = vst [vmem:[%s2 + $0x188] sm:$0xff] %v514
  %760 = vst [vmem:[%s2 + $0x190] sm:$0xff] %v516
  %761 = vst [vmem:[%s2 + $0x198] sm:$0xff] %v518
  %762 = vst [vmem:[%s2 + $0x1a0] sm:$0xff] %v522
  %763 = vst [vmem:[%s2 + $0x1a8] sm:$0xff] %v524
  %764 = vst [vmem:[%s2 + $0x1b0] sm:$0xff] %v526
  %765 = vst [vmem:[%s2 + $0x1b8] sm:$0xff] %v528
  %766 = vst [vmem:[%s2 + $0x1c0] sm:$0xff] %v532
  %767 = vst [vmem:[%s2 + $0x1c8] sm:$0xff] %v534
  %768 = vst [vmem:[%s2 + $0x1d0] sm:$0xff] %v536
  %769 = vst [vmem:[%s2 + $0x1d8] sm:$0xff] %v538
  %770 = vst [vmem:[%s2 + $0x1e0] sm:$0xff] %v542
  %771 = vst [vmem:[%s2 + $0x1e8] sm:$0xff] %v544
  %772 = vst [vmem:[%s2 + $0x1f0] sm:$0xff] %v546
  %773 = vst [vmem:[%s2 + $0x1f8] sm:$0xff] %v548
  %774 = vst [vmem:[%s2 + $0x200] sm:$0xff] %v552
  %775 = vst [vmem:[%s2 + $0x208] sm:$0xff] %v554
  %776 = vst [vmem:[%s2 + $0x210] sm:$0xff] %v556
  %777 = vst [vmem:[%s2 + $0x218] sm:$0xff] %v558
  %778 = vst [vmem:[%s2 + $0x220] sm:$0xff] %v562
  %779 = vst [vmem:[%s2 + $0x228] sm:$0xff] %v564
  %780 = vst [vmem:[%s2 + $0x230] sm:$0xff] %v566
  %781 = vst [vmem:[%s2 + $0x238] sm:$0xff] %v568
  %782 = vst [vmem:[%s2 + $0x240] sm:$0xff] %v572
  %783 = vst [vmem:[%s2 + $0x248] sm:$0xff] %v574
  %784 = vst [vmem:[%s2 + $0x250] sm:$0xff] %v576
  %785 = vst [vmem:[%s2 + $0x258] sm:$0xff] %v578
  %786 = vst [vmem:[%s2 + $0x260] sm:$0xff] %v582
  %787 = vst [vmem:[%s2 + $0x268] sm:$0xff] %v584
  %788 = vst [vmem:[%s2 + $0x270] sm:$0xff] %v586
  %789 = vst [vmem:[%s2 + $0x278] sm:$0xff] %v588
  %790 = vst [vmem:[%s2 + $0x280] sm:$0xff] %v592
  %791 = vst [vmem:[%s2 + $0x288] sm:$0xff] %v594
  %792 = vst [vmem:[%s2 + $0x290] sm:$0xff] %v596
  %793 = vst [vmem:[%s2 + $0x298] sm:$0xff] %v598
  %794 = vst [vmem:[%s2 + $0x2a0] sm:$0xff] %v602
  %795 = vst [vmem:[%s2 + $0x2a8] sm:$0xff] %v604
  %796 = vst [vmem:[%s2 + $0x2b0] sm:$0xff] %v606
  %797 = vst [vmem:[%s2 + $0x2b8] sm:$0xff] %v608
  %798 = vst [vmem:[%s2 + $0x2c0] sm:$0xff] %v612
  %799 = vst [vmem:[%s2 + $0x2c8] sm:$0xff] %v614
  %800 = vst [vmem:[%s2 + $0x2d0] sm:$0xff] %v616
  %801 = vst [vmem:[%s2 + $0x2d8] sm:$0xff] %v618
  %802 = vst [vmem:[%s2 + $0x2e0] sm:$0xff] %v622
  %803 = vst [vmem:[%s2 + $0x2e8] sm:$0xff] %v624
  %804 = vst [vmem:[%s2 + $0x2f0] sm:$0xff] %v626
  %805 = vst [vmem:[%s2 + $0x2f8] sm:$0xff] %v628
  %806 = vst [vmem:[%s2 + $0x300] sm:$0xff] %v632
  %807 = vst [vmem:[%s2 + $0x308] sm:$0xff] %v634
  %808 = vst [vmem:[%s2 + $0x310] sm:$0xff] %v636
  %809 = vst [vmem:[%s2 + $0x318] sm:$0xff] %v638
  %810 = vst [vmem:[%s2 + $0x320] sm:$0xff] %v642
  %811 = vst [vmem:[%s2 + $0x328] sm:$0xff] %v644
  %812 = vst [vmem:[%s2 + $0x330] sm:$0xff] %v646
  %813 = vst [vmem:[%s2 + $0x338] sm:$0xff] %v648
  %814 = vst [vmem:[%s2 + $0x340] sm:$0xff] %v652
  %815 = vst [vmem:[%s2 + $0x348] sm:$0xff] %v654
  %816 = vst [vmem:[%s2 + $0x350] sm:$0xff] %v656
  %817 = vst [vmem:[%s2 + $0x358] sm:$0xff] %v658
  %818 = vst [vmem:[%s2 + $0x360] sm:$0xff] %v662
  %819 = vst [vmem:[%s2 + $0x368] sm:$0xff] %v664
  %820 = vst [vmem:[%s2 + $0x370] sm:$0xff] %v666
  %821 = vst [vmem:[%s2 + $0x378] sm:$0xff] %v668
  %822 = vst [vmem:[%s2 + $0x380] sm:$0xff] %v672
  %823 = vst [vmem:[%s2 + $0x388] sm:$0xff] %v674
  %824 = vst [vmem:[%s2 + $0x390] sm:$0xff] %v676
  %825 = vst [vmem:[%s2 + $0x398] sm:$0xff] %v678
  %826 = vst [vmem:[%s2 + $0x3a0] sm:$0xff] %v682
  %827 = vst [vmem:[%s2 + $0x3a8] sm:$0xff] %v684
  %828 = vst [vmem:[%s2 + $0x3b0] sm:$0xff] %v686
  %829 = vst [vmem:[%s2 + $0x3b8] sm:$0xff] %v688
  %830 = vst [vmem:[%s2 + $0x3c0] sm:$0xff] %v692
  %831 = vst [vmem:[%s2 + $0x3c8] sm:$0xff] %v694
  %832 = vst [vmem:[%s2 + $0x3d0] sm:$0xff] %v696
  %833 = vst [vmem:[%s2 + $0x3d8] sm:$0xff] %v698
  %834 = vst [vmem:[%s2 + $0x3e0] sm:$0xff] %v702
  %835 = vst [vmem:[%s2 + $0x3e8] sm:$0xff] %v704
  %836 = vst [vmem:[%s2 + $0x3f0] sm:$0xff] %v706
  %837 = vst [vmem:[%s2 + $0x3f8] sm:$0xff] %v708
  // Predicated region
  $region10: #{attention_forward_pallas.3} parent=0 // pred_check
    _
  $region11: #{attention_forward_pallas.3} parent=0 // pred_check_branch
    %839 = sbr.rel (0) target = $region13
  $region12: #{attention_forward_pallas.3} parent=0 // pred_region
    _
  $region13: #{attention_forward_pallas.3} parent=0 // pred_fallthru
    _
  // Predicated region
  $region14: #{attention_forward_pallas.3} parent=0 // pred_check
    _
  $region15: #{attention_forward_pallas.3} parent=0 // pred_check_branch
    %841 = sbr.rel (0) target = $region17
  $region16: #{attention_forward_pallas.3} parent=0 // pred_region
    _
  $region17: #{attention_forward_pallas.3} parent=0 // pred_fallthru
    _

// kernel: attention_forward_pallas.4
$region0: #{attention_forward_pallas.4}
  #allocation0 [shape = 'u32[]', space=smem, size = 0x4, offset = 0x4, fixed_abs, tag = 'smem constant byte address 0x4 - core index']
  #allocation1 [shape = 'u32[144,128]{1,0:T(1,128)}', space=vmem, size = 0x12000, scoped, tag = 'internal scratch']
  %s0 = inlined_call_operand.vmem [shape: bf16[16,16], index: 0, kind: input, shape index: {}]
  %s1 = inlined_call_operand.vmem [shape: bf16[16,1024], index: 1, kind: input, shape index: {}]
  %s2 = inlined_call_operand.vmem [shape: f32[16,1024], index: 2, kind: output, shape index: {}]
  %s3 = sld [smem:[#allocation0]]
  $region18: #{attention_forward_pallas.4} parent=0
    _
  %s5 = ssub.s32 1, %s3
  %s6 = scalar_select 0, %s5, %s3
  // Predicated region
  $region2: #{attention_forward_pallas.4} parent=0 // pred_check
    _
  $region3: #{attention_forward_pallas.4} parent=0 // pred_check_branch
    %8 = sbr.rel (0) target = $region5
  $region4: #{attention_forward_pallas.4} parent=0 // pred_region
    _
  $region5: #{attention_forward_pallas.4} parent=0 // pred_fallthru
    _
  // Predicated region
  $region6: #{attention_forward_pallas.4} parent=0 // pred_check
    _
  $region7: #{attention_forward_pallas.4} parent=0 // pred_check_branch
    %10 = sbr.rel (0) target = $region9
  $region8: #{attention_forward_pallas.4} parent=0 // pred_region
    _
  $region9: #{attention_forward_pallas.4} parent=0 // pred_fallthru
    _
  %v12 = vld [vmem:[%s0] sm:$0xf]
  %v13 = vld [vmem:[%s0 + $0x4] sm:$0xf]
  %v14 = vld [vmem:[%s1] sm:$0xff]
  %v15 = vld [vmem:[%s1 + $0x8] sm:$0xff]
  %v16 = vld [vmem:[%s1 + $0x10] sm:$0xff]
  %v17 = vld [vmem:[%s1 + $0x18] sm:$0xff]
  %v18 = vld [vmem:[%s1 + $0x20] sm:$0xff]
  %v19 = vld [vmem:[%s1 + $0x28] sm:$0xff]
  %v20 = vld [vmem:[%s1 + $0x30] sm:$0xff]
  %v21 = vld [vmem:[%s1 + $0x38] sm:$0xff]
  %v24 = vunpack.c.l.b16 %v12
  %v25 = vunpack.c.l.b16 %v13
  %v26 = vpack.c.b16 %v25, %v24
  %v35 = vunpack.c.l.b16 %v14
  %v36 = vunpack.c.h.b16 %v14
  %v37 = vunpack.c.l.b16 %v15
  %v38 = vunpack.c.h.b16 %v15
  %v39 = vunpack.c.l.b16 %v16
  %v40 = vunpack.c.h.b16 %v16
  %v41 = vunpack.c.l.b16 %v17
  %v42 = vunpack.c.h.b16 %v17
  %v43 = vunpack.c.l.b16 %v18
  %v44 = vunpack.c.h.b16 %v18
  %v45 = vunpack.c.l.b16 %v19
  %v46 = vunpack.c.h.b16 %v19
  %v47 = vunpack.c.l.b16 %v20
  %v48 = vunpack.c.h.b16 %v20
  %v49 = vunpack.c.l.b16 %v21
  %v50 = vunpack.c.h.b16 %v21
  %v51 = vpack.c.b16 %v43, %v35
  %v52 = vpack.c.b16 %v44, %v36
  %v53 = vpack.c.b16 %v45, %v37
  %v54 = vpack.c.b16 %v46, %v38
  %v55 = vpack.c.b16 %v47, %v39
  %v56 = vpack.c.b16 %v48, %v40
  %v57 = vpack.c.b16 %v49, %v41
  %v58 = vpack.c.b16 %v50, %v42
  %vm67 = vcmask 130048
  %v69 = vsel %vm67, %v26, 0
  %71 = vmatprep.subr.bf16.mxu0 %v52
  %72 = vmatpush1.bf16.msra.mxu0 %v51
  %73 = vmatprep.subr.bf16.mxu0 0
  %74 = vmatpush1.bf16.msra.mxu0 0
  %75 = vmatprep.subr.bf16.mxu0 0
  %76 = vmatpush1.bf16.msra.mxu0 0
  %77 = vmatprep.subr.bf16.mxu0 0
  %78 = vmatpush1.bf16.msra.mxu0 0
  %79 = vmatprep.subr.bf16.mxu0 0
  %80 = vmatpush1.bf16.msra.mxu0 0
  %81 = vmatprep.subr.bf16.mxu0 0
  %82 = vmatpush1.bf16.msra.mxu0 0
  %83 = vmatprep.subr.bf16.mxu0 0
  %84 = vmatpush1.bf16.msra.mxu0 0
  %85 = vmatprep.subr.bf16.mxu0 0
  %86 = vmatpush1.bf16.msra.mxu0 0
  %87 = vmatprep.subr.bf16.mxu0 0
  %88 = vmatpush1.bf16.msra.mxu0 0
  %89 = vmatprep.subr.bf16.mxu0 0
  %90 = vmatpush1.bf16.msra.mxu0 0
  %91 = vmatprep.subr.bf16.mxu0 0
  %92 = vmatpush1.bf16.msra.mxu0 0
  %93 = vmatprep.subr.bf16.mxu0 0
  %94 = vmatpush1.bf16.msra.mxu0 0
  %95 = vmatprep.subr.bf16.mxu0 0
  %96 = vmatpush1.bf16.msra.mxu0 0
  %97 = vmatprep.subr.bf16.mxu0 0
  %98 = vmatpush1.bf16.msra.mxu0 0
  %99 = vmatprep.subr.bf16.mxu0 0
  %100 = vmatpush1.bf16.msra.mxu0 0
  %101 = vmatprep.subr.bf16.mxu0 0
  %102 = vmatpush1.bf16.msra.mxu0 0
  %103 = vmatprep.mubr.bf16.mxu0 0
  %104 = vmatmul.mubr.bf16.gmra.mrb[0].mxu0 %v69
  %v105 = vpop.f32.mrb[0].mxu0
  %v106 = vadd.f32 0.0, %v105
  %v107 = vpop.f32.mrb[0].mxu0
  %v108 = vadd.f32 0.0, %v107
  %v109 = vpop.f32.mrb[0].mxu0
  %v110 = vadd.f32 0.0, %v109
  %v111 = vpop.f32.mrb[0].mxu0
  %v112 = vadd.f32 0.0, %v111
  %113 = vdwg.mxu0
  %114 = vmatprep.subr.bf16.mxu0 %v54
  %115 = vmatpush1.bf16.msra.mxu0 %v53
  %116 = vmatprep.subr.bf16.mxu0 0
  %117 = vmatpush1.bf16.msra.mxu0 0
  %118 = vmatprep.subr.bf16.mxu0 0
  %119 = vmatpush1.bf16.msra.mxu0 0
  %120 = vmatprep.subr.bf16.mxu0 0
  %121 = vmatpush1.bf16.msra.mxu0 0
  %122 = vmatprep.subr.bf16.mxu0 0
  %123 = vmatpush1.bf16.msra.mxu0 0
  %124 = vmatprep.subr.bf16.mxu0 0
  %125 = vmatpush1.bf16.msra.mxu0 0
  %126 = vmatprep.subr.bf16.mxu0 0
  %127 = vmatpush1.bf16.msra.mxu0 0
  %128 = vmatprep.subr.bf16.mxu0 0
  %129 = vmatpush1.bf16.msra.mxu0 0
  %130 = vmatprep.subr.bf16.mxu0 0
  %131 = vmatpush1.bf16.msra.mxu0 0
  %132 = vmatprep.subr.bf16.mxu0 0
  %133 = vmatpush1.bf16.msra.mxu0 0
  %134 = vmatprep.subr.bf16.mxu0 0
  %135 = vmatpush1.bf16.msra.mxu0 0
  %136 = vmatprep.subr.bf16.mxu0 0
  %137 = vmatpush1.bf16.msra.mxu0 0
  %138 = vmatprep.subr.bf16.mxu0 0
  %139 = vmatpush1.bf16.msra.mxu0 0
  %140 = vmatprep.subr.bf16.mxu0 0
  %141 = vmatpush1.bf16.msra.mxu0 0
  %142 = vmatprep.subr.bf16.mxu0 0
  %143 = vmatpush1.bf16.msra.mxu0 0
  %144 = vmatprep.subr.bf16.mxu0 0
  %145 = vmatpush1.bf16.msra.mxu0 0
  %146 = vmatprep.mubr.bf16.mxu0 0
  %147 = vmatmul.mubr.bf16.gmra.mrb[0].mxu0 %v69
  %v148 = vpop.f32.mrb[0].mxu0
  %v149 = vadd.f32 0.0, %v148
  %v150 = vpop.f32.mrb[0].mxu0
  %v151 = vadd.f32 0.0, %v150
  %v152 = vpop.f32.mrb[0].mxu0
  %v153 = vadd.f32 0.0, %v152
  %v154 = vpop.f32.mrb[0].mxu0
  %v155 = vadd.f32 0.0, %v154
  %156 = vdwg.mxu0
  %157 = vmatprep.subr.bf16.mxu0 %v56
  %158 = vmatpush1.bf16.msra.mxu0 %v55
  %159 = vmatprep.subr.bf16.mxu0 0
  %160 = vmatpush1.bf16.msra.mxu0 0
  %161 = vmatprep.subr.bf16.mxu0 0
  %162 = vmatpush1.bf16.msra.mxu0 0
  %163 = vmatprep.subr.bf16.mxu0 0
  %164 = vmatpush1.bf16.msra.mxu0 0
  %165 = vmatprep.subr.bf16.mxu0 0
  %166 = vmatpush1.bf16.msra.mxu0 0
  %167 = vmatprep.subr.bf16.mxu0 0
  %168 = vmatpush1.bf16.msra.mxu0 0
  %169 = vmatprep.subr.bf16.mxu0 0
  %170 = vmatpush1.bf16.msra.mxu0 0
  %171 = vmatprep.subr.bf16.mxu0 0
  %172 = vmatpush1.bf16.msra.mxu0 0
  %173 = vmatprep.subr.bf16.mxu0 0
  %174 = vmatpush1.bf16.msra.mxu0 0
  %175 = vmatprep.subr.bf16.mxu0 0
  %176 = vmatpush1.bf16.msra.mxu0 0
  %177 = vmatprep.subr.bf16.mxu0 0
  %178 = vmatpush1.bf16.msra.mxu0 0
  %179 = vmatprep.subr.bf16.mxu0 0
  %180 = vmatpush1.bf16.msra.mxu0 0
  %181 = vmatprep.subr.bf16.mxu0 0
  %182 = vmatpush1.bf16.msra.mxu0 0
  %183 = vmatprep.subr.bf16.mxu0 0
  %184 = vmatpush1.bf16.msra.mxu0 0
  %185 = vmatprep.subr.bf16.mxu0 0
  %186 = vmatpush1.bf16.msra.mxu0 0
  %187 = vmatprep.subr.bf16.mxu0 0
  %188 = vmatpush1.bf16.msra.mxu0 0
  %189 = vmatprep.mubr.bf16.mxu0 0
  %190 = vmatmul.mubr.bf16.gmra.mrb[0].mxu0 %v69
  %v191 = vpop.f32.mrb[0].mxu0
  %v192 = vadd.f32 0.0, %v191
  %v193 = vpop.f32.mrb[0].mxu0
  %v194 = vadd.f32 0.0, %v193
  %v195 = vpop.f32.mrb[0].mxu0
  %v196 = vadd.f32 0.0, %v195
  %v197 = vpop.f32.mrb[0].mxu0
  %v198 = vadd.f32 0.0, %v197
  %199 = vdwg.mxu0
  %200 = vmatprep.subr.bf16.mxu0 %v58
  %201 = vmatpush1.bf16.msra.mxu0 %v57
  %202 = vmatprep.subr.bf16.mxu0 0
  %203 = vmatpush1.bf16.msra.mxu0 0
  %204 = vmatprep.subr.bf16.mxu0 0
  %205 = vmatpush1.bf16.msra.mxu0 0
  %206 = vmatprep.subr.bf16.mxu0 0
  %207 = vmatpush1.bf16.msra.mxu0 0
  %208 = vmatprep.subr.bf16.mxu0 0
  %209 = vmatpush1.bf16.msra.mxu0 0
  %210 = vmatprep.subr.bf16.mxu0 0
  %211 = vmatpush1.bf16.msra.mxu0 0
  %212 = vmatprep.subr.bf16.mxu0 0
  %213 = vmatpush1.bf16.msra.mxu0 0
  %214 = vmatprep.subr.bf16.mxu0 0
  %215 = vmatpush1.bf16.msra.mxu0 0
  %216 = vmatprep.subr.bf16.mxu0 0
  %217 = vmatpush1.bf16.msra.mxu0 0
  %218 = vmatprep.subr.bf16.mxu0 0
  %219 = vmatpush1.bf16.msra.mxu0 0
  %220 = vmatprep.subr.bf16.mxu0 0
  %221 = vmatpush1.bf16.msra.mxu0 0
  %222 = vmatprep.subr.bf16.mxu0 0
  %223 = vmatpush1.bf16.msra.mxu0 0
  %224 = vmatprep.subr.bf16.mxu0 0
  %225 = vmatpush1.bf16.msra.mxu0 0
  %226 = vmatprep.subr.bf16.mxu0 0
  %227 = vmatpush1.bf16.msra.mxu0 0
  %228 = vmatprep.subr.bf16.mxu0 0
  %229 = vmatpush1.bf16.msra.mxu0 0
  %230 = vmatprep.subr.bf16.mxu0 0
  %231 = vmatpush1.bf16.msra.mxu0 0
  %232 = vmatprep.mubr.bf16.mxu0 0
  %233 = vmatmul.mubr.bf16.gmra.mrb[0].mxu0 %v69
  %v234 = vpop.f32.mrb[0].mxu0
  %v235 = vadd.f32 0.0, %v234
  %v236 = vpop.f32.mrb[0].mxu0
  %v237 = vadd.f32 0.0, %v236
  %v238 = vpop.f32.mrb[0].mxu0
  %v239 = vadd.f32 0.0, %v238
  %v240 = vpop.f32.mrb[0].mxu0
  %v241 = vadd.f32 0.0, %v240
  %242 = vdwg.mxu0
  %243 = vst [vmem:[%s2] sm:$0xff] %v106
  %244 = vst [vmem:[%s2 + $0x8] sm:$0xff] %v108
  %245 = vst [vmem:[%s2 + $0x10] sm:$0xff] %v149
  %246 = vst [vmem:[%s2 + $0x18] sm:$0xff] %v151
  %247 = vst [vmem:[%s2 + $0x20] sm:$0xff] %v192
  %248 = vst [vmem:[%s2 + $0x28] sm:$0xff] %v194
  %249 = vst [vmem:[%s2 + $0x30] sm:$0xff] %v235
  %250 = vst [vmem:[%s2 + $0x38] sm:$0xff] %v237
  %251 = vst [vmem:[%s2 + $0x40] sm:$0xff] %v110
  %252 = vst [vmem:[%s2 + $0x48] sm:$0xff] %v112
  %253 = vst [vmem:[%s2 + $0x50] sm:$0xff] %v153
  %254 = vst [vmem:[%s2 + $0x58] sm:$0xff] %v155
  %255 = vst [vmem:[%s2 + $0x60] sm:$0xff] %v196
  %256 = vst [vmem:[%s2 + $0x68] sm:$0xff] %v198
  %257 = vst [vmem:[%s2 + $0x70] sm:$0xff] %v239
  %258 = vst [vmem:[%s2 + $0x78] sm:$0xff] %v241
  // Predicated region
  $region10: #{attention_forward_pallas.4} parent=0 // pred_check
    _
  $region11: #{attention_forward_pallas.4} parent=0 // pred_check_branch
    %260 = sbr.rel (0) target = $region13
  $region12: #{attention_forward_pallas.4} parent=0 // pred_region
    _
  $region13: #{attention_forward_pallas.4} parent=0 // pred_fallthru
    _
  // Predicated region
  $region14: #{attention_forward_pallas.4} parent=0 // pred_check
    _
  $region15: #{attention_forward_pallas.4} parent=0 // pred_check_branch
    %262 = sbr.rel (0) target = $region17
  $region16: #{attention_forward_pallas.4} parent=0 // pred_region
    _
  $region17: #{attention_forward_pallas.4} parent=0 // pred_fallthru
    _

// kernel: attention_forward_pallas.5
$region0: #{attention_forward_pallas.5}
  #allocation0 [shape = 'u32[]', space=smem, size = 0x4, offset = 0x4, fixed_abs, tag = 'smem constant byte address 0x4 - core index']
  #allocation1 [shape = 'u32[144,128]{1,0:T(1,128)}', space=vmem, size = 0x12000, scoped, tag = 'internal scratch']
  %s0 = inlined_call_operand.vmem [shape: f32[2,6,8,8,128], index: 0, kind: input, shape index: {}]
  %s1 = inlined_call_operand.vmem [shape: f32[2,7,8,8,1], index: 1, kind: input, shape index: {}]
  %s2 = inlined_call_operand.vmem [shape: f32[2,8,8,128], index: 2, kind: output, shape index: {0}]
  %s3 = inlined_call_operand.vmem [shape: f32[2,8,8,128], index: 3, kind: output, shape index: {1}]
  %4 = xla_tuple %s2, %s3
  %s5 = sld [smem:[#allocation0]]
  $region57: #{attention_forward_pallas.5} parent=0
    _
  %s7 = ssub.s32 1, %s5
  %s8 = scalar_select 0, %s7, %s5
  loop: start=0, step=1, limit=4
  $region2: #{attention_forward_pallas.5} parent=0 // loop_pre_header
    _
  $region3: #{attention_forward_pallas.5} parent=0 // loop_header
    %s10 = sphi 0, %s14
    %p11 = scmp.ge.s32.totalorder %s10, 4
    %s20 = sphi 0, %s22
    %s23 = sphi 0, %s20
    %s24 = sphi 0, %s23
    %s40 = sphi 0, %s24
    %s46 = sphi 0, %s48
    %s49 = sphi 0, %s46
    %s50 = sphi 0, %s49
    %s66 = sphi 0, %s50
    %s72 = sphi 0, %s74
    %s75 = sphi 0, %s72
    %s76 = sphi 0, %s75
    %s92 = sphi 0, %s76
    %s98 = sphi 0, %s100
    %s101 = sphi 0, %s98
    %s102 = sphi 0, %s101
    %s118 = sphi 0, %s102
  $region4: #{attention_forward_pallas.5} parent=0 // loop_header_branch
    %13 = sbr.rel (%p11) target = $region8
  $region5: #{attention_forward_pallas.5} parent=0 // loop_body
    %s15 = ssub.s32 %s10, 1
    %s16 = ssub.s32 %s10, 2
    %s17 = sadd.s32 %s10, 1
    %s18 = ssub.s32 %s10, %s17
    %p19 = scmp.eq.s32.totalorder %s18, 0
    %s21 = sadd.s32 %s20, 1
    %s22 = scalar_select %p19, %s20, %s21
    %p25 = pneg %p19
    %p26 = scmp.eq.s32.totalorder %s10, 1
    %p27 = por %p25, %p26
    %p28 = scmp.ne.s32.totalorder %s20, %s23
    %p29 = scmp.eq.s32.totalorder %s10, 0
    %p30 = por %p28, %p29
    %p31 = scmp.ne.s32.totalorder %s20, %s23
    %p32 = scmp.eq.s32.totalorder %s15, 1
    %p33 = por %p31, %p32
    %p34 = scmp.ne.s32.totalorder %s23, %s24
    %p35 = scmp.eq.s32.totalorder %s15, 0
    %p36 = por %p34, %p35
    %p37 = scmp.ne.s32.totalorder %s23, %s24
    %p38 = scmp.eq.s32.totalorder %s16, 1
    %p39 = por %p37, %p38
    %p41 = scmp.ne.s32.totalorder %s24, %s40
    %p42 = scmp.eq.s32.totalorder %s16, 0
    %p43 = por %p41, %p42
    %s44 = ssub.s32 %s10, %s17
    %p45 = scmp.eq.s32.totalorder %s44, 0
    %s47 = sadd.s32 %s46, 1
    %s48 = scalar_select %p45, %s46, %s47
    %p51 = pneg %p45
    %p52 = scmp.eq.s32.totalorder %s10, 1
    %p53 = por %p51, %p52
    %p54 = scmp.ne.s32.totalorder %s46, %s49
    %p55 = scmp.eq.s32.totalorder %s10, 0
    %p56 = por %p54, %p55
    %p57 = scmp.ne.s32.totalorder %s46, %s49
    %p58 = scmp.eq.s32.totalorder %s15, 1
    %p59 = por %p57, %p58
    %p60 = scmp.ne.s32.totalorder %s49, %s50
    %p61 = scmp.eq.s32.totalorder %s15, 0
    %p62 = por %p60, %p61
    %p63 = scmp.ne.s32.totalorder %s49, %s50
    %p64 = scmp.eq.s32.totalorder %s16, 1
    %p65 = por %p63, %p64
    %p67 = scmp.ne.s32.totalorder %s50, %s66
    %p68 = scmp.eq.s32.totalorder %s16, 0
    %p69 = por %p67, %p68
    %s70 = ssub.s32 %s10, %s17
    %p71 = scmp.eq.s32.totalorder %s70, 0
    %s73 = sadd.s32 %s72, 1
    %s74 = scalar_select %p71, %s72, %s73
    %p77 = pneg %p71
    %p78 = scmp.eq.s32.totalorder %s10, 1
    %p79 = por %p77, %p78
    %p80 = scmp.ne.s32.totalorder %s72, %s75
    %p81 = scmp.eq.s32.totalorder %s10, 0
    %p82 = por %p80, %p81
    %p83 = scmp.ne.s32.totalorder %s72, %s75
    %p84 = scmp.eq.s32.totalorder %s15, 1
    %p85 = por %p83, %p84
    %p86 = scmp.ne.s32.totalorder %s75, %s76
    %p87 = scmp.eq.s32.totalorder %s15, 0
    %p88 = por %p86, %p87
    %p89 = scmp.ne.s32.totalorder %s75, %s76
    %p90 = scmp.eq.s32.totalorder %s16, 1
    %p91 = por %p89, %p90
    %p93 = scmp.ne.s32.totalorder %s76, %s92
    %p94 = scmp.eq.s32.totalorder %s16, 0
    %p95 = por %p93, %p94
    %s96 = ssub.s32 %s10, %s17
    %p97 = scmp.eq.s32.totalorder %s96, 0
    %s99 = sadd.s32 %s98, 1
    %s100 = scalar_select %p97, %s98, %s99
    %p103 = pneg %p97
    %p104 = scmp.eq.s32.totalorder %s10, 1
    %p105 = por %p103, %p104
    %p106 = scmp.ne.s32.totalorder %s98, %s101
    %p107 = scmp.eq.s32.totalorder %s10, 0
    %p108 = por %p106, %p107
    %p109 = scmp.ne.s32.totalorder %s98, %s101
    %p110 = scmp.eq.s32.totalorder %s15, 1
    %p111 = por %p109, %p110
    %p112 = scmp.ne.s32.totalorder %s101, %s102
    %p113 = scmp.eq.s32.totalorder %s15, 0
    %p114 = por %p112, %p113
    %p115 = scmp.ne.s32.totalorder %s101, %s102
    %p116 = scmp.eq.s32.totalorder %s16, 1
    %p117 = por %p115, %p116
    %p119 = scmp.ne.s32.totalorder %s102, %s118
    %p120 = scmp.eq.s32.totalorder %s16, 0
    %p121 = por %p119, %p120
    %p122 = scmp.le.s32.totalorder 1, %s10
    %p123 = scmp.lt.s32.totalorder %s10, 3
    %p124 = pnand %p122, %p123
    %p125 = pneg %p124
    // Predicated region
    $region9: #{attention_forward_pallas.5} parent=5 // pred_check
      _
    $region10: #{attention_forward_pallas.5} parent=5 // pred_check_branch
      %127 = sbr.rel (%p124) target = $region12
    $region11: #{attention_forward_pallas.5} parent=5 // pred_region
      %s128 = ssub.s32 %s10, 1
    $region12: #{attention_forward_pallas.5} parent=5 // pred_fallthru
      _
    %p129 = scmp.lt.s32.totalorder %s10, 2
    // Predicated region
    $region13: #{attention_forward_pallas.5} parent=5 // pred_check
      %p130 = pneg %p129
    $region14: #{attention_forward_pallas.5} parent=5 // pred_check_branch
      %132 = sbr.rel (%p130) target = $region16
    $region15: #{attention_forward_pallas.5} parent=5 // pred_region
      // Predicated region
      $region17: #{attention_forward_pallas.5} parent=15 // pred_check
        %p133 = pneg %p30
      $region18: #{attention_forward_pallas.5} parent=15 // pred_check_branch
        %135 = sbr.rel (%p133) target = $region20
      $region19: #{attention_forward_pallas.5} parent=15 // pred_region
        %p136 = scmp.lt.s32.totalorder %s10, 1
        %s137 = scalar_select %p136, %s10, 1
        %s138 = smul.addr %s137, 48
        %s139 = smul.addr %s138, 8
        %s140 = scalar_lea.vmem %s0, %s139
      $region20: #{attention_forward_pallas.5} parent=15 // pred_fallthru
        _
      // Predicated region
      $region21: #{attention_forward_pallas.5} parent=15 // pred_check
        %p141 = pneg %p56
      $region22: #{attention_forward_pallas.5} parent=15 // pred_check_branch
        %143 = sbr.rel (%p141) target = $region24
      $region23: #{attention_forward_pallas.5} parent=15 // pred_region
        %p144 = scmp.lt.s32.totalorder %s10, 1
        %s145 = scalar_select %p144, %s10, 1
        %s146 = smul.addr %s145, 56
        %s147 = smul.addr %s146, 8
        %s148 = scalar_lea.vmem %s1, %s147
      $region24: #{attention_forward_pallas.5} parent=15 // pred_fallthru
        _
    $region16: #{attention_forward_pallas.5} parent=5 // pred_fallthru
      _
    %p149 = scmp.le.s32.totalorder 1, %s10
    %p150 = scmp.lt.s32.totalorder %s10, 3
    %p151 = pnand %p149, %p150
    %p152 = pneg %p151
    // Predicated region
    $region25: #{attention_forward_pallas.5} parent=5 // pred_check
      _
    $region26: #{attention_forward_pallas.5} parent=5 // pred_check_branch
      %154 = sbr.rel (%p151) target = $region28
    $region27: #{attention_forward_pallas.5} parent=5 // pred_region
      %s155 = ssub.s32 %s10, 1
      %p156 = scmp.lt.s32.totalorder %s15, 1
      %s157 = scalar_select %p156, %s15, 1
      %s158 = smul.addr %s157, 48
      %s159 = smul.addr %s158, 8
      %s160 = scalar_lea.vmem %s0, %s159
      %p161 = pneg %p36
      %p162 = pneg %p33
      %p163 = scmp.lt.s32.totalorder %s15, 1
      %s164 = scalar_select %p163, %s15, 1
      %s165 = smul.addr %s164, 56
      %s166 = smul.addr %s165, 8
      %s167 = scalar_lea.vmem %s1, %s166
      %p168 = pneg %p62
      %p169 = pneg %p59
      %p170 = pneg %p88
      %p171 = pneg %p85
      %p172 = scmp.lt.s32.totalorder %s15, 1
      %s173 = scalar_select %p172, %s15, 1
      %s174 = smul.addr %s173, 8
      %s175 = smul.addr %s174, 8
      %s176 = scalar_lea.vmem %s2, %s175
      %p177 = pneg %p114
      %p178 = pneg %p111
      %p179 = scmp.lt.s32.totalorder %s15, 1
      %s180 = scalar_select %p179, %s15, 1
      %s181 = smul.addr %s180, 8
      %s182 = smul.addr %s181, 8
      %s183 = scalar_lea.vmem %s3, %s182
      %p184 = scmp.lt.s32.totalorder %s15, 1
      %s185 = scalar_select %p184, %s15, 1
      %s186 = smul.addr %s185, 48
      %s187 = smul.addr %s186, 8
      %s188 = scalar_lea.vmem %s0, %s187
      %p189 = scmp.lt.s32.totalorder %s15, 1
      %s190 = scalar_select %p189, %s15, 1
      %s191 = smul.addr %s190, 56
      %s192 = smul.addr %s191, 8
      %s193 = scalar_lea.vmem %s1, %s192
      %p194 = scmp.lt.s32.totalorder %s15, 1
      %s195 = scalar_select %p194, %s15, 1
      %s196 = smul.addr %s195, 8
      %s197 = smul.addr %s196, 8
      %s198 = scalar_lea.vmem %s2, %s197
      %p199 = scmp.lt.s32.totalorder %s15, 1
      %s200 = scalar_select %p199, %s15, 1
      %s201 = smul.addr %s200, 8
      %s202 = smul.addr %s201, 8
      %s203 = scalar_lea.vmem %s3, %s202
      %v204 = vld [vmem:[%s188] sm:$0xff]
      %v205 = vld [vmem:[%s188 + $0x8] sm:$0xff]
      %v206 = vld [vmem:[%s188 + $0x10] sm:$0xff]
      %v207 = vld [vmem:[%s188 + $0x18] sm:$0xff]
      %v208 = vld [vmem:[%s188 + $0x20] sm:$0xff]
      %v209 = vld [vmem:[%s188 + $0x28] sm:$0xff]
      %v210 = vld [vmem:[%s188 + $0x30] sm:$0xff]
      %v211 = vld [vmem:[%s188 + $0x38] sm:$0xff]
      %s212 = scalar_lea.vmem %s188, 64
      %v213 = vld [vmem:[%s212] sm:$0xff]
      %v214 = vld [vmem:[%s212 + $0x8] sm:$0xff]
      %v215 = vld [vmem:[%s212 + $0x10] sm:$0xff]
      %v216 = vld [vmem:[%s212 + $0x18] sm:$0xff]
      %v217 = vld [vmem:[%s212 + $0x20] sm:$0xff]
      %v218 = vld [vmem:[%s212 + $0x28] sm:$0xff]
      %v219 = vld [vmem:[%s212 + $0x30] sm:$0xff]
      %v220 = vld [vmem:[%s212 + $0x38] sm:$0xff]
      %s221 = scalar_lea.vmem %s188, 128
      %v222 = vld [vmem:[%s221] sm:$0xff]
      %v223 = vld [vmem:[%s221 + $0x8] sm:$0xff]
      %v224 = vld [vmem:[%s221 + $0x10] sm:$0xff]
      %v225 = vld [vmem:[%s221 + $0x18] sm:$0xff]
      %v226 = vld [vmem:[%s221 + $0x20] sm:$0xff]
      %v227 = vld [vmem:[%s221 + $0x28] sm:$0xff]
      %v228 = vld [vmem:[%s221 + $0x30] sm:$0xff]
      %v229 = vld [vmem:[%s221 + $0x38] sm:$0xff]
      %s230 = scalar_lea.vmem %s188, 192
      %v231 = vld [vmem:[%s230] sm:$0xff]
      %v232 = vld [vmem:[%s230 + $0x8] sm:$0xff]
      %v233 = vld [vmem:[%s230 + $0x10] sm:$0xff]
      %v234 = vld [vmem:[%s230 + $0x18] sm:$0xff]
      %v235 = vld [vmem:[%s230 + $0x20] sm:$0xff]
      %v236 = vld [vmem:[%s230 + $0x28] sm:$0xff]
      %v237 = vld [vmem:[%s230 + $0x30] sm:$0xff]
      %v238 = vld [vmem:[%s230 + $0x38] sm:$0xff]
      %s239 = scalar_lea.vmem %s188, 256
      %v240 = vld [vmem:[%s239] sm:$0xff]
      %v241 = vld [vmem:[%s239 + $0x8] sm:$0xff]
      %v242 = vld [vmem:[%s239 + $0x10] sm:$0xff]
      %v243 = vld [vmem:[%s239 + $0x18] sm:$0xff]
      %v244 = vld [vmem:[%s239 + $0x20] sm:$0xff]
      %v245 = vld [vmem:[%s239 + $0x28] sm:$0xff]
      %v246 = vld [vmem:[%s239 + $0x30] sm:$0xff]
      %v247 = vld [vmem:[%s239 + $0x38] sm:$0xff]
      %s248 = scalar_lea.vmem %s188, 320
      %v249 = vld [vmem:[%s248] sm:$0xff]
      %v250 = vld [vmem:[%s248 + $0x8] sm:$0xff]
      %v251 = vld [vmem:[%s248 + $0x10] sm:$0xff]
      %v252 = vld [vmem:[%s248 + $0x18] sm:$0xff]
      %v253 = vld [vmem:[%s248 + $0x20] sm:$0xff]
      %v254 = vld [vmem:[%s248 + $0x28] sm:$0xff]
      %v255 = vld [vmem:[%s248 + $0x30] sm:$0xff]
      %v256 = vld [vmem:[%s248 + $0x38] sm:$0xff]
      %v257 = vmul.f32 %v222, %v222
      %v258 = vmul.f32 %v223, %v223
      %v259 = vmul.f32 %v224, %v224
      %v260 = vmul.f32 %v225, %v225
      %v261 = vmul.f32 %v226, %v226
      %v262 = vmul.f32 %v227, %v227
      %v263 = vmul.f32 %v228, %v228
      %v264 = vmul.f32 %v229, %v229
      %v265 = vmul.f32 %v231, %v231
      %v266 = vmul.f32 %v232, %v232
      %v267 = vmul.f32 %v233, %v233
      %v268 = vmul.f32 %v234, %v234
      %v269 = vmul.f32 %v235, %v235
      %v270 = vmul.f32 %v236, %v236
      %v271 = vmul.f32 %v237, %v237
      %v272 = vmul.f32 %v238, %v238
      %v273 = vadd.f32 %v257, %v265
      %v274 = vadd.f32 %v258, %v266
      %v275 = vadd.f32 %v259, %v267
      %v276 = vadd.f32 %v260, %v268
      %v277 = vadd.f32 %v261, %v269
      %v278 = vadd.f32 %v262, %v270
      %v279 = vadd.f32 %v263, %v271
      %v280 = vadd.f32 %v264, %v272
      %v281 = vrsqrt.pop %v273
      %v282 = vmul.f32 %v273, %v281
      %vm283 = vcmp.eq.f32.partialorder %v273, inf
      %v284 = vsel %vm283, %v273, %v282
      %vm285 = vcmp.eq.f32.partialorder %v273, 0.0
      %v286 = vand.u32 %v273, 2147483648
      %v287 = vsel %vm285, %v286, %v284
      %v288 = vrsqrt.pop %v274
      %v289 = vmul.f32 %v274, %v288
      %vm290 = vcmp.eq.f32.partialorder %v274, inf
      %v291 = vsel %vm290, %v274, %v289
      %vm292 = vcmp.eq.f32.partialorder %v274, 0.0
      %v293 = vand.u32 %v274, 2147483648
      %v294 = vsel %vm292, %v293, %v291
      %v295 = vrsqrt.pop %v275
      %v296 = vmul.f32 %v275, %v295
      %vm297 = vcmp.eq.f32.partialorder %v275, inf
      %v298 = vsel %vm297, %v275, %v296
      %vm299 = vcmp.eq.f32.partialorder %v275, 0.0
      %v300 = vand.u32 %v275, 2147483648
      %v301 = vsel %vm299, %v300, %v298
      %v302 = vrsqrt.pop %v276
      %v303 = vmul.f32 %v276, %v302
      %vm304 = vcmp.eq.f32.partialorder %v276, inf
      %v305 = vsel %vm304, %v276, %v303
      %vm306 = vcmp.eq.f32.partialorder %v276, 0.0
      %v307 = vand.u32 %v276, 2147483648
      %v308 = vsel %vm306, %v307, %v305
      %v309 = vrsqrt.pop %v277
      %v310 = vmul.f32 %v277, %v309
      %vm311 = vcmp.eq.f32.partialorder %v277, inf
      %v312 = vsel %vm311, %v277, %v310
      %vm313 = vcmp.eq.f32.partialorder %v277, 0.0
      %v314 = vand.u32 %v277, 2147483648
      %v315 = vsel %vm313, %v314, %v312
      %v316 = vrsqrt.pop %v278
      %v317 = vmul.f32 %v278, %v316
      %vm318 = vcmp.eq.f32.partialorder %v278, inf
      %v319 = vsel %vm318, %v278, %v317
      %vm320 = vcmp.eq.f32.partialorder %v278, 0.0
      %v321 = vand.u32 %v278, 2147483648
      %v322 = vsel %vm320, %v321, %v319
      %v323 = vrsqrt.pop %v279
      %v324 = vmul.f32 %v279, %v323
      %vm325 = vcmp.eq.f32.partialorder %v279, inf
      %v326 = vsel %vm325, %v279, %v324
      %vm327 = vcmp.eq.f32.partialorder %v279, 0.0
      %v328 = vand.u32 %v279, 2147483648
      %v329 = vsel %vm327, %v328, %v326
      %v330 = vrsqrt.pop %v280
      %v331 = vmul.f32 %v280, %v330
      %vm332 = vcmp.eq.f32.partialorder %v280, inf
      %v333 = vsel %vm332, %v280, %v331
      %vm334 = vcmp.eq.f32.partialorder %v280, 0.0
      %v335 = vand.u32 %v280, 2147483648
      %v336 = vsel %vm334, %v335, %v333
      %v337 = vmul.f32 %v287, 0.35355338
      %v338 = vmul.f32 %v294, 0.35355338
      %v339 = vmul.f32 %v301, 0.35355338
      %v340 = vmul.f32 %v308, 0.35355338
      %v341 = vmul.f32 %v315, 0.35355338
      %v342 = vmul.f32 %v322, 0.35355338
      %v343 = vmul.f32 %v329, 0.35355338
      %v344 = vmul.f32 %v336, 0.35355338
      %v345 = vmul.f32 %v204, %v204
      %v346 = vmul.f32 %v205, %v205
      %v347 = vmul.f32 %v206, %v206
      %v348 = vmul.f32 %v207, %v207
      %v349 = vmul.f32 %v208, %v208
      %v350 = vmul.f32 %v209, %v209
      %v351 = vmul.f32 %v210, %v210
      %v352 = vmul.f32 %v211, %v211
      %v353 = vmul.f32 %v213, %v213
      %v354 = vmul.f32 %v214, %v214
      %v355 = vmul.f32 %v215, %v215
      %v356 = vmul.f32 %v216, %v216
      %v357 = vmul.f32 %v217, %v217
      %v358 = vmul.f32 %v218, %v218
      %v359 = vmul.f32 %v219, %v219
      %v360 = vmul.f32 %v220, %v220
      %v361 = vadd.f32 %v345, %v353
      %v362 = vadd.f32 %v346, %v354
      %v363 = vadd.f32 %v347, %v355
      %v364 = vadd.f32 %v348, %v356
      %v365 = vadd.f32 %v349, %v357
      %v366 = vadd.f32 %v350, %v358
      %v367 = vadd.f32 %v351, %v359
      %v368 = vadd.f32 %v352, %v360
      %v369 = vrsqrt.pop %v361
      %v370 = vmul.f32 %v361, %v369
      %vm371 = vcmp.eq.f32.partialorder %v361, inf
      %v372 = vsel %vm371, %v361, %v370
      %vm373 = vcmp.eq.f32.partialorder %v361, 0.0
      %v374 = vand.u32 %v361, 2147483648
      %v375 = vsel %vm373, %v374, %v372
      %v376 = vrsqrt.pop %v362
      %v377 = vmul.f32 %v362, %v376
      %vm378 = vcmp.eq.f32.partialorder %v362, inf
      %v379 = vsel %vm378, %v362, %v377
      %vm380 = vcmp.eq.f32.partialorder %v362, 0.0
      %v381 = vand.u32 %v362, 2147483648
      %v382 = vsel %vm380, %v381, %v379
      %v383 = vrsqrt.pop %v363
      %v384 = vmul.f32 %v363, %v383
      %vm385 = vcmp.eq.f32.partialorder %v363, inf
      %v386 = vsel %vm385, %v363, %v384
      %vm387 = vcmp.eq.f32.partialorder %v363, 0.0
      %v388 = vand.u32 %v363, 2147483648
      %v389 = vsel %vm387, %v388, %v386
      %v390 = vrsqrt.pop %v364
      %v391 = vmul.f32 %v364, %v390
      %vm392 = vcmp.eq.f32.partialorder %v364, inf
      %v393 = vsel %vm392, %v364, %v391
      %vm394 = vcmp.eq.f32.partialorder %v364, 0.0
      %v395 = vand.u32 %v364, 2147483648
      %v396 = vsel %vm394, %v395, %v393
      %v397 = vrsqrt.pop %v365
      %v398 = vmul.f32 %v365, %v397
      %vm399 = vcmp.eq.f32.partialorder %v365, inf
      %v400 = vsel %vm399, %v365, %v398
      %vm401 = vcmp.eq.f32.partialorder %v365, 0.0
      %v402 = vand.u32 %v365, 2147483648
      %v403 = vsel %vm401, %v402, %v400
      %v404 = vrsqrt.pop %v366
      %v405 = vmul.f32 %v366, %v404
      %vm406 = vcmp.eq.f32.partialorder %v366, inf
      %v407 = vsel %vm406, %v366, %v405
      %vm408 = vcmp.eq.f32.partialorder %v366, 0.0
      %v409 = vand.u32 %v366, 2147483648
      %v410 = vsel %vm408, %v409, %v407
      %v411 = vrsqrt.pop %v367
      %v412 = vmul.f32 %v367, %v411
      %vm413 = vcmp.eq.f32.partialorder %v367, inf
      %v414 = vsel %vm413, %v367, %v412
      %vm415 = vcmp.eq.f32.partialorder %v367, 0.0
      %v416 = vand.u32 %v367, 2147483648
      %v417 = vsel %vm415, %v416, %v414
      %v418 = vrsqrt.pop %v368
      %v419 = vmul.f32 %v368, %v418
      %vm420 = vcmp.eq.f32.partialorder %v368, inf
      %v421 = vsel %vm420, %v368, %v419
      %vm422 = vcmp.eq.f32.partialorder %v368, 0.0
      %v423 = vand.u32 %v368, 2147483648
      %v424 = vsel %vm422, %v423, %v421
      %v425 = vld [vmem:[%s193] sm:$0xff]
      %v426 = vld [vmem:[%s193 + $0x8] sm:$0xff]
      %v427 = vld [vmem:[%s193 + $0x10] sm:$0xff]
      %v428 = vld [vmem:[%s193 + $0x18] sm:$0xff]
      %v429 = vld [vmem:[%s193 + $0x20] sm:$0xff]
      %v430 = vld [vmem:[%s193 + $0x28] sm:$0xff]
      %v431 = vld [vmem:[%s193 + $0x30] sm:$0xff]
      %v432 = vld [vmem:[%s193 + $0x38] sm:$0xff]
      %v433 = vld [vmem:[%s193 + $0x40] sm:$0xff]
      %v434 = vld [vmem:[%s193 + $0x48] sm:$0xff]
      %v435 = vld [vmem:[%s193 + $0x50] sm:$0xff]
      %v436 = vld [vmem:[%s193 + $0x58] sm:$0xff]
      %v437 = vld [vmem:[%s193 + $0x60] sm:$0xff]
      %v438 = vld [vmem:[%s193 + $0x68] sm:$0xff]
      %v439 = vld [vmem:[%s193 + $0x70] sm:$0xff]
      %v440 = vld [vmem:[%s193 + $0x78] sm:$0xff]
      %v441 = vld [vmem:[%s193 + $0x80] sm:$0xff]
      %v442 = vld [vmem:[%s193 + $0x88] sm:$0xff]
      %v443 = vld [vmem:[%s193 + $0x90] sm:$0xff]
      %v444 = vld [vmem:[%s193 + $0x98] sm:$0xff]
      %v445 = vld [vmem:[%s193 + $0xa0] sm:$0xff]
      %v446 = vld [vmem:[%s193 + $0xa8] sm:$0xff]
      %v447 = vld [vmem:[%s193 + $0xb0] sm:$0xff]
      %v448 = vld [vmem:[%s193 + $0xb8] sm:$0xff]
      %v449 = vld [vmem:[%s193 + $0xc0] sm:$0xff]
      %v450 = vld [vmem:[%s193 + $0xc8] sm:$0xff]
      %v451 = vld [vmem:[%s193 + $0xd0] sm:$0xff]
      %v452 = vld [vmem:[%s193 + $0xd8] sm:$0xff]
      %v453 = vld [vmem:[%s193 + $0xe0] sm:$0xff]
      %v454 = vld [vmem:[%s193 + $0xe8] sm:$0xff]
      %v455 = vld [vmem:[%s193 + $0xf0] sm:$0xff]
      %v456 = vld [vmem:[%s193 + $0xf8] sm:$0xff]
      %v457 = vld [vmem:[%s193 + $0x100] sm:$0xff]
      %v458 = vld [vmem:[%s193 + $0x108] sm:$0xff]
      %v459 = vld [vmem:[%s193 + $0x110] sm:$0xff]
      %v460 = vld [vmem:[%s193 + $0x118] sm:$0xff]
      %v461 = vld [vmem:[%s193 + $0x120] sm:$0xff]
      %v462 = vld [vmem:[%s193 + $0x128] sm:$0xff]
      %v463 = vld [vmem:[%s193 + $0x130] sm:$0xff]
      %v464 = vld [vmem:[%s193 + $0x138] sm:$0xff]
      %v465 = vld [vmem:[%s193 + $0x140] sm:$0xff]
      %v466 = vld [vmem:[%s193 + $0x148] sm:$0xff]
      %v467 = vld [vmem:[%s193 + $0x150] sm:$0xff]
      %v468 = vld [vmem:[%s193 + $0x158] sm:$0xff]
      %v469 = vld [vmem:[%s193 + $0x160] sm:$0xff]
      %v470 = vld [vmem:[%s193 + $0x168] sm:$0xff]
      %v471 = vld [vmem:[%s193 + $0x170] sm:$0xff]
      %v472 = vld [vmem:[%s193 + $0x178] sm:$0xff]
      %v473 = vld [vmem:[%s193 + $0x180] sm:$0xff]
      %v474 = vld [vmem:[%s193 + $0x188] sm:$0xff]
      %v475 = vld [vmem:[%s193 + $0x190] sm:$0xff]
      %v476 = vld [vmem:[%s193 + $0x198] sm:$0xff]
      %v477 = vld [vmem:[%s193 + $0x1a0] sm:$0xff]
      %v478 = vld [vmem:[%s193 + $0x1a8] sm:$0xff]
      %v479 = vld [vmem:[%s193 + $0x1b0] sm:$0xff]
      %v480 = vld [vmem:[%s193 + $0x1b8] sm:$0xff]
      %p481 = scmp.eq.s32.totalorder %s15, 0
      // Predicated region
      $region29: #{attention_forward_pallas.5} parent=27 // pred_check
        %p482 = pneg %p481
      $region30: #{attention_forward_pallas.5} parent=27 // pred_check_branch
        %484 = sbr.rel (%p482) target = $region32
      $region31: #{attention_forward_pallas.5} parent=27 // pred_region
        %v485 = vmul.f32 %v337, %v375
        %v486 = vmul.f32 %v337, %v382
        %v487 = vmul.f32 %v337, %v389
        %v488 = vmul.f32 %v337, %v396
        %v489 = vmul.f32 %v337, %v403
        %v490 = vmul.f32 %v337, %v410
        %v491 = vmul.f32 %v337, %v417
        %v492 = vmul.f32 %v337, %v424
        %494 = vset.pattern.permute.xlu0 0
        %495 = vperm.xlu0 %494, %v425
        %v496 = vpop.permute.xlu0 %495
        %499 = vset.pattern.permute.xlu0 0
        %500 = vperm.xlu0 %499, %v426
        %v501 = vpop.permute.xlu0 %500
        %504 = vset.pattern.permute.xlu0 0
        %505 = vperm.xlu0 %504, %v427
        %v506 = vpop.permute.xlu0 %505
        %509 = vset.pattern.permute.xlu0 0
        %510 = vperm.xlu0 %509, %v428
        %v511 = vpop.permute.xlu0 %510
        %514 = vset.pattern.permute.xlu0 0
        %515 = vperm.xlu0 %514, %v429
        %v516 = vpop.permute.xlu0 %515
        %519 = vset.pattern.permute.xlu0 0
        %520 = vperm.xlu0 %519, %v430
        %v521 = vpop.permute.xlu0 %520
        %524 = vset.pattern.permute.xlu0 0
        %525 = vperm.xlu0 %524, %v431
        %v526 = vpop.permute.xlu0 %525
        %529 = vset.pattern.permute.xlu0 0
        %530 = vperm.xlu0 %529, %v432
        %v531 = vpop.permute.xlu0 %530
        %534 = vset.pattern.permute.xlu0 0
        %535 = vperm.xlu0 %534, %v433
        %v536 = vpop.permute.xlu0 %535
        %539 = vset.pattern.permute.xlu0 0
        %540 = vperm.xlu0 %539, %v434
        %v541 = vpop.permute.xlu0 %540
        %544 = vset.pattern.permute.xlu0 0
        %545 = vperm.xlu0 %544, %v435
        %v546 = vpop.permute.xlu0 %545
        %549 = vset.pattern.permute.xlu0 0
        %550 = vperm.xlu0 %549, %v436
        %v551 = vpop.permute.xlu0 %550
        %554 = vset.pattern.permute.xlu0 0
        %555 = vperm.xlu0 %554, %v437
        %v556 = vpop.permute.xlu0 %555
        %559 = vset.pattern.permute.xlu0 0
        %560 = vperm.xlu0 %559, %v438
        %v561 = vpop.permute.xlu0 %560
        %564 = vset.pattern.permute.xlu0 0
        %565 = vperm.xlu0 %564, %v439
        %v566 = vpop.permute.xlu0 %565
        %569 = vset.pattern.permute.xlu0 0
        %570 = vperm.xlu0 %569, %v440
        %v571 = vpop.permute.xlu0 %570
        %574 = vset.pattern.permute.xlu0 0
        %575 = vperm.xlu0 %574, %v441
        %v576 = vpop.permute.xlu0 %575
        %579 = vset.pattern.permute.xlu0 0
        %580 = vperm.xlu0 %579, %v442
        %v581 = vpop.permute.xlu0 %580
        %584 = vset.pattern.permute.xlu0 0
        %585 = vperm.xlu0 %584, %v443
        %v586 = vpop.permute.xlu0 %585
        %589 = vset.pattern.permute.xlu0 0
        %590 = vperm.xlu0 %589, %v444
        %v591 = vpop.permute.xlu0 %590
        %594 = vset.pattern.permute.xlu0 0
        %595 = vperm.xlu0 %594, %v445
        %v596 = vpop.permute.xlu0 %595
        %599 = vset.pattern.permute.xlu0 0
        %600 = vperm.xlu0 %599, %v446
        %v601 = vpop.permute.xlu0 %600
        %604 = vset.pattern.permute.xlu0 0
        %605 = vperm.xlu0 %604, %v447
        %v606 = vpop.permute.xlu0 %605
        %609 = vset.pattern.permute.xlu0 0
        %610 = vperm.xlu0 %609, %v448
        %v611 = vpop.permute.xlu0 %610
        %614 = vset.pattern.permute.xlu0 0
        %615 = vperm.xlu0 %614, %v449
        %v616 = vpop.permute.xlu0 %615
        %619 = vset.pattern.permute.xlu0 0
        %620 = vperm.xlu0 %619, %v450
        %v621 = vpop.permute.xlu0 %620
        %624 = vset.pattern.permute.xlu0 0
        %625 = vperm.xlu0 %624, %v451
        %v626 = vpop.permute.xlu0 %625
        %629 = vset.pattern.permute.xlu0 0
        %630 = vperm.xlu0 %629, %v452
        %v631 = vpop.permute.xlu0 %630
        %634 = vset.pattern.permute.xlu0 0
        %635 = vperm.xlu0 %634, %v453
        %v636 = vpop.permute.xlu0 %635
        %639 = vset.pattern.permute.xlu0 0
        %640 = vperm.xlu0 %639, %v454
        %v641 = vpop.permute.xlu0 %640
        %644 = vset.pattern.permute.xlu0 0
        %645 = vperm.xlu0 %644, %v455
        %v646 = vpop.permute.xlu0 %645
        %649 = vset.pattern.permute.xlu0 0
        %650 = vperm.xlu0 %649, %v456
        %v651 = vpop.permute.xlu0 %650
        %654 = vset.pattern.permute.xlu0 0
        %655 = vperm.xlu0 %654, %v457
        %v656 = vpop.permute.xlu0 %655
        %659 = vset.pattern.permute.xlu0 0
        %660 = vperm.xlu0 %659, %v458
        %v661 = vpop.permute.xlu0 %660
        %664 = vset.pattern.permute.xlu0 0
        %665 = vperm.xlu0 %664, %v459
        %v666 = vpop.permute.xlu0 %665
        %669 = vset.pattern.permute.xlu0 0
        %670 = vperm.xlu0 %669, %v460
        %v671 = vpop.permute.xlu0 %670
        %674 = vset.pattern.permute.xlu0 0
        %675 = vperm.xlu0 %674, %v461
        %v676 = vpop.permute.xlu0 %675
        %679 = vset.pattern.permute.xlu0 0
        %680 = vperm.xlu0 %679, %v462
        %v681 = vpop.permute.xlu0 %680
        %684 = vset.pattern.permute.xlu0 0
        %685 = vperm.xlu0 %684, %v463
        %v686 = vpop.permute.xlu0 %685
        %689 = vset.pattern.permute.xlu0 0
        %690 = vperm.xlu0 %689, %v464
        %v691 = vpop.permute.xlu0 %690
        %694 = vset.pattern.permute.xlu0 0
        %695 = vperm.xlu0 %694, %v465
        %v696 = vpop.permute.xlu0 %695
        %699 = vset.pattern.permute.xlu0 0
        %700 = vperm.xlu0 %699, %v466
        %v701 = vpop.permute.xlu0 %700
        %704 = vset.pattern.permute.xlu0 0
        %705 = vperm.xlu0 %704, %v467
        %v706 = vpop.permute.xlu0 %705
        %709 = vset.pattern.permute.xlu0 0
        %710 = vperm.xlu0 %709, %v468
        %v711 = vpop.permute.xlu0 %710
        %714 = vset.pattern.permute.xlu0 0
        %715 = vperm.xlu0 %714, %v469
        %v716 = vpop.permute.xlu0 %715
        %719 = vset.pattern.permute.xlu0 0
        %720 = vperm.xlu0 %719, %v470
        %v721 = vpop.permute.xlu0 %720
        %724 = vset.pattern.permute.xlu0 0
        %725 = vperm.xlu0 %724, %v471
        %v726 = vpop.permute.xlu0 %725
        %729 = vset.pattern.permute.xlu0 0
        %730 = vperm.xlu0 %729, %v472
        %v731 = vpop.permute.xlu0 %730
        %734 = vset.pattern.permute.xlu0 0
        %735 = vperm.xlu0 %734, %v473
        %v736 = vpop.permute.xlu0 %735
        %739 = vset.pattern.permute.xlu0 0
        %740 = vperm.xlu0 %739, %v474
        %v741 = vpop.permute.xlu0 %740
        %744 = vset.pattern.permute.xlu0 0
        %745 = vperm.xlu0 %744, %v475
        %v746 = vpop.permute.xlu0 %745
        %749 = vset.pattern.permute.xlu0 0
        %750 = vperm.xlu0 %749, %v476
        %v751 = vpop.permute.xlu0 %750
        %754 = vset.pattern.permute.xlu0 0
        %755 = vperm.xlu0 %754, %v477
        %v756 = vpop.permute.xlu0 %755
        %759 = vset.pattern.permute.xlu0 0
        %760 = vperm.xlu0 %759, %v478
        %v761 = vpop.permute.xlu0 %760
        %764 = vset.pattern.permute.xlu0 0
        %765 = vperm.xlu0 %764, %v479
        %v766 = vpop.permute.xlu0 %765
        %769 = vset.pattern.permute.xlu0 0
        %770 = vperm.xlu0 %769, %v480
        %v771 = vpop.permute.xlu0 %770
        %v773 = vmul.f32 %v338, %v496
        %v774 = vmul.f32 %v338, %v501
        %v775 = vmul.f32 %v338, %v506
        %v776 = vmul.f32 %v338, %v511
        %v777 = vmul.f32 %v338, %v516
        %v778 = vmul.f32 %v338, %v521
        %v779 = vmul.f32 %v338, %v526
        %v780 = vmul.f32 %v338, %v531
        %v781 = vmul.f32 %v339, %v536
        %v782 = vmul.f32 %v339, %v541
        %v783 = vmul.f32 %v339, %v546
        %v784 = vmul.f32 %v339, %v551
        %v785 = vmul.f32 %v339, %v556
        %v786 = vmul.f32 %v339, %v561
        %v787 = vmul.f32 %v339, %v566
        %v788 = vmul.f32 %v339, %v571
        %v789 = vmul.f32 %v340, %v576
        %v790 = vmul.f32 %v340, %v581
        %v791 = vmul.f32 %v340, %v586
        %v792 = vmul.f32 %v340, %v591
        %v793 = vmul.f32 %v340, %v596
        %v794 = vmul.f32 %v340, %v601
        %v795 = vmul.f32 %v340, %v606
        %v796 = vmul.f32 %v340, %v611
        %v797 = vmul.f32 %v341, %v616
        %v798 = vmul.f32 %v341, %v621
        %v799 = vmul.f32 %v341, %v626
        %v800 = vmul.f32 %v341, %v631
        %v801 = vmul.f32 %v341, %v636
        %v802 = vmul.f32 %v341, %v641
        %v803 = vmul.f32 %v341, %v646
        %v804 = vmul.f32 %v341, %v651
        %v805 = vmul.f32 %v342, %v656
        %v806 = vmul.f32 %v342, %v661
        %v807 = vmul.f32 %v342, %v666
        %v808 = vmul.f32 %v342, %v671
        %v809 = vmul.f32 %v342, %v676
        %v810 = vmul.f32 %v342, %v681
        %v811 = vmul.f32 %v342, %v686
        %v812 = vmul.f32 %v342, %v691
        %v813 = vmul.f32 %v343, %v696
        %v814 = vmul.f32 %v343, %v701
        %v815 = vmul.f32 %v343, %v706
        %v816 = vmul.f32 %v343, %v711
        %v817 = vmul.f32 %v343, %v716
        %v818 = vmul.f32 %v343, %v721
        %v819 = vmul.f32 %v343, %v726
        %v820 = vmul.f32 %v343, %v731
        %v821 = vmul.f32 %v344, %v736
        %v822 = vmul.f32 %v344, %v741
        %v823 = vmul.f32 %v344, %v746
        %v824 = vmul.f32 %v344, %v751
        %v825 = vmul.f32 %v344, %v756
        %v826 = vmul.f32 %v344, %v761
        %v827 = vmul.f32 %v344, %v766
        %v828 = vmul.f32 %v344, %v771
        %v829 = vmax.f32 %v773, %v781
        %v830 = vmax.f32 %v829, %v789
        %v831 = vmax.f32 %v830, %v797
        %v832 = vmax.f32 %v831, %v805
        %v833 = vmax.f32 %v832, %v813
        %v834 = vmax.f32 %v833, %v821
        %v835 = vmax.f32 %v774, %v782
        %v836 = vmax.f32 %v835, %v790
        %v837 = vmax.f32 %v836, %v798
        %v838 = vmax.f32 %v837, %v806
        %v839 = vmax.f32 %v838, %v814
        %v840 = vmax.f32 %v839, %v822
        %v841 = vmax.f32 %v775, %v783
        %v842 = vmax.f32 %v841, %v791
        %v843 = vmax.f32 %v842, %v799
        %v844 = vmax.f32 %v843, %v807
        %v845 = vmax.f32 %v844, %v815
        %v846 = vmax.f32 %v845, %v823
        %v847 = vmax.f32 %v776, %v784
        %v848 = vmax.f32 %v847, %v792
        %v849 = vmax.f32 %v848, %v800
        %v850 = vmax.f32 %v849, %v808
        %v851 = vmax.f32 %v850, %v816
        %v852 = vmax.f32 %v851, %v824
        %v853 = vmax.f32 %v777, %v785
        %v854 = vmax.f32 %v853, %v793
        %v855 = vmax.f32 %v854, %v801
        %v856 = vmax.f32 %v855, %v809
        %v857 = vmax.f32 %v856, %v817
        %v858 = vmax.f32 %v857, %v825
        %v859 = vmax.f32 %v778, %v786
        %v860 = vmax.f32 %v859, %v794
        %v861 = vmax.f32 %v860, %v802
        %v862 = vmax.f32 %v861, %v810
        %v863 = vmax.f32 %v862, %v818
        %v864 = vmax.f32 %v863, %v826
        %v865 = vmax.f32 %v779, %v787
        %v866 = vmax.f32 %v865, %v795
        %v867 = vmax.f32 %v866, %v803
        %v868 = vmax.f32 %v867, %v811
        %v869 = vmax.f32 %v868, %v819
        %v870 = vmax.f32 %v869, %v827
        %v871 = vmax.f32 %v780, %v788
        %v872 = vmax.f32 %v871, %v796
        %v873 = vmax.f32 %v872, %v804
        %v874 = vmax.f32 %v873, %v812
        %v875 = vmax.f32 %v874, %v820
        %v876 = vmax.f32 %v875, %v828
        %v877 = vmax.f32 %v485, %v834
        %v878 = vmax.f32 %v486, %v840
        %v879 = vmax.f32 %v487, %v846
        %v880 = vmax.f32 %v488, %v852
        %v881 = vmax.f32 %v489, %v858
        %v882 = vmax.f32 %v490, %v864
        %v883 = vmax.f32 %v491, %v870
        %v884 = vmax.f32 %v492, %v876
        %v885 = vsub.f32 %v485, %v877
        %v886 = vsub.f32 %v486, %v878
        %v887 = vsub.f32 %v487, %v879
        %v888 = vsub.f32 %v488, %v880
        %v889 = vsub.f32 %v489, %v881
        %v890 = vsub.f32 %v490, %v882
        %v891 = vsub.f32 %v491, %v883
        %v892 = vsub.f32 %v492, %v884
        %v893 = vmul.f32 %v885, 1.442695
        %v894 = vpow.pop %v893
        %v895 = vmul.f32 %v886, 1.442695
        %v896 = vpow.pop %v895
        %v897 = vmul.f32 %v887, 1.442695
        %v898 = vpow.pop %v897
        %v899 = vmul.f32 %v888, 1.442695
        %v900 = vpow.pop %v899
        %v901 = vmul.f32 %v889, 1.442695
        %v902 = vpow.pop %v901
        %v903 = vmul.f32 %v890, 1.442695
        %v904 = vpow.pop %v903
        %v905 = vmul.f32 %v891, 1.442695
        %v906 = vpow.pop %v905
        %v907 = vmul.f32 %v892, 1.442695
        %v908 = vpow.pop %v907
        %v909 = vsub.f32 %v773, %v877
        %v910 = vsub.f32 %v774, %v878
        %v911 = vsub.f32 %v775, %v879
        %v912 = vsub.f32 %v776, %v880
        %v913 = vsub.f32 %v777, %v881
        %v914 = vsub.f32 %v778, %v882
        %v915 = vsub.f32 %v779, %v883
        %v916 = vsub.f32 %v780, %v884
        %v917 = vsub.f32 %v781, %v877
        %v918 = vsub.f32 %v782, %v878
        %v919 = vsub.f32 %v783, %v879
        %v920 = vsub.f32 %v784, %v880
        %v921 = vsub.f32 %v785, %v881
        %v922 = vsub.f32 %v786, %v882
        %v923 = vsub.f32 %v787, %v883
        %v924 = vsub.f32 %v788, %v884
        %v925 = vsub.f32 %v789, %v877
        %v926 = vsub.f32 %v790, %v878
        %v927 = vsub.f32 %v791, %v879
        %v928 = vsub.f32 %v792, %v880
        %v929 = vsub.f32 %v793, %v881
        %v930 = vsub.f32 %v794, %v882
        %v931 = vsub.f32 %v795, %v883
        %v932 = vsub.f32 %v796, %v884
        %v933 = vsub.f32 %v797, %v877
        %v934 = vsub.f32 %v798, %v878
        %v935 = vsub.f32 %v799, %v879
        %v936 = vsub.f32 %v800, %v880
        %v937 = vsub.f32 %v801, %v881
        %v938 = vsub.f32 %v802, %v882
        %v939 = vsub.f32 %v803, %v883
        %v940 = vsub.f32 %v804, %v884
        %v941 = vsub.f32 %v805, %v877
        %v942 = vsub.f32 %v806, %v878
        %v943 = vsub.f32 %v807, %v879
        %v944 = vsub.f32 %v808, %v880
        %v945 = vsub.f32 %v809, %v881
        %v946 = vsub.f32 %v810, %v882
        %v947 = vsub.f32 %v811, %v883
        %v948 = vsub.f32 %v812, %v884
        %v949 = vsub.f32 %v813, %v877
        %v950 = vsub.f32 %v814, %v878
        %v951 = vsub.f32 %v815, %v879
        %v952 = vsub.f32 %v816, %v880
        %v953 = vsub.f32 %v817, %v881
        %v954 = vsub.f32 %v818, %v882
        %v955 = vsub.f32 %v819, %v883
        %v956 = vsub.f32 %v820, %v884
        %v957 = vsub.f32 %v821, %v877
        %v958 = vsub.f32 %v822, %v878
        %v959 = vsub.f32 %v823, %v879
        %v960 = vsub.f32 %v824, %v880
        %v961 = vsub.f32 %v825, %v881
        %v962 = vsub.f32 %v826, %v882
        %v963 = vsub.f32 %v827, %v883
        %v964 = vsub.f32 %v828, %v884
        %v965 = vmul.f32 %v909, 1.442695
        %v966 = vpow.pop %v965
        %v967 = vmul.f32 %v910, 1.442695
        %v968 = vpow.pop %v967
        %v969 = vmul.f32 %v911, 1.442695
        %v970 = vpow.pop %v969
        %v971 = vmul.f32 %v912, 1.442695
        %v972 = vpow.pop %v971
        %v973 = vmul.f32 %v913, 1.442695
        %v974 = vpow.pop %v973
        %v975 = vmul.f32 %v914, 1.442695
        %v976 = vpow.pop %v975
        %v977 = vmul.f32 %v915, 1.442695
        %v978 = vpow.pop %v977
        %v979 = vmul.f32 %v916, 1.442695
        %v980 = vpow.pop %v979
        %v981 = vmul.f32 %v917, 1.442695
        %v982 = vpow.pop %v981
        %v983 = vmul.f32 %v918, 1.442695
        %v984 = vpow.pop %v983
        %v985 = vmul.f32 %v919, 1.442695
        %v986 = vpow.pop %v985
        %v987 = vmul.f32 %v920, 1.442695
        %v988 = vpow.pop %v987
        %v989 = vmul.f32 %v921, 1.442695
        %v990 = vpow.pop %v989
        %v991 = vmul.f32 %v922, 1.442695
        %v992 = vpow.pop %v991
        %v993 = vmul.f32 %v923, 1.442695
        %v994 = vpow.pop %v993
        %v995 = vmul.f32 %v924, 1.442695
        %v996 = vpow.pop %v995
        %v997 = vmul.f32 %v925, 1.442695
        %v998 = vpow.pop %v997
        %v999 = vmul.f32 %v926, 1.442695
        %v1000 = vpow.pop %v999
        %v1001 = vmul.f32 %v927, 1.442695
        %v1002 = vpow.pop %v1001
        %v1003 = vmul.f32 %v928, 1.442695
        %v1004 = vpow.pop %v1003
        %v1005 = vmul.f32 %v929, 1.442695
        %v1006 = vpow.pop %v1005
        %v1007 = vmul.f32 %v930, 1.442695
        %v1008 = vpow.pop %v1007
        %v1009 = vmul.f32 %v931, 1.442695
        %v1010 = vpow.pop %v1009
        %v1011 = vmul.f32 %v932, 1.442695
        %v1012 = vpow.pop %v1011
        %v1013 = vmul.f32 %v933, 1.442695
        %v1014 = vpow.pop %v1013
        %v1015 = vmul.f32 %v934, 1.442695
        %v1016 = vpow.pop %v1015
        %v1017 = vmul.f32 %v935, 1.442695
        %v1018 = vpow.pop %v1017
        %v1019 = vmul.f32 %v936, 1.442695
        %v1020 = vpow.pop %v1019
        %v1021 = vmul.f32 %v937, 1.442695
        %v1022 = vpow.pop %v1021
        %v1023 = vmul.f32 %v938, 1.442695
        %v1024 = vpow.pop %v1023
        %v1025 = vmul.f32 %v939, 1.442695
        %v1026 = vpow.pop %v1025
        %v1027 = vmul.f32 %v940, 1.442695
        %v1028 = vpow.pop %v1027
        %v1029 = vmul.f32 %v941, 1.442695
        %v1030 = vpow.pop %v1029
        %v1031 = vmul.f32 %v942, 1.442695
        %v1032 = vpow.pop %v1031
        %v1033 = vmul.f32 %v943, 1.442695
        %v1034 = vpow.pop %v1033
        %v1035 = vmul.f32 %v944, 1.442695
        %v1036 = vpow.pop %v1035
        %v1037 = vmul.f32 %v945, 1.442695
        %v1038 = vpow.pop %v1037
        %v1039 = vmul.f32 %v946, 1.442695
        %v1040 = vpow.pop %v1039
        %v1041 = vmul.f32 %v947, 1.442695
        %v1042 = vpow.pop %v1041
        %v1043 = vmul.f32 %v948, 1.442695
        %v1044 = vpow.pop %v1043
        %v1045 = vmul.f32 %v949, 1.442695
        %v1046 = vpow.pop %v1045
        %v1047 = vmul.f32 %v950, 1.442695
        %v1048 = vpow.pop %v1047
        %v1049 = vmul.f32 %v951, 1.442695
        %v1050 = vpow.pop %v1049
        %v1051 = vmul.f32 %v952, 1.442695
        %v1052 = vpow.pop %v1051
        %v1053 = vmul.f32 %v953, 1.442695
        %v1054 = vpow.pop %v1053
        %v1055 = vmul.f32 %v954, 1.442695
        %v1056 = vpow.pop %v1055
        %v1057 = vmul.f32 %v955, 1.442695
        %v1058 = vpow.pop %v1057
        %v1059 = vmul.f32 %v956, 1.442695
        %v1060 = vpow.pop %v1059
        %v1061 = vmul.f32 %v957, 1.442695
        %v1062 = vpow.pop %v1061
        %v1063 = vmul.f32 %v958, 1.442695
        %v1064 = vpow.pop %v1063
        %v1065 = vmul.f32 %v959, 1.442695
        %v1066 = vpow.pop %v1065
        %v1067 = vmul.f32 %v960, 1.442695
        %v1068 = vpow.pop %v1067
        %v1069 = vmul.f32 %v961, 1.442695
        %v1070 = vpow.pop %v1069
        %v1071 = vmul.f32 %v962, 1.442695
        %v1072 = vpow.pop %v1071
        %v1073 = vmul.f32 %v963, 1.442695
        %v1074 = vpow.pop %v1073
        %v1075 = vmul.f32 %v964, 1.442695
        %v1076 = vpow.pop %v1075
        %v1077 = vadd.f32 %v966, %v982
        %v1078 = vadd.f32 %v1077, %v998
        %v1079 = vadd.f32 %v1078, %v1014
        %v1080 = vadd.f32 %v1079, %v1030
        %v1081 = vadd.f32 %v1080, %v1046
        %v1082 = vadd.f32 %v1081, %v1062
        %v1083 = vadd.f32 %v968, %v984
        %v1084 = vadd.f32 %v1083, %v1000
        %v1085 = vadd.f32 %v1084, %v1016
        %v1086 = vadd.f32 %v1085, %v1032
        %v1087 = vadd.f32 %v1086, %v1048
        %v1088 = vadd.f32 %v1087, %v1064
        %v1089 = vadd.f32 %v970, %v986
        %v1090 = vadd.f32 %v1089, %v1002
        %v1091 = vadd.f32 %v1090, %v1018
        %v1092 = vadd.f32 %v1091, %v1034
        %v1093 = vadd.f32 %v1092, %v1050
        %v1094 = vadd.f32 %v1093, %v1066
        %v1095 = vadd.f32 %v972, %v988
        %v1096 = vadd.f32 %v1095, %v1004
        %v1097 = vadd.f32 %v1096, %v1020
        %v1098 = vadd.f32 %v1097, %v1036
        %v1099 = vadd.f32 %v1098, %v1052
        %v1100 = vadd.f32 %v1099, %v1068
        %v1101 = vadd.f32 %v974, %v990
        %v1102 = vadd.f32 %v1101, %v1006
        %v1103 = vadd.f32 %v1102, %v1022
        %v1104 = vadd.f32 %v1103, %v1038
        %v1105 = vadd.f32 %v1104, %v1054
        %v1106 = vadd.f32 %v1105, %v1070
        %v1107 = vadd.f32 %v976, %v992
        %v1108 = vadd.f32 %v1107, %v1008
        %v1109 = vadd.f32 %v1108, %v1024
        %v1110 = vadd.f32 %v1109, %v1040
        %v1111 = vadd.f32 %v1110, %v1056
        %v1112 = vadd.f32 %v1111, %v1072
        %v1113 = vadd.f32 %v978, %v994
        %v1114 = vadd.f32 %v1113, %v1010
        %v1115 = vadd.f32 %v1114, %v1026
        %v1116 = vadd.f32 %v1115, %v1042
        %v1117 = vadd.f32 %v1116, %v1058
        %v1118 = vadd.f32 %v1117, %v1074
        %v1119 = vadd.f32 %v980, %v996
        %v1120 = vadd.f32 %v1119, %v1012
        %v1121 = vadd.f32 %v1120, %v1028
        %v1122 = vadd.f32 %v1121, %v1044
        %v1123 = vadd.f32 %v1122, %v1060
        %v1124 = vadd.f32 %v1123, %v1076
        %v1125 = vadd.f32 %v894, %v1082
        %v1126 = vadd.f32 %v896, %v1088
        %v1127 = vadd.f32 %v898, %v1094
        %v1128 = vadd.f32 %v900, %v1100
        %v1129 = vadd.f32 %v902, %v1106
        %v1130 = vadd.f32 %v904, %v1112
        %v1131 = vadd.f32 %v906, %v1118
        %v1132 = vadd.f32 %v908, %v1124
        %v1133 = vrcp.pop %v1125
        %v1134 = vrcp.pop %v1126
        %v1135 = vrcp.pop %v1127
        %v1136 = vrcp.pop %v1128
        %v1137 = vrcp.pop %v1129
        %v1138 = vrcp.pop %v1130
        %v1139 = vrcp.pop %v1131
        %v1140 = vrcp.pop %v1132
        %v1141 = vmul.f32 %v894, %v1133
        %v1142 = vmul.f32 %v896, %v1134
        %v1143 = vmul.f32 %v898, %v1135
        %v1144 = vmul.f32 %v900, %v1136
        %v1145 = vmul.f32 %v902, %v1137
        %v1146 = vmul.f32 %v904, %v1138
        %v1147 = vmul.f32 %v906, %v1139
        %v1148 = vmul.f32 %v908, %v1140
        %v1149 = vadd.f32 %v1141, %v1142
        %v1150 = vadd.f32 %v1149, %v1143
        %v1151 = vadd.f32 %v1150, %v1144
        %v1152 = vadd.f32 %v1151, %v1145
        %v1153 = vadd.f32 %v1152, %v1146
        %v1154 = vadd.f32 %v1153, %v1147
        %v1155 = vadd.f32 %v1154, %v1148
        %v1156 = vrcp.pop 8.0
        %v1157 = vmul.f32 %v1155, %v1156
        %v1158 = vmul.f32 %v966, %v1133
        %v1159 = vmul.f32 %v968, %v1134
        %v1160 = vmul.f32 %v970, %v1135
        %v1161 = vmul.f32 %v972, %v1136
        %v1162 = vmul.f32 %v974, %v1137
        %v1163 = vmul.f32 %v976, %v1138
        %v1164 = vmul.f32 %v978, %v1139
        %v1165 = vmul.f32 %v980, %v1140
        %v1166 = vmul.f32 %v982, %v1133
        %v1167 = vmul.f32 %v984, %v1134
        %v1168 = vmul.f32 %v986, %v1135
        %v1169 = vmul.f32 %v988, %v1136
        %v1170 = vmul.f32 %v990, %v1137
        %v1171 = vmul.f32 %v992, %v1138
        %v1172 = vmul.f32 %v994, %v1139
        %v1173 = vmul.f32 %v996, %v1140
        %v1174 = vmul.f32 %v998, %v1133
        %v1175 = vmul.f32 %v1000, %v1134
        %v1176 = vmul.f32 %v1002, %v1135
        %v1177 = vmul.f32 %v1004, %v1136
        %v1178 = vmul.f32 %v1006, %v1137
        %v1179 = vmul.f32 %v1008, %v1138
        %v1180 = vmul.f32 %v1010, %v1139
        %v1181 = vmul.f32 %v1012, %v1140
        %v1182 = vmul.f32 %v1014, %v1133
        %v1183 = vmul.f32 %v1016, %v1134
        %v1184 = vmul.f32 %v1018, %v1135
        %v1185 = vmul.f32 %v1020, %v1136
        %v1186 = vmul.f32 %v1022, %v1137
        %v1187 = vmul.f32 %v1024, %v1138
        %v1188 = vmul.f32 %v1026, %v1139
        %v1189 = vmul.f32 %v1028, %v1140
        %v1190 = vmul.f32 %v1030, %v1133
        %v1191 = vmul.f32 %v1032, %v1134
        %v1192 = vmul.f32 %v1034, %v1135
        %v1193 = vmul.f32 %v1036, %v1136
        %v1194 = vmul.f32 %v1038, %v1137
        %v1195 = vmul.f32 %v1040, %v1138
        %v1196 = vmul.f32 %v1042, %v1139
        %v1197 = vmul.f32 %v1044, %v1140
        %v1198 = vmul.f32 %v1046, %v1133
        %v1199 = vmul.f32 %v1048, %v1134
        %v1200 = vmul.f32 %v1050, %v1135
        %v1201 = vmul.f32 %v1052, %v1136
        %v1202 = vmul.f32 %v1054, %v1137
        %v1203 = vmul.f32 %v1056, %v1138
        %v1204 = vmul.f32 %v1058, %v1139
        %v1205 = vmul.f32 %v1060, %v1140
        %v1206 = vmul.f32 %v1062, %v1133
        %v1207 = vmul.f32 %v1064, %v1134
        %v1208 = vmul.f32 %v1066, %v1135
        %v1209 = vmul.f32 %v1068, %v1136
        %v1210 = vmul.f32 %v1070, %v1137
        %v1211 = vmul.f32 %v1072, %v1138
        %v1212 = vmul.f32 %v1074, %v1139
        %v1213 = vmul.f32 %v1076, %v1140
        %v1214 = vadd.f32 %v1158, %v1159
        %v1215 = vadd.f32 %v1214, %v1160
        %v1216 = vadd.f32 %v1215, %v1161
        %v1217 = vadd.f32 %v1216, %v1162
        %v1218 = vadd.f32 %v1217, %v1163
        %v1219 = vadd.f32 %v1218, %v1164
        %v1220 = vadd.f32 %v1219, %v1165
        %v1221 = vadd.f32 %v1166, %v1167
        %v1222 = vadd.f32 %v1221, %v1168
        %v1223 = vadd.f32 %v1222, %v1169
        %v1224 = vadd.f32 %v1223, %v1170
        %v1225 = vadd.f32 %v1224, %v1171
        %v1226 = vadd.f32 %v1225, %v1172
        %v1227 = vadd.f32 %v1226, %v1173
        %v1228 = vadd.f32 %v1174, %v1175
        %v1229 = vadd.f32 %v1228, %v1176
        %v1230 = vadd.f32 %v1229, %v1177
        %v1231 = vadd.f32 %v1230, %v1178
        %v1232 = vadd.f32 %v1231, %v1179
        %v1233 = vadd.f32 %v1232, %v1180
        %v1234 = vadd.f32 %v1233, %v1181
        %v1235 = vadd.f32 %v1182, %v1183
        %v1236 = vadd.f32 %v1235, %v1184
        %v1237 = vadd.f32 %v1236, %v1185
        %v1238 = vadd.f32 %v1237, %v1186
        %v1239 = vadd.f32 %v1238, %v1187
        %v1240 = vadd.f32 %v1239, %v1188
        %v1241 = vadd.f32 %v1240, %v1189
        %v1242 = vadd.f32 %v1190, %v1191
        %v1243 = vadd.f32 %v1242, %v1192
        %v1244 = vadd.f32 %v1243, %v1193
        %v1245 = vadd.f32 %v1244, %v1194
        %v1246 = vadd.f32 %v1245, %v1195
        %v1247 = vadd.f32 %v1246, %v1196
        %v1248 = vadd.f32 %v1247, %v1197
        %v1249 = vadd.f32 %v1198, %v1199
        %v1250 = vadd.f32 %v1249, %v1200
        %v1251 = vadd.f32 %v1250, %v1201
        %v1252 = vadd.f32 %v1251, %v1202
        %v1253 = vadd.f32 %v1252, %v1203
        %v1254 = vadd.f32 %v1253, %v1204
        %v1255 = vadd.f32 %v1254, %v1205
        %v1256 = vadd.f32 %v1206, %v1207
        %v1257 = vadd.f32 %v1256, %v1208
        %v1258 = vadd.f32 %v1257, %v1209
        %v1259 = vadd.f32 %v1258, %v1210
        %v1260 = vadd.f32 %v1259, %v1211
        %v1261 = vadd.f32 %v1260, %v1212
        %v1262 = vadd.f32 %v1261, %v1213
        %v1263 = vmul.f32 %v1220, %v1156
        %v1264 = vmul.f32 %v1227, %v1156
        %v1265 = vmul.f32 %v1234, %v1156
        %v1266 = vmul.f32 %v1241, %v1156
        %v1267 = vmul.f32 %v1248, %v1156
        %v1268 = vmul.f32 %v1255, %v1156
        %v1269 = vmul.f32 %v1262, %v1156
        %v1270 = vmul.f32 %v240, %v1157
        %v1271 = vmul.f32 %v241, %v1263
        %v1272 = vmul.f32 %v242, %v1264
        %v1273 = vmul.f32 %v243, %v1265
        %v1274 = vmul.f32 %v244, %v1266
        %v1275 = vmul.f32 %v245, %v1267
        %v1276 = vmul.f32 %v246, %v1268
        %v1277 = vmul.f32 %v247, %v1269
        %1278 = vst [vmem:[%s198] sm:$0xff] %v1270
        %1279 = vst [vmem:[%s198 + $0x8] sm:$0xff] %v1271
        %1280 = vst [vmem:[%s198 + $0x10] sm:$0xff] %v1272
        %1281 = vst [vmem:[%s198 + $0x18] sm:$0xff] %v1273
        %1282 = vst [vmem:[%s198 + $0x20] sm:$0xff] %v1274
        %1283 = vst [vmem:[%s198 + $0x28] sm:$0xff] %v1275
        %1284 = vst [vmem:[%s198 + $0x30] sm:$0xff] %v1276
        %1285 = vst [vmem:[%s198 + $0x38] sm:$0xff] %v1277
        %v1286 = vmul.f32 %v249, %v1157
        %v1287 = vmul.f32 %v250, %v1263
        %v1288 = vmul.f32 %v251, %v1264
        %v1289 = vmul.f32 %v252, %v1265
        %v1290 = vmul.f32 %v253, %v1266
        %v1291 = vmul.f32 %v254, %v1267
        %v1292 = vmul.f32 %v255, %v1268
        %v1293 = vmul.f32 %v256, %v1269
        %1294 = vst [vmem:[%s203] sm:$0xff] %v1286
        %1295 = vst [vmem:[%s203 + $0x8] sm:$0xff] %v1287
        %1296 = vst [vmem:[%s203 + $0x10] sm:$0xff] %v1288
        %1297 = vst [vmem:[%s203 + $0x18] sm:$0xff] %v1289
        %1298 = vst [vmem:[%s203 + $0x20] sm:$0xff] %v1290
        %1299 = vst [vmem:[%s203 + $0x28] sm:$0xff] %v1291
        %1300 = vst [vmem:[%s203 + $0x30] sm:$0xff] %v1292
        %1301 = vst [vmem:[%s203 + $0x38] sm:$0xff] %v1293
      $region32: #{attention_forward_pallas.5} parent=27 // pred_fallthru
        _
      %p1302 = scmp.eq.s32.totalorder %s15, 1
      // Predicated region
      $region33: #{attention_forward_pallas.5} parent=27 // pred_check
        %p1303 = pneg %p1302
      $region34: #{attention_forward_pallas.5} parent=27 // pred_check_branch
        %1305 = sbr.rel (%p1303) target = $region36
      $region35: #{attention_forward_pallas.5} parent=27 // pred_region
        %v1306 = vmul.f32 %v337, %v375
        %v1307 = vmul.f32 %v338, %v382
        %v1308 = vmul.f32 %v339, %v389
        %v1309 = vmul.f32 %v340, %v396
        %v1310 = vmul.f32 %v341, %v403
        %v1311 = vmul.f32 %v342, %v410
        %v1312 = vmul.f32 %v343, %v417
        %v1313 = vmul.f32 %v344, %v424
        %1315 = vset.pattern.permute.xlu0 0
        %1316 = vperm.xlu0 %1315, %v425
        %v1317 = vpop.permute.xlu0 %1316
        %1320 = vset.pattern.permute.xlu0 0
        %1321 = vperm.xlu0 %1320, %v426
        %v1322 = vpop.permute.xlu0 %1321
        %1325 = vset.pattern.permute.xlu0 0
        %1326 = vperm.xlu0 %1325, %v427
        %v1327 = vpop.permute.xlu0 %1326
        %1330 = vset.pattern.permute.xlu0 0
        %1331 = vperm.xlu0 %1330, %v428
        %v1332 = vpop.permute.xlu0 %1331
        %1335 = vset.pattern.permute.xlu0 0
        %1336 = vperm.xlu0 %1335, %v429
        %v1337 = vpop.permute.xlu0 %1336
        %1340 = vset.pattern.permute.xlu0 0
        %1341 = vperm.xlu0 %1340, %v430
        %v1342 = vpop.permute.xlu0 %1341
        %1345 = vset.pattern.permute.xlu0 0
        %1346 = vperm.xlu0 %1345, %v431
        %v1347 = vpop.permute.xlu0 %1346
        %1350 = vset.pattern.permute.xlu0 0
        %1351 = vperm.xlu0 %1350, %v432
        %v1352 = vpop.permute.xlu0 %1351
        %1355 = vset.pattern.permute.xlu0 0
        %1356 = vperm.xlu0 %1355, %v433
        %v1357 = vpop.permute.xlu0 %1356
        %1360 = vset.pattern.permute.xlu0 0
        %1361 = vperm.xlu0 %1360, %v434
        %v1362 = vpop.permute.xlu0 %1361
        %1365 = vset.pattern.permute.xlu0 0
        %1366 = vperm.xlu0 %1365, %v435
        %v1367 = vpop.permute.xlu0 %1366
        %1370 = vset.pattern.permute.xlu0 0
        %1371 = vperm.xlu0 %1370, %v436
        %v1372 = vpop.permute.xlu0 %1371
        %1375 = vset.pattern.permute.xlu0 0
        %1376 = vperm.xlu0 %1375, %v437
        %v1377 = vpop.permute.xlu0 %1376
        %1380 = vset.pattern.permute.xlu0 0
        %1381 = vperm.xlu0 %1380, %v438
        %v1382 = vpop.permute.xlu0 %1381
        %1385 = vset.pattern.permute.xlu0 0
        %1386 = vperm.xlu0 %1385, %v439
        %v1387 = vpop.permute.xlu0 %1386
        %1390 = vset.pattern.permute.xlu0 0
        %1391 = vperm.xlu0 %1390, %v440
        %v1392 = vpop.permute.xlu0 %1391
        %1395 = vset.pattern.permute.xlu0 0
        %1396 = vperm.xlu0 %1395, %v441
        %v1397 = vpop.permute.xlu0 %1396
        %1400 = vset.pattern.permute.xlu0 0
        %1401 = vperm.xlu0 %1400, %v442
        %v1402 = vpop.permute.xlu0 %1401
        %1405 = vset.pattern.permute.xlu0 0
        %1406 = vperm.xlu0 %1405, %v443
        %v1407 = vpop.permute.xlu0 %1406
        %1410 = vset.pattern.permute.xlu0 0
        %1411 = vperm.xlu0 %1410, %v444
        %v1412 = vpop.permute.xlu0 %1411
        %1415 = vset.pattern.permute.xlu0 0
        %1416 = vperm.xlu0 %1415, %v445
        %v1417 = vpop.permute.xlu0 %1416
        %1420 = vset.pattern.permute.xlu0 0
        %1421 = vperm.xlu0 %1420, %v446
        %v1422 = vpop.permute.xlu0 %1421
        %1425 = vset.pattern.permute.xlu0 0
        %1426 = vperm.xlu0 %1425, %v447
        %v1427 = vpop.permute.xlu0 %1426
        %1430 = vset.pattern.permute.xlu0 0
        %1431 = vperm.xlu0 %1430, %v448
        %v1432 = vpop.permute.xlu0 %1431
        %1435 = vset.pattern.permute.xlu0 0
        %1436 = vperm.xlu0 %1435, %v449
        %v1437 = vpop.permute.xlu0 %1436
        %1440 = vset.pattern.permute.xlu0 0
        %1441 = vperm.xlu0 %1440, %v450
        %v1442 = vpop.permute.xlu0 %1441
        %1445 = vset.pattern.permute.xlu0 0
        %1446 = vperm.xlu0 %1445, %v451
        %v1447 = vpop.permute.xlu0 %1446
        %1450 = vset.pattern.permute.xlu0 0
        %1451 = vperm.xlu0 %1450, %v452
        %v1452 = vpop.permute.xlu0 %1451
        %1455 = vset.pattern.permute.xlu0 0
        %1456 = vperm.xlu0 %1455, %v453
        %v1457 = vpop.permute.xlu0 %1456
        %1460 = vset.pattern.permute.xlu0 0
        %1461 = vperm.xlu0 %1460, %v454
        %v1462 = vpop.permute.xlu0 %1461
        %1465 = vset.pattern.permute.xlu0 0
        %1466 = vperm.xlu0 %1465, %v455
        %v1467 = vpop.permute.xlu0 %1466
        %1470 = vset.pattern.permute.xlu0 0
        %1471 = vperm.xlu0 %1470, %v456
        %v1472 = vpop.permute.xlu0 %1471
        %1475 = vset.pattern.permute.xlu0 0
        %1476 = vperm.xlu0 %1475, %v457
        %v1477 = vpop.permute.xlu0 %1476
        %1480 = vset.pattern.permute.xlu0 0
        %1481 = vperm.xlu0 %1480, %v458
        %v1482 = vpop.permute.xlu0 %1481
        %1485 = vset.pattern.permute.xlu0 0
        %1486 = vperm.xlu0 %1485, %v459
        %v1487 = vpop.permute.xlu0 %1486
        %1490 = vset.pattern.permute.xlu0 0
        %1491 = vperm.xlu0 %1490, %v460
        %v1492 = vpop.permute.xlu0 %1491
        %1495 = vset.pattern.permute.xlu0 0
        %1496 = vperm.xlu0 %1495, %v461
        %v1497 = vpop.permute.xlu0 %1496
        %1500 = vset.pattern.permute.xlu0 0
        %1501 = vperm.xlu0 %1500, %v462
        %v1502 = vpop.permute.xlu0 %1501
        %1505 = vset.pattern.permute.xlu0 0
        %1506 = vperm.xlu0 %1505, %v463
        %v1507 = vpop.permute.xlu0 %1506
        %1510 = vset.pattern.permute.xlu0 0
        %1511 = vperm.xlu0 %1510, %v464
        %v1512 = vpop.permute.xlu0 %1511
        %1515 = vset.pattern.permute.xlu0 0
        %1516 = vperm.xlu0 %1515, %v465
        %v1517 = vpop.permute.xlu0 %1516
        %1520 = vset.pattern.permute.xlu0 0
        %1521 = vperm.xlu0 %1520, %v466
        %v1522 = vpop.permute.xlu0 %1521
        %1525 = vset.pattern.permute.xlu0 0
        %1526 = vperm.xlu0 %1525, %v467
        %v1527 = vpop.permute.xlu0 %1526
        %1530 = vset.pattern.permute.xlu0 0
        %1531 = vperm.xlu0 %1530, %v468
        %v1532 = vpop.permute.xlu0 %1531
        %1535 = vset.pattern.permute.xlu0 0
        %1536 = vperm.xlu0 %1535, %v469
        %v1537 = vpop.permute.xlu0 %1536
        %1540 = vset.pattern.permute.xlu0 0
        %1541 = vperm.xlu0 %1540, %v470
        %v1542 = vpop.permute.xlu0 %1541
        %1545 = vset.pattern.permute.xlu0 0
        %1546 = vperm.xlu0 %1545, %v471
        %v1547 = vpop.permute.xlu0 %1546
        %1550 = vset.pattern.permute.xlu0 0
        %1551 = vperm.xlu0 %1550, %v472
        %v1552 = vpop.permute.xlu0 %1551
        %1555 = vset.pattern.permute.xlu0 0
        %1556 = vperm.xlu0 %1555, %v473
        %v1557 = vpop.permute.xlu0 %1556
        %1560 = vset.pattern.permute.xlu0 0
        %1561 = vperm.xlu0 %1560, %v474
        %v1562 = vpop.permute.xlu0 %1561
        %1565 = vset.pattern.permute.xlu0 0
        %1566 = vperm.xlu0 %1565, %v475
        %v1567 = vpop.permute.xlu0 %1566
        %1570 = vset.pattern.permute.xlu0 0
        %1571 = vperm.xlu0 %1570, %v476
        %v1572 = vpop.permute.xlu0 %1571
        %1575 = vset.pattern.permute.xlu0 0
        %1576 = vperm.xlu0 %1575, %v477
        %v1577 = vpop.permute.xlu0 %1576
        %1580 = vset.pattern.permute.xlu0 0
        %1581 = vperm.xlu0 %1580, %v478
        %v1582 = vpop.permute.xlu0 %1581
        %1585 = vset.pattern.permute.xlu0 0
        %1586 = vperm.xlu0 %1585, %v479
        %v1587 = vpop.permute.xlu0 %1586
        %1590 = vset.pattern.permute.xlu0 0
        %1591 = vperm.xlu0 %1590, %v480
        %v1592 = vpop.permute.xlu0 %1591
        %v1594 = vmul.f32 %v337, %v1317
        %v1595 = vmul.f32 %v338, %v1322
        %v1596 = vmul.f32 %v339, %v1327
        %v1597 = vmul.f32 %v340, %v1332
        %v1598 = vmul.f32 %v341, %v1337
        %v1599 = vmul.f32 %v342, %v1342
        %v1600 = vmul.f32 %v343, %v1347
        %v1601 = vmul.f32 %v344, %v1352
        %v1602 = vmul.f32 %v337, %v1357
        %v1603 = vmul.f32 %v338, %v1362
        %v1604 = vmul.f32 %v339, %v1367
        %v1605 = vmul.f32 %v340, %v1372
        %v1606 = vmul.f32 %v341, %v1377
        %v1607 = vmul.f32 %v342, %v1382
        %v1608 = vmul.f32 %v343, %v1387
        %v1609 = vmul.f32 %v344, %v1392
        %v1610 = vmul.f32 %v337, %v1397
        %v1611 = vmul.f32 %v338, %v1402
        %v1612 = vmul.f32 %v339, %v1407
        %v1613 = vmul.f32 %v340, %v1412
        %v1614 = vmul.f32 %v341, %v1417
        %v1615 = vmul.f32 %v342, %v1422
        %v1616 = vmul.f32 %v343, %v1427
        %v1617 = vmul.f32 %v344, %v1432
        %v1618 = vmul.f32 %v337, %v1437
        %v1619 = vmul.f32 %v338, %v1442
        %v1620 = vmul.f32 %v339, %v1447
        %v1621 = vmul.f32 %v340, %v1452
        %v1622 = vmul.f32 %v341, %v1457
        %v1623 = vmul.f32 %v342, %v1462
        %v1624 = vmul.f32 %v343, %v1467
        %v1625 = vmul.f32 %v344, %v1472
        %v1626 = vmul.f32 %v337, %v1477
        %v1627 = vmul.f32 %v338, %v1482
        %v1628 = vmul.f32 %v339, %v1487
        %v1629 = vmul.f32 %v340, %v1492
        %v1630 = vmul.f32 %v341, %v1497
        %v1631 = vmul.f32 %v342, %v1502
        %v1632 = vmul.f32 %v343, %v1507
        %v1633 = vmul.f32 %v344, %v1512
        %v1634 = vmul.f32 %v337, %v1517
        %v1635 = vmul.f32 %v338, %v1522
        %v1636 = vmul.f32 %v339, %v1527
        %v1637 = vmul.f32 %v340, %v1532
        %v1638 = vmul.f32 %v341, %v1537
        %v1639 = vmul.f32 %v342, %v1542
        %v1640 = vmul.f32 %v343, %v1547
        %v1641 = vmul.f32 %v344, %v1552
        %v1642 = vmul.f32 %v337, %v1557
        %v1643 = vmul.f32 %v338, %v1562
        %v1644 = vmul.f32 %v339, %v1567
        %v1645 = vmul.f32 %v340, %v1572
        %v1646 = vmul.f32 %v341, %v1577
        %v1647 = vmul.f32 %v342, %v1582
        %v1648 = vmul.f32 %v343, %v1587
        %v1649 = vmul.f32 %v344, %v1592
        %v1650 = vmax.f32 %v1594, %v1602
        %v1651 = vmax.f32 %v1650, %v1610
        %v1652 = vmax.f32 %v1651, %v1618
        %v1653 = vmax.f32 %v1652, %v1626
        %v1654 = vmax.f32 %v1653, %v1634
        %v1655 = vmax.f32 %v1654, %v1642
        %v1656 = vmax.f32 %v1595, %v1603
        %v1657 = vmax.f32 %v1656, %v1611
        %v1658 = vmax.f32 %v1657, %v1619
        %v1659 = vmax.f32 %v1658, %v1627
        %v1660 = vmax.f32 %v1659, %v1635
        %v1661 = vmax.f32 %v1660, %v1643
        %v1662 = vmax.f32 %v1596, %v1604
        %v1663 = vmax.f32 %v1662, %v1612
        %v1664 = vmax.f32 %v1663, %v1620
        %v1665 = vmax.f32 %v1664, %v1628
        %v1666 = vmax.f32 %v1665, %v1636
        %v1667 = vmax.f32 %v1666, %v1644
        %v1668 = vmax.f32 %v1597, %v1605
        %v1669 = vmax.f32 %v1668, %v1613
        %v1670 = vmax.f32 %v1669, %v1621
        %v1671 = vmax.f32 %v1670, %v1629
        %v1672 = vmax.f32 %v1671, %v1637
        %v1673 = vmax.f32 %v1672, %v1645
        %v1674 = vmax.f32 %v1598, %v1606
        %v1675 = vmax.f32 %v1674, %v1614
        %v1676 = vmax.f32 %v1675, %v1622
        %v1677 = vmax.f32 %v1676, %v1630
        %v1678 = vmax.f32 %v1677, %v1638
        %v1679 = vmax.f32 %v1678, %v1646
        %v1680 = vmax.f32 %v1599, %v1607
        %v1681 = vmax.f32 %v1680, %v1615
        %v1682 = vmax.f32 %v1681, %v1623
        %v1683 = vmax.f32 %v1682, %v1631
        %v1684 = vmax.f32 %v1683, %v1639
        %v1685 = vmax.f32 %v1684, %v1647
        %v1686 = vmax.f32 %v1600, %v1608
        %v1687 = vmax.f32 %v1686, %v1616
        %v1688 = vmax.f32 %v1687, %v1624
        %v1689 = vmax.f32 %v1688, %v1632
        %v1690 = vmax.f32 %v1689, %v1640
        %v1691 = vmax.f32 %v1690, %v1648
        %v1692 = vmax.f32 %v1601, %v1609
        %v1693 = vmax.f32 %v1692, %v1617
        %v1694 = vmax.f32 %v1693, %v1625
        %v1695 = vmax.f32 %v1694, %v1633
        %v1696 = vmax.f32 %v1695, %v1641
        %v1697 = vmax.f32 %v1696, %v1649
        %v1698 = vmax.f32 %v1306, %v1655
        %v1699 = vmax.f32 %v1307, %v1661
        %v1700 = vmax.f32 %v1308, %v1667
        %v1701 = vmax.f32 %v1309, %v1673
        %v1702 = vmax.f32 %v1310, %v1679
        %v1703 = vmax.f32 %v1311, %v1685
        %v1704 = vmax.f32 %v1312, %v1691
        %v1705 = vmax.f32 %v1313, %v1697
        %v1706 = vsub.f32 %v1306, %v1698
        %v1707 = vsub.f32 %v1307, %v1699
        %v1708 = vsub.f32 %v1308, %v1700
        %v1709 = vsub.f32 %v1309, %v1701
        %v1710 = vsub.f32 %v1310, %v1702
        %v1711 = vsub.f32 %v1311, %v1703
        %v1712 = vsub.f32 %v1312, %v1704
        %v1713 = vsub.f32 %v1313, %v1705
        %v1714 = vmul.f32 %v1706, 1.442695
        %v1715 = vpow.pop %v1714
        %v1716 = vmul.f32 %v1707, 1.442695
        %v1717 = vpow.pop %v1716
        %v1718 = vmul.f32 %v1708, 1.442695
        %v1719 = vpow.pop %v1718
        %v1720 = vmul.f32 %v1709, 1.442695
        %v1721 = vpow.pop %v1720
        %v1722 = vmul.f32 %v1710, 1.442695
        %v1723 = vpow.pop %v1722
        %v1724 = vmul.f32 %v1711, 1.442695
        %v1725 = vpow.pop %v1724
        %v1726 = vmul.f32 %v1712, 1.442695
        %v1727 = vpow.pop %v1726
        %v1728 = vmul.f32 %v1713, 1.442695
        %v1729 = vpow.pop %v1728
        %v1730 = vsub.f32 %v1594, %v1698
        %v1731 = vsub.f32 %v1595, %v1699
        %v1732 = vsub.f32 %v1596, %v1700
        %v1733 = vsub.f32 %v1597, %v1701
        %v1734 = vsub.f32 %v1598, %v1702
        %v1735 = vsub.f32 %v1599, %v1703
        %v1736 = vsub.f32 %v1600, %v1704
        %v1737 = vsub.f32 %v1601, %v1705
        %v1738 = vsub.f32 %v1602, %v1698
        %v1739 = vsub.f32 %v1603, %v1699
        %v1740 = vsub.f32 %v1604, %v1700
        %v1741 = vsub.f32 %v1605, %v1701
        %v1742 = vsub.f32 %v1606, %v1702
        %v1743 = vsub.f32 %v1607, %v1703
        %v1744 = vsub.f32 %v1608, %v1704
        %v1745 = vsub.f32 %v1609, %v1705
        %v1746 = vsub.f32 %v1610, %v1698
        %v1747 = vsub.f32 %v1611, %v1699
        %v1748 = vsub.f32 %v1612, %v1700
        %v1749 = vsub.f32 %v1613, %v1701
        %v1750 = vsub.f32 %v1614, %v1702
        %v1751 = vsub.f32 %v1615, %v1703
        %v1752 = vsub.f32 %v1616, %v1704
        %v1753 = vsub.f32 %v1617, %v1705
        %v1754 = vsub.f32 %v1618, %v1698
        %v1755 = vsub.f32 %v1619, %v1699
        %v1756 = vsub.f32 %v1620, %v1700
        %v1757 = vsub.f32 %v1621, %v1701
        %v1758 = vsub.f32 %v1622, %v1702
        %v1759 = vsub.f32 %v1623, %v1703
        %v1760 = vsub.f32 %v1624, %v1704
        %v1761 = vsub.f32 %v1625, %v1705
        %v1762 = vsub.f32 %v1626, %v1698
        %v1763 = vsub.f32 %v1627, %v1699
        %v1764 = vsub.f32 %v1628, %v1700
        %v1765 = vsub.f32 %v1629, %v1701
        %v1766 = vsub.f32 %v1630, %v1702
        %v1767 = vsub.f32 %v1631, %v1703
        %v1768 = vsub.f32 %v1632, %v1704
        %v1769 = vsub.f32 %v1633, %v1705
        %v1770 = vsub.f32 %v1634, %v1698
        %v1771 = vsub.f32 %v1635, %v1699
        %v1772 = vsub.f32 %v1636, %v1700
        %v1773 = vsub.f32 %v1637, %v1701
        %v1774 = vsub.f32 %v1638, %v1702
        %v1775 = vsub.f32 %v1639, %v1703
        %v1776 = vsub.f32 %v1640, %v1704
        %v1777 = vsub.f32 %v1641, %v1705
        %v1778 = vsub.f32 %v1642, %v1698
        %v1779 = vsub.f32 %v1643, %v1699
        %v1780 = vsub.f32 %v1644, %v1700
        %v1781 = vsub.f32 %v1645, %v1701
        %v1782 = vsub.f32 %v1646, %v1702
        %v1783 = vsub.f32 %v1647, %v1703
        %v1784 = vsub.f32 %v1648, %v1704
        %v1785 = vsub.f32 %v1649, %v1705
        %v1786 = vmul.f32 %v1730, 1.442695
        %v1787 = vpow.pop %v1786
        %v1788 = vmul.f32 %v1731, 1.442695
        %v1789 = vpow.pop %v1788
        %v1790 = vmul.f32 %v1732, 1.442695
        %v1791 = vpow.pop %v1790
        %v1792 = vmul.f32 %v1733, 1.442695
        %v1793 = vpow.pop %v1792
        %v1794 = vmul.f32 %v1734, 1.442695
        %v1795 = vpow.pop %v1794
        %v1796 = vmul.f32 %v1735, 1.442695
        %v1797 = vpow.pop %v1796
        %v1798 = vmul.f32 %v1736, 1.442695
        %v1799 = vpow.pop %v1798
        %v1800 = vmul.f32 %v1737, 1.442695
        %v1801 = vpow.pop %v1800
        %v1802 = vmul.f32 %v1738, 1.442695
        %v1803 = vpow.pop %v1802
        %v1804 = vmul.f32 %v1739, 1.442695
        %v1805 = vpow.pop %v1804
        %v1806 = vmul.f32 %v1740, 1.442695
        %v1807 = vpow.pop %v1806
        %v1808 = vmul.f32 %v1741, 1.442695
        %v1809 = vpow.pop %v1808
        %v1810 = vmul.f32 %v1742, 1.442695
        %v1811 = vpow.pop %v1810
        %v1812 = vmul.f32 %v1743, 1.442695
        %v1813 = vpow.pop %v1812
        %v1814 = vmul.f32 %v1744, 1.442695
        %v1815 = vpow.pop %v1814
        %v1816 = vmul.f32 %v1745, 1.442695
        %v1817 = vpow.pop %v1816
        %v1818 = vmul.f32 %v1746, 1.442695
        %v1819 = vpow.pop %v1818
        %v1820 = vmul.f32 %v1747, 1.442695
        %v1821 = vpow.pop %v1820
        %v1822 = vmul.f32 %v1748, 1.442695
        %v1823 = vpow.pop %v1822
        %v1824 = vmul.f32 %v1749, 1.442695
        %v1825 = vpow.pop %v1824
        %v1826 = vmul.f32 %v1750, 1.442695
        %v1827 = vpow.pop %v1826
        %v1828 = vmul.f32 %v1751, 1.442695
        %v1829 = vpow.pop %v1828
        %v1830 = vmul.f32 %v1752, 1.442695
        %v1831 = vpow.pop %v1830
        %v1832 = vmul.f32 %v1753, 1.442695
        %v1833 = vpow.pop %v1832
        %v1834 = vmul.f32 %v1754, 1.442695
        %v1835 = vpow.pop %v1834
        %v1836 = vmul.f32 %v1755, 1.442695
        %v1837 = vpow.pop %v1836
        %v1838 = vmul.f32 %v1756, 1.442695
        %v1839 = vpow.pop %v1838
        %v1840 = vmul.f32 %v1757, 1.442695
        %v1841 = vpow.pop %v1840
        %v1842 = vmul.f32 %v1758, 1.442695
        %v1843 = vpow.pop %v1842
        %v1844 = vmul.f32 %v1759, 1.442695
        %v1845 = vpow.pop %v1844
        %v1846 = vmul.f32 %v1760, 1.442695
        %v1847 = vpow.pop %v1846
        %v1848 = vmul.f32 %v1761, 1.442695
        %v1849 = vpow.pop %v1848
        %v1850 = vmul.f32 %v1762, 1.442695
        %v1851 = vpow.pop %v1850
        %v1852 = vmul.f32 %v1763, 1.442695
        %v1853 = vpow.pop %v1852
        %v1854 = vmul.f32 %v1764, 1.442695
        %v1855 = vpow.pop %v1854
        %v1856 = vmul.f32 %v1765, 1.442695
        %v1857 = vpow.pop %v1856
        %v1858 = vmul.f32 %v1766, 1.442695
        %v1859 = vpow.pop %v1858
        %v1860 = vmul.f32 %v1767, 1.442695
        %v1861 = vpow.pop %v1860
        %v1862 = vmul.f32 %v1768, 1.442695
        %v1863 = vpow.pop %v1862
        %v1864 = vmul.f32 %v1769, 1.442695
        %v1865 = vpow.pop %v1864
        %v1866 = vmul.f32 %v1770, 1.442695
        %v1867 = vpow.pop %v1866
        %v1868 = vmul.f32 %v1771, 1.442695
        %v1869 = vpow.pop %v1868
        %v1870 = vmul.f32 %v1772, 1.442695
        %v1871 = vpow.pop %v1870
        %v1872 = vmul.f32 %v1773, 1.442695
        %v1873 = vpow.pop %v1872
        %v1874 = vmul.f32 %v1774, 1.442695
        %v1875 = vpow.pop %v1874
        %v1876 = vmul.f32 %v1775, 1.442695
        %v1877 = vpow.pop %v1876
        %v1878 = vmul.f32 %v1776, 1.442695
        %v1879 = vpow.pop %v1878
        %v1880 = vmul.f32 %v1777, 1.442695
        %v1881 = vpow.pop %v1880
        %v1882 = vmul.f32 %v1778, 1.442695
        %v1883 = vpow.pop %v1882
        %v1884 = vmul.f32 %v1779, 1.442695
        %v1885 = vpow.pop %v1884
        %v1886 = vmul.f32 %v1780, 1.442695
        %v1887 = vpow.pop %v1886
        %v1888 = vmul.f32 %v1781, 1.442695
        %v1889 = vpow.pop %v1888
        %v1890 = vmul.f32 %v1782, 1.442695
        %v1891 = vpow.pop %v1890
        %v1892 = vmul.f32 %v1783, 1.442695
        %v1893 = vpow.pop %v1892
        %v1894 = vmul.f32 %v1784, 1.442695
        %v1895 = vpow.pop %v1894
        %v1896 = vmul.f32 %v1785, 1.442695
        %v1897 = vpow.pop %v1896
        %v1898 = vadd.f32 %v1787, %v1803
        %v1899 = vadd.f32 %v1898, %v1819
        %v1900 = vadd.f32 %v1899, %v1835
        %v1901 = vadd.f32 %v1900, %v1851
        %v1902 = vadd.f32 %v1901, %v1867
        %v1903 = vadd.f32 %v1902, %v1883
        %v1904 = vadd.f32 %v1789, %v1805
        %v1905 = vadd.f32 %v1904, %v1821
        %v1906 = vadd.f32 %v1905, %v1837
        %v1907 = vadd.f32 %v1906, %v1853
        %v1908 = vadd.f32 %v1907, %v1869
        %v1909 = vadd.f32 %v1908, %v1885
        %v1910 = vadd.f32 %v1791, %v1807
        %v1911 = vadd.f32 %v1910, %v1823
        %v1912 = vadd.f32 %v1911, %v1839
        %v1913 = vadd.f32 %v1912, %v1855
        %v1914 = vadd.f32 %v1913, %v1871
        %v1915 = vadd.f32 %v1914, %v1887
        %v1916 = vadd.f32 %v1793, %v1809
        %v1917 = vadd.f32 %v1916, %v1825
        %v1918 = vadd.f32 %v1917, %v1841
        %v1919 = vadd.f32 %v1918, %v1857
        %v1920 = vadd.f32 %v1919, %v1873
        %v1921 = vadd.f32 %v1920, %v1889
        %v1922 = vadd.f32 %v1795, %v1811
        %v1923 = vadd.f32 %v1922, %v1827
        %v1924 = vadd.f32 %v1923, %v1843
        %v1925 = vadd.f32 %v1924, %v1859
        %v1926 = vadd.f32 %v1925, %v1875
        %v1927 = vadd.f32 %v1926, %v1891
        %v1928 = vadd.f32 %v1797, %v1813
        %v1929 = vadd.f32 %v1928, %v1829
        %v1930 = vadd.f32 %v1929, %v1845
        %v1931 = vadd.f32 %v1930, %v1861
        %v1932 = vadd.f32 %v1931, %v1877
        %v1933 = vadd.f32 %v1932, %v1893
        %v1934 = vadd.f32 %v1799, %v1815
        %v1935 = vadd.f32 %v1934, %v1831
        %v1936 = vadd.f32 %v1935, %v1847
        %v1937 = vadd.f32 %v1936, %v1863
        %v1938 = vadd.f32 %v1937, %v1879
        %v1939 = vadd.f32 %v1938, %v1895
        %v1940 = vadd.f32 %v1801, %v1817
        %v1941 = vadd.f32 %v1940, %v1833
        %v1942 = vadd.f32 %v1941, %v1849
        %v1943 = vadd.f32 %v1942, %v1865
        %v1944 = vadd.f32 %v1943, %v1881
        %v1945 = vadd.f32 %v1944, %v1897
        %v1946 = vadd.f32 %v1715, %v1903
        %v1947 = vadd.f32 %v1717, %v1909
        %v1948 = vadd.f32 %v1719, %v1915
        %v1949 = vadd.f32 %v1721, %v1921
        %v1950 = vadd.f32 %v1723, %v1927
        %v1951 = vadd.f32 %v1725, %v1933
        %v1952 = vadd.f32 %v1727, %v1939
        %v1953 = vadd.f32 %v1729, %v1945
        %v1954 = vrcp.pop %v1946
        %v1955 = vrcp.pop %v1947
        %v1956 = vrcp.pop %v1948
        %v1957 = vrcp.pop %v1949
        %v1958 = vrcp.pop %v1950
        %v1959 = vrcp.pop %v1951
        %v1960 = vrcp.pop %v1952
        %v1961 = vrcp.pop %v1953
        %v1962 = vmul.f32 %v1715, %v1954
        %v1963 = vmul.f32 %v1717, %v1955
        %v1964 = vmul.f32 %v1719, %v1956
        %v1965 = vmul.f32 %v1721, %v1957
        %v1966 = vmul.f32 %v1723, %v1958
        %v1967 = vmul.f32 %v1725, %v1959
        %v1968 = vmul.f32 %v1727, %v1960
        %v1969 = vmul.f32 %v1729, %v1961
        %v1970 = vmul.f32 %v1787, %v1954
        %v1971 = vmul.f32 %v1789, %v1955
        %v1972 = vmul.f32 %v1791, %v1956
        %v1973 = vmul.f32 %v1793, %v1957
        %v1974 = vmul.f32 %v1795, %v1958
        %v1975 = vmul.f32 %v1797, %v1959
        %v1976 = vmul.f32 %v1799, %v1960
        %v1977 = vmul.f32 %v1801, %v1961
        %v1978 = vmul.f32 %v1803, %v1954
        %v1979 = vmul.f32 %v1805, %v1955
        %v1980 = vmul.f32 %v1807, %v1956
        %v1981 = vmul.f32 %v1809, %v1957
        %v1982 = vmul.f32 %v1811, %v1958
        %v1983 = vmul.f32 %v1813, %v1959
        %v1984 = vmul.f32 %v1815, %v1960
        %v1985 = vmul.f32 %v1817, %v1961
        %v1986 = vmul.f32 %v1819, %v1954
        %v1987 = vmul.f32 %v1821, %v1955
        %v1988 = vmul.f32 %v1823, %v1956
        %v1989 = vmul.f32 %v1825, %v1957
        %v1990 = vmul.f32 %v1827, %v1958
        %v1991 = vmul.f32 %v1829, %v1959
        %v1992 = vmul.f32 %v1831, %v1960
        %v1993 = vmul.f32 %v1833, %v1961
        %v1994 = vmul.f32 %v1835, %v1954
        %v1995 = vmul.f32 %v1837, %v1955
        %v1996 = vmul.f32 %v1839, %v1956
        %v1997 = vmul.f32 %v1841, %v1957
        %v1998 = vmul.f32 %v1843, %v1958
        %v1999 = vmul.f32 %v1845, %v1959
        %v2000 = vmul.f32 %v1847, %v1960
        %v2001 = vmul.f32 %v1849, %v1961
        %v2002 = vmul.f32 %v1851, %v1954
        %v2003 = vmul.f32 %v1853, %v1955
        %v2004 = vmul.f32 %v1855, %v1956
        %v2005 = vmul.f32 %v1857, %v1957
        %v2006 = vmul.f32 %v1859, %v1958
        %v2007 = vmul.f32 %v1861, %v1959
        %v2008 = vmul.f32 %v1863, %v1960
        %v2009 = vmul.f32 %v1865, %v1961
        %v2010 = vmul.f32 %v1867, %v1954
        %v2011 = vmul.f32 %v1869, %v1955
        %v2012 = vmul.f32 %v1871, %v1956
        %v2013 = vmul.f32 %v1873, %v1957
        %v2014 = vmul.f32 %v1875, %v1958
        %v2015 = vmul.f32 %v1877, %v1959
        %v2016 = vmul.f32 %v1879, %v1960
        %v2017 = vmul.f32 %v1881, %v1961
        %v2018 = vmul.f32 %v1883, %v1954
        %v2019 = vmul.f32 %v1885, %v1955
        %v2020 = vmul.f32 %v1887, %v1956
        %v2021 = vmul.f32 %v1889, %v1957
        %v2022 = vmul.f32 %v1891, %v1958
        %v2023 = vmul.f32 %v1893, %v1959
        %v2024 = vmul.f32 %v1895, %v1960
        %v2025 = vmul.f32 %v1897, %v1961
        %v2026 = vadd.f32 %v1970, %v1978
        %v2027 = vadd.f32 %v2026, %v1986
        %v2028 = vadd.f32 %v2027, %v1994
        %v2029 = vadd.f32 %v2028, %v2002
        %v2030 = vadd.f32 %v2029, %v2010
        %v2031 = vadd.f32 %v2030, %v2018
        %v2032 = vadd.f32 %v1971, %v1979
        %v2033 = vadd.f32 %v2032, %v1987
        %v2034 = vadd.f32 %v2033, %v1995
        %v2035 = vadd.f32 %v2034, %v2003
        %v2036 = vadd.f32 %v2035, %v2011
        %v2037 = vadd.f32 %v2036, %v2019
        %v2038 = vadd.f32 %v1972, %v1980
        %v2039 = vadd.f32 %v2038, %v1988
        %v2040 = vadd.f32 %v2039, %v1996
        %v2041 = vadd.f32 %v2040, %v2004
        %v2042 = vadd.f32 %v2041, %v2012
        %v2043 = vadd.f32 %v2042, %v2020
        %v2044 = vadd.f32 %v1973, %v1981
        %v2045 = vadd.f32 %v2044, %v1989
        %v2046 = vadd.f32 %v2045, %v1997
        %v2047 = vadd.f32 %v2046, %v2005
        %v2048 = vadd.f32 %v2047, %v2013
        %v2049 = vadd.f32 %v2048, %v2021
        %v2050 = vadd.f32 %v1974, %v1982
        %v2051 = vadd.f32 %v2050, %v1990
        %v2052 = vadd.f32 %v2051, %v1998
        %v2053 = vadd.f32 %v2052, %v2006
        %v2054 = vadd.f32 %v2053, %v2014
        %v2055 = vadd.f32 %v2054, %v2022
        %v2056 = vadd.f32 %v1975, %v1983
        %v2057 = vadd.f32 %v2056, %v1991
        %v2058 = vadd.f32 %v2057, %v1999
        %v2059 = vadd.f32 %v2058, %v2007
        %v2060 = vadd.f32 %v2059, %v2015
        %v2061 = vadd.f32 %v2060, %v2023
        %v2062 = vadd.f32 %v1976, %v1984
        %v2063 = vadd.f32 %v2062, %v1992
        %v2064 = vadd.f32 %v2063, %v2000
        %v2065 = vadd.f32 %v2064, %v2008
        %v2066 = vadd.f32 %v2065, %v2016
        %v2067 = vadd.f32 %v2066, %v2024
        %v2068 = vadd.f32 %v1977, %v1985
        %v2069 = vadd.f32 %v2068, %v1993
        %v2070 = vadd.f32 %v2069, %v2001
        %v2071 = vadd.f32 %v2070, %v2009
        %v2072 = vadd.f32 %v2071, %v2017
        %v2073 = vadd.f32 %v2072, %v2025
        %v2074 = vadd.f32 %v1962, %v2031
        %v2075 = vadd.f32 %v1963, %v2037
        %v2076 = vadd.f32 %v1964, %v2043
        %v2077 = vadd.f32 %v1965, %v2049
        %v2078 = vadd.f32 %v1966, %v2055
        %v2079 = vadd.f32 %v1967, %v2061
        %v2080 = vadd.f32 %v1968, %v2067
        %v2081 = vadd.f32 %v1969, %v2073
        %v2082 = vmul.f32 %v2074, 0.125
        %v2083 = vmul.f32 %v2075, 0.125
        %v2084 = vmul.f32 %v2076, 0.125
        %v2085 = vmul.f32 %v2077, 0.125
        %v2086 = vmul.f32 %v2078, 0.125
        %v2087 = vmul.f32 %v2079, 0.125
        %v2088 = vmul.f32 %v2080, 0.125
        %v2089 = vmul.f32 %v2081, 0.125
        %v2090 = vmul.f32 %v240, %v2082
        %v2091 = vmul.f32 %v241, %v2083
        %v2092 = vmul.f32 %v242, %v2084
        %v2093 = vmul.f32 %v243, %v2085
        %v2094 = vmul.f32 %v244, %v2086
        %v2095 = vmul.f32 %v245, %v2087
        %v2096 = vmul.f32 %v246, %v2088
        %v2097 = vmul.f32 %v247, %v2089
        %2098 = vst [vmem:[%s198] sm:$0xff] %v2090
        %2099 = vst [vmem:[%s198 + $0x8] sm:$0xff] %v2091
        %2100 = vst [vmem:[%s198 + $0x10] sm:$0xff] %v2092
        %2101 = vst [vmem:[%s198 + $0x18] sm:$0xff] %v2093
        %2102 = vst [vmem:[%s198 + $0x20] sm:$0xff] %v2094
        %2103 = vst [vmem:[%s198 + $0x28] sm:$0xff] %v2095
        %2104 = vst [vmem:[%s198 + $0x30] sm:$0xff] %v2096
        %2105 = vst [vmem:[%s198 + $0x38] sm:$0xff] %v2097
        %v2106 = vmul.f32 %v249, %v2082
        %v2107 = vmul.f32 %v250, %v2083
        %v2108 = vmul.f32 %v251, %v2084
        %v2109 = vmul.f32 %v252, %v2085
        %v2110 = vmul.f32 %v253, %v2086
        %v2111 = vmul.f32 %v254, %v2087
        %v2112 = vmul.f32 %v255, %v2088
        %v2113 = vmul.f32 %v256, %v2089
        %2114 = vst [vmem:[%s203] sm:$0xff] %v2106
        %2115 = vst [vmem:[%s203 + $0x8] sm:$0xff] %v2107
        %2116 = vst [vmem:[%s203 + $0x10] sm:$0xff] %v2108
        %2117 = vst [vmem:[%s203 + $0x18] sm:$0xff] %v2109
        %2118 = vst [vmem:[%s203 + $0x20] sm:$0xff] %v2110
        %2119 = vst [vmem:[%s203 + $0x28] sm:$0xff] %v2111
        %2120 = vst [vmem:[%s203 + $0x30] sm:$0xff] %v2112
        %2121 = vst [vmem:[%s203 + $0x38] sm:$0xff] %v2113
      $region36: #{attention_forward_pallas.5} parent=27 // pred_fallthru
        _
      %p2122 = scmp.lt.s32.totalorder %s15, 1
      %s2123 = scalar_select %p2122, %s15, 1
      %s2124 = smul.addr %s2123, 8
      %s2125 = smul.addr %s2124, 8
      %s2126 = scalar_lea.vmem %s2, %s2125
      %p2127 = scmp.lt.s32.totalorder %s15, 1
      %s2128 = scalar_select %p2127, %s15, 1
      %s2129 = smul.addr %s2128, 8
      %s2130 = smul.addr %s2129, 8
      %s2131 = scalar_lea.vmem %s3, %s2130
      // Predicated region
      $region37: #{attention_forward_pallas.5} parent=27 // pred_check
        %p2132 = pneg %p85
      $region38: #{attention_forward_pallas.5} parent=27 // pred_check_branch
        %2134 = sbr.rel (%p2132) target = $region40
      $region39: #{attention_forward_pallas.5} parent=27 // pred_region
        _
      $region40: #{attention_forward_pallas.5} parent=27 // pred_fallthru
        _
      // Predicated region
      $region41: #{attention_forward_pallas.5} parent=27 // pred_check
        %p2135 = pneg %p111
      $region42: #{attention_forward_pallas.5} parent=27 // pred_check_branch
        %2137 = sbr.rel (%p2135) target = $region44
      $region43: #{attention_forward_pallas.5} parent=27 // pred_region
        _
      $region44: #{attention_forward_pallas.5} parent=27 // pred_fallthru
        _
    $region28: #{attention_forward_pallas.5} parent=5 // pred_fallthru
      _
    %p2138 = scmp.le.s32.totalorder 2, %s10
    // Predicated region
    $region45: #{attention_forward_pallas.5} parent=5 // pred_check
      %p2139 = pneg %p2138
    $region46: #{attention_forward_pallas.5} parent=5 // pred_check_branch
      %2141 = sbr.rel (%p2139) target = $region48
    $region47: #{attention_forward_pallas.5} parent=5 // pred_region
      %s2142 = ssub.s32 %s10, 2
      // Predicated region
      $region49: #{attention_forward_pallas.5} parent=47 // pred_check
        %p2143 = pneg %p91
      $region50: #{attention_forward_pallas.5} parent=47 // pred_check_branch
        %2145 = sbr.rel (%p2143) target = $region52
      $region51: #{attention_forward_pallas.5} parent=47 // pred_region
        %p2146 = scmp.lt.s32.totalorder %s16, 1
        %s2147 = scalar_select %p2146, %s16, 1
        %s2148 = smul.addr %s2147, 8
        %s2149 = smul.addr %s2148, 8
        %s2150 = scalar_lea.vmem %s2, %s2149
      $region52: #{attention_forward_pallas.5} parent=47 // pred_fallthru
        _
      // Predicated region
      $region53: #{attention_forward_pallas.5} parent=47 // pred_check
        %p2151 = pneg %p117
      $region54: #{attention_forward_pallas.5} parent=47 // pred_check_branch
        %2153 = sbr.rel (%p2151) target = $region56
      $region55: #{attention_forward_pallas.5} parent=47 // pred_region
        %p2154 = scmp.lt.s32.totalorder %s16, 1
        %s2155 = scalar_select %p2154, %s16, 1
        %s2156 = smul.addr %s2155, 8
        %s2157 = smul.addr %s2156, 8
        %s2158 = scalar_lea.vmem %s3, %s2157
      $region56: #{attention_forward_pallas.5} parent=47 // pred_fallthru
        _
    $region48: #{attention_forward_pallas.5} parent=5 // pred_fallthru
      _
  $region6: #{attention_forward_pallas.5} parent=0 // loop_footer
    %s14 = sadd.s32 1, %s10
  $region7: #{attention_forward_pallas.5} parent=0 // loop_footer_branch
    %9 = sbr.rel target = $region3
  $region8: #{attention_forward_pallas.5} parent=0 // loop_exit
    _

// kernel: reverse.6
$region0: #{reverse.6}
  %s0 = inlined_call_operand.vmem [shape: f32[2,16,4,8,7], index: 0, kind: input, shape index: {}]
  %s1 = inlined_call_operand.vmem [shape: f32[2,16,4,8,7], index: 1, kind: output, shape index: {}]
  %v2 = vlaneseq
  %v3 = vsub.s32 6, %v2
  %4 = vset.pattern.permute.xlu0 %v3
  $region1: #{reverse.6} parent=0
    #allocation0 [shape = 'u8[524288]{0}', space=vmem, size = 0x80000, scoped, tag = 'operand span for operand 0']
    #allocation1 [shape = 'u8[524288]{0}', space=vmem, size = 0x80000, scoped, tag = 'operand span for operand 1']
    // Predicated region
    $region2: #{reverse.6} parent=1 // pred_check
      _
    $region3: #{reverse.6} parent=1 // pred_check_branch
      %6 = sbr.rel (0) target = $region5
    $region4: #{reverse.6} parent=1 // pred_region
      // Predicated region
      $region6: #{reverse.6} parent=4 // pred_check
        _
      $region7: #{reverse.6} parent=4 // pred_check_branch
        %8 = sbr.rel (0) target = $region9
      $region8: #{reverse.6} parent=4 // pred_region
        // Predicated region
        $region21: #{reverse.6} parent=8 // pred_check
          _
        $region22: #{reverse.6} parent=8 // pred_check_branch
          %277 = sbr.rel (0) target = $region24
        $region23: #{reverse.6} parent=8 // pred_region
          loop: start=0, step=1, limit=1
          $region25: #{reverse.6} parent=23 // loop_pre_header
            _
          $region26: #{reverse.6} parent=23 // loop_header
            %s279 = sphi 0, %s283
            %p280 = scmp.ge.s32.totalorder %s279, 1
            %s284 = sphi %s0, %s0
            %s285 = sphi [#allocation0], [#allocation0]
          $region27: #{reverse.6} parent=23 // loop_header_branch
            %282 = sbr.rel (%p280) target = $region31
          $region28: #{reverse.6} parent=23 // loop_body
            %v286 = vld [vmem:[%s284] sm:$0xff]
            %287 = vst [vmem:[%s285] sm:$0xff] %v286
            %v288 = vld [vmem:[%s284 + $0x8] sm:$0xff]
            %289 = vst [vmem:[%s285 + $0x8] sm:$0xff] %v288
            %v290 = vld [vmem:[%s284 + $0x10] sm:$0xff]
            %291 = vst [vmem:[%s285 + $0x10] sm:$0xff] %v290
            %v292 = vld [vmem:[%s284 + $0x18] sm:$0xff]
            %293 = vst [vmem:[%s285 + $0x18] sm:$0xff] %v292
            %v294 = vld [vmem:[%s284 + $0x20] sm:$0xff]
            %295 = vst [vmem:[%s285 + $0x20] sm:$0xff] %v294
            %v296 = vld [vmem:[%s284 + $0x28] sm:$0xff]
            %297 = vst [vmem:[%s285 + $0x28] sm:$0xff] %v296
            %v298 = vld [vmem:[%s284 + $0x30] sm:$0xff]
            %299 = vst [vmem:[%s285 + $0x30] sm:$0xff] %v298
            %v300 = vld [vmem:[%s284 + $0x38] sm:$0xff]
            %301 = vst [vmem:[%s285 + $0x38] sm:$0xff] %v300
            %v302 = vld [vmem:[%s284 + $0x40] sm:$0xff]
            %303 = vst [vmem:[%s285 + $0x40] sm:$0xff] %v302
            %v304 = vld [vmem:[%s284 + $0x48] sm:$0xff]
            %305 = vst [vmem:[%s285 + $0x48] sm:$0xff] %v304
            %v306 = vld [vmem:[%s284 + $0x50] sm:$0xff]
            %307 = vst [vmem:[%s285 + $0x50] sm:$0xff] %v306
            %v308 = vld [vmem:[%s284 + $0x58] sm:$0xff]
            %309 = vst [vmem:[%s285 + $0x58] sm:$0xff] %v308
            %v310 = vld [vmem:[%s284 + $0x60] sm:$0xff]
            %311 = vst [vmem:[%s285 + $0x60] sm:$0xff] %v310
            %v312 = vld [vmem:[%s284 + $0x68] sm:$0xff]
            %313 = vst [vmem:[%s285 + $0x68] sm:$0xff] %v312
            %v314 = vld [vmem:[%s284 + $0x70] sm:$0xff]
            %315 = vst [vmem:[%s285 + $0x70] sm:$0xff] %v314
            %v316 = vld [vmem:[%s284 + $0x78] sm:$0xff]
            %317 = vst [vmem:[%s285 + $0x78] sm:$0xff] %v316
            %v318 = vld [vmem:[%s284 + $0x80] sm:$0xff]
            %319 = vst [vmem:[%s285 + $0x80] sm:$0xff] %v318
            %v320 = vld [vmem:[%s284 + $0x88] sm:$0xff]
            %321 = vst [vmem:[%s285 + $0x88] sm:$0xff] %v320
            %v322 = vld [vmem:[%s284 + $0x90] sm:$0xff]
            %323 = vst [vmem:[%s285 + $0x90] sm:$0xff] %v322
            %v324 = vld [vmem:[%s284 + $0x98] sm:$0xff]
            %325 = vst [vmem:[%s285 + $0x98] sm:$0xff] %v324
            %v326 = vld [vmem:[%s284 + $0xa0] sm:$0xff]
            %327 = vst [vmem:[%s285 + $0xa0] sm:$0xff] %v326
            %v328 = vld [vmem:[%s284 + $0xa8] sm:$0xff]
            %329 = vst [vmem:[%s285 + $0xa8] sm:$0xff] %v328
            %v330 = vld [vmem:[%s284 + $0xb0] sm:$0xff]
            %331 = vst [vmem:[%s285 + $0xb0] sm:$0xff] %v330
            %v332 = vld [vmem:[%s284 + $0xb8] sm:$0xff]
            %333 = vst [vmem:[%s285 + $0xb8] sm:$0xff] %v332
            %v334 = vld [vmem:[%s284 + $0xc0] sm:$0xff]
            %335 = vst [vmem:[%s285 + $0xc0] sm:$0xff] %v334
            %v336 = vld [vmem:[%s284 + $0xc8] sm:$0xff]
            %337 = vst [vmem:[%s285 + $0xc8] sm:$0xff] %v336
            %v338 = vld [vmem:[%s284 + $0xd0] sm:$0xff]
            %339 = vst [vmem:[%s285 + $0xd0] sm:$0xff] %v338
            %v340 = vld [vmem:[%s284 + $0xd8] sm:$0xff]
            %341 = vst [vmem:[%s285 + $0xd8] sm:$0xff] %v340
            %v342 = vld [vmem:[%s284 + $0xe0] sm:$0xff]
            %343 = vst [vmem:[%s285 + $0xe0] sm:$0xff] %v342
            %v344 = vld [vmem:[%s284 + $0xe8] sm:$0xff]
            %345 = vst [vmem:[%s285 + $0xe8] sm:$0xff] %v344
            %v346 = vld [vmem:[%s284 + $0xf0] sm:$0xff]
            %347 = vst [vmem:[%s285 + $0xf0] sm:$0xff] %v346
            %v348 = vld [vmem:[%s284 + $0xf8] sm:$0xff]
            %349 = vst [vmem:[%s285 + $0xf8] sm:$0xff] %v348
            %v350 = vld [vmem:[%s284 + $0x100] sm:$0xff]
            %351 = vst [vmem:[%s285 + $0x100] sm:$0xff] %v350
            %v352 = vld [vmem:[%s284 + $0x108] sm:$0xff]
            %353 = vst [vmem:[%s285 + $0x108] sm:$0xff] %v352
            %v354 = vld [vmem:[%s284 + $0x110] sm:$0xff]
            %355 = vst [vmem:[%s285 + $0x110] sm:$0xff] %v354
            %v356 = vld [vmem:[%s284 + $0x118] sm:$0xff]
            %357 = vst [vmem:[%s285 + $0x118] sm:$0xff] %v356
            %v358 = vld [vmem:[%s284 + $0x120] sm:$0xff]
            %359 = vst [vmem:[%s285 + $0x120] sm:$0xff] %v358
            %v360 = vld [vmem:[%s284 + $0x128] sm:$0xff]
            %361 = vst [vmem:[%s285 + $0x128] sm:$0xff] %v360
            %v362 = vld [vmem:[%s284 + $0x130] sm:$0xff]
            %363 = vst [vmem:[%s285 + $0x130] sm:$0xff] %v362
            %v364 = vld [vmem:[%s284 + $0x138] sm:$0xff]
            %365 = vst [vmem:[%s285 + $0x138] sm:$0xff] %v364
            %v366 = vld [vmem:[%s284 + $0x140] sm:$0xff]
            %367 = vst [vmem:[%s285 + $0x140] sm:$0xff] %v366
            %v368 = vld [vmem:[%s284 + $0x148] sm:$0xff]
            %369 = vst [vmem:[%s285 + $0x148] sm:$0xff] %v368
            %v370 = vld [vmem:[%s284 + $0x150] sm:$0xff]
            %371 = vst [vmem:[%s285 + $0x150] sm:$0xff] %v370
            %v372 = vld [vmem:[%s284 + $0x158] sm:$0xff]
            %373 = vst [vmem:[%s285 + $0x158] sm:$0xff] %v372
            %v374 = vld [vmem:[%s284 + $0x160] sm:$0xff]
            %375 = vst [vmem:[%s285 + $0x160] sm:$0xff] %v374
            %v376 = vld [vmem:[%s284 + $0x168] sm:$0xff]
            %377 = vst [vmem:[%s285 + $0x168] sm:$0xff] %v376
            %v378 = vld [vmem:[%s284 + $0x170] sm:$0xff]
            %379 = vst [vmem:[%s285 + $0x170] sm:$0xff] %v378
            %v380 = vld [vmem:[%s284 + $0x178] sm:$0xff]
            %381 = vst [vmem:[%s285 + $0x178] sm:$0xff] %v380
            %v382 = vld [vmem:[%s284 + $0x180] sm:$0xff]
            %383 = vst [vmem:[%s285 + $0x180] sm:$0xff] %v382
            %v384 = vld [vmem:[%s284 + $0x188] sm:$0xff]
            %385 = vst [vmem:[%s285 + $0x188] sm:$0xff] %v384
            %v386 = vld [vmem:[%s284 + $0x190] sm:$0xff]
            %387 = vst [vmem:[%s285 + $0x190] sm:$0xff] %v386
            %v388 = vld [vmem:[%s284 + $0x198] sm:$0xff]
            %389 = vst [vmem:[%s285 + $0x198] sm:$0xff] %v388
            %v390 = vld [vmem:[%s284 + $0x1a0] sm:$0xff]
            %391 = vst [vmem:[%s285 + $0x1a0] sm:$0xff] %v390
            %v392 = vld [vmem:[%s284 + $0x1a8] sm:$0xff]
            %393 = vst [vmem:[%s285 + $0x1a8] sm:$0xff] %v392
            %v394 = vld [vmem:[%s284 + $0x1b0] sm:$0xff]
            %395 = vst [vmem:[%s285 + $0x1b0] sm:$0xff] %v394
            %v396 = vld [vmem:[%s284 + $0x1b8] sm:$0xff]
            %397 = vst [vmem:[%s285 + $0x1b8] sm:$0xff] %v396
            %v398 = vld [vmem:[%s284 + $0x1c0] sm:$0xff]
            %399 = vst [vmem:[%s285 + $0x1c0] sm:$0xff] %v398
            %v400 = vld [vmem:[%s284 + $0x1c8] sm:$0xff]
            %401 = vst [vmem:[%s285 + $0x1c8] sm:$0xff] %v400
            %v402 = vld [vmem:[%s284 + $0x1d0] sm:$0xff]
            %403 = vst [vmem:[%s285 + $0x1d0] sm:$0xff] %v402
            %v404 = vld [vmem:[%s284 + $0x1d8] sm:$0xff]
            %405 = vst [vmem:[%s285 + $0x1d8] sm:$0xff] %v404
            %v406 = vld [vmem:[%s284 + $0x1e0] sm:$0xff]
            %407 = vst [vmem:[%s285 + $0x1e0] sm:$0xff] %v406
            %v408 = vld [vmem:[%s284 + $0x1e8] sm:$0xff]
            %409 = vst [vmem:[%s285 + $0x1e8] sm:$0xff] %v408
            %v410 = vld [vmem:[%s284 + $0x1f0] sm:$0xff]
            %411 = vst [vmem:[%s285 + $0x1f0] sm:$0xff] %v410
            %v412 = vld [vmem:[%s284 + $0x1f8] sm:$0xff]
            %413 = vst [vmem:[%s285 + $0x1f8] sm:$0xff] %v412
            %v414 = vld [vmem:[%s284 + $0x200] sm:$0xff]
            %415 = vst [vmem:[%s285 + $0x200] sm:$0xff] %v414
            %v416 = vld [vmem:[%s284 + $0x208] sm:$0xff]
            %417 = vst [vmem:[%s285 + $0x208] sm:$0xff] %v416
            %v418 = vld [vmem:[%s284 + $0x210] sm:$0xff]
            %419 = vst [vmem:[%s285 + $0x210] sm:$0xff] %v418
            %v420 = vld [vmem:[%s284 + $0x218] sm:$0xff]
            %421 = vst [vmem:[%s285 + $0x218] sm:$0xff] %v420
            %v422 = vld [vmem:[%s284 + $0x220] sm:$0xff]
            %423 = vst [vmem:[%s285 + $0x220] sm:$0xff] %v422
            %v424 = vld [vmem:[%s284 + $0x228] sm:$0xff]
            %425 = vst [vmem:[%s285 + $0x228] sm:$0xff] %v424
            %v426 = vld [vmem:[%s284 + $0x230] sm:$0xff]
            %427 = vst [vmem:[%s285 + $0x230] sm:$0xff] %v426
            %v428 = vld [vmem:[%s284 + $0x238] sm:$0xff]
            %429 = vst [vmem:[%s285 + $0x238] sm:$0xff] %v428
            %v430 = vld [vmem:[%s284 + $0x240] sm:$0xff]
            %431 = vst [vmem:[%s285 + $0x240] sm:$0xff] %v430
            %v432 = vld [vmem:[%s284 + $0x248] sm:$0xff]
            %433 = vst [vmem:[%s285 + $0x248] sm:$0xff] %v432
            %v434 = vld [vmem:[%s284 + $0x250] sm:$0xff]
            %435 = vst [vmem:[%s285 + $0x250] sm:$0xff] %v434
            %v436 = vld [vmem:[%s284 + $0x258] sm:$0xff]
            %437 = vst [vmem:[%s285 + $0x258] sm:$0xff] %v436
            %v438 = vld [vmem:[%s284 + $0x260] sm:$0xff]
            %439 = vst [vmem:[%s285 + $0x260] sm:$0xff] %v438
            %v440 = vld [vmem:[%s284 + $0x268] sm:$0xff]
            %441 = vst [vmem:[%s285 + $0x268] sm:$0xff] %v440
            %v442 = vld [vmem:[%s284 + $0x270] sm:$0xff]
            %443 = vst [vmem:[%s285 + $0x270] sm:$0xff] %v442
            %v444 = vld [vmem:[%s284 + $0x278] sm:$0xff]
            %445 = vst [vmem:[%s285 + $0x278] sm:$0xff] %v444
            %v446 = vld [vmem:[%s284 + $0x280] sm:$0xff]
            %447 = vst [vmem:[%s285 + $0x280] sm:$0xff] %v446
            %v448 = vld [vmem:[%s284 + $0x288] sm:$0xff]
            %449 = vst [vmem:[%s285 + $0x288] sm:$0xff] %v448
            %v450 = vld [vmem:[%s284 + $0x290] sm:$0xff]
            %451 = vst [vmem:[%s285 + $0x290] sm:$0xff] %v450
            %v452 = vld [vmem:[%s284 + $0x298] sm:$0xff]
            %453 = vst [vmem:[%s285 + $0x298] sm:$0xff] %v452
            %v454 = vld [vmem:[%s284 + $0x2a0] sm:$0xff]
            %455 = vst [vmem:[%s285 + $0x2a0] sm:$0xff] %v454
            %v456 = vld [vmem:[%s284 + $0x2a8] sm:$0xff]
            %457 = vst [vmem:[%s285 + $0x2a8] sm:$0xff] %v456
            %v458 = vld [vmem:[%s284 + $0x2b0] sm:$0xff]
            %459 = vst [vmem:[%s285 + $0x2b0] sm:$0xff] %v458
            %v460 = vld [vmem:[%s284 + $0x2b8] sm:$0xff]
            %461 = vst [vmem:[%s285 + $0x2b8] sm:$0xff] %v460
            %v462 = vld [vmem:[%s284 + $0x2c0] sm:$0xff]
            %463 = vst [vmem:[%s285 + $0x2c0] sm:$0xff] %v462
            %v464 = vld [vmem:[%s284 + $0x2c8] sm:$0xff]
            %465 = vst [vmem:[%s285 + $0x2c8] sm:$0xff] %v464
            %v466 = vld [vmem:[%s284 + $0x2d0] sm:$0xff]
            %467 = vst [vmem:[%s285 + $0x2d0] sm:$0xff] %v466
            %v468 = vld [vmem:[%s284 + $0x2d8] sm:$0xff]
            %469 = vst [vmem:[%s285 + $0x2d8] sm:$0xff] %v468
            %v470 = vld [vmem:[%s284 + $0x2e0] sm:$0xff]
            %471 = vst [vmem:[%s285 + $0x2e0] sm:$0xff] %v470
            %v472 = vld [vmem:[%s284 + $0x2e8] sm:$0xff]
            %473 = vst [vmem:[%s285 + $0x2e8] sm:$0xff] %v472
            %v474 = vld [vmem:[%s284 + $0x2f0] sm:$0xff]
            %475 = vst [vmem:[%s285 + $0x2f0] sm:$0xff] %v474
            %v476 = vld [vmem:[%s284 + $0x2f8] sm:$0xff]
            %477 = vst [vmem:[%s285 + $0x2f8] sm:$0xff] %v476
            %v478 = vld [vmem:[%s284 + $0x300] sm:$0xff]
            %479 = vst [vmem:[%s285 + $0x300] sm:$0xff] %v478
            %v480 = vld [vmem:[%s284 + $0x308] sm:$0xff]
            %481 = vst [vmem:[%s285 + $0x308] sm:$0xff] %v480
            %v482 = vld [vmem:[%s284 + $0x310] sm:$0xff]
            %483 = vst [vmem:[%s285 + $0x310] sm:$0xff] %v482
            %v484 = vld [vmem:[%s284 + $0x318] sm:$0xff]
            %485 = vst [vmem:[%s285 + $0x318] sm:$0xff] %v484
            %v486 = vld [vmem:[%s284 + $0x320] sm:$0xff]
            %487 = vst [vmem:[%s285 + $0x320] sm:$0xff] %v486
            %v488 = vld [vmem:[%s284 + $0x328] sm:$0xff]
            %489 = vst [vmem:[%s285 + $0x328] sm:$0xff] %v488
            %v490 = vld [vmem:[%s284 + $0x330] sm:$0xff]
            %491 = vst [vmem:[%s285 + $0x330] sm:$0xff] %v490
            %v492 = vld [vmem:[%s284 + $0x338] sm:$0xff]
            %493 = vst [vmem:[%s285 + $0x338] sm:$0xff] %v492
            %v494 = vld [vmem:[%s284 + $0x340] sm:$0xff]
            %495 = vst [vmem:[%s285 + $0x340] sm:$0xff] %v494
            %v496 = vld [vmem:[%s284 + $0x348] sm:$0xff]
            %497 = vst [vmem:[%s285 + $0x348] sm:$0xff] %v496
            %v498 = vld [vmem:[%s284 + $0x350] sm:$0xff]
            %499 = vst [vmem:[%s285 + $0x350] sm:$0xff] %v498
            %v500 = vld [vmem:[%s284 + $0x358] sm:$0xff]
            %501 = vst [vmem:[%s285 + $0x358] sm:$0xff] %v500
            %v502 = vld [vmem:[%s284 + $0x360] sm:$0xff]
            %503 = vst [vmem:[%s285 + $0x360] sm:$0xff] %v502
            %v504 = vld [vmem:[%s284 + $0x368] sm:$0xff]
            %505 = vst [vmem:[%s285 + $0x368] sm:$0xff] %v504
            %v506 = vld [vmem:[%s284 + $0x370] sm:$0xff]
            %507 = vst [vmem:[%s285 + $0x370] sm:$0xff] %v506
            %v508 = vld [vmem:[%s284 + $0x378] sm:$0xff]
            %509 = vst [vmem:[%s285 + $0x378] sm:$0xff] %v508
            %v510 = vld [vmem:[%s284 + $0x380] sm:$0xff]
            %511 = vst [vmem:[%s285 + $0x380] sm:$0xff] %v510
            %v512 = vld [vmem:[%s284 + $0x388] sm:$0xff]
            %513 = vst [vmem:[%s285 + $0x388] sm:$0xff] %v512
            %v514 = vld [vmem:[%s284 + $0x390] sm:$0xff]
            %515 = vst [vmem:[%s285 + $0x390] sm:$0xff] %v514
            %v516 = vld [vmem:[%s284 + $0x398] sm:$0xff]
            %517 = vst [vmem:[%s285 + $0x398] sm:$0xff] %v516
            %v518 = vld [vmem:[%s284 + $0x3a0] sm:$0xff]
            %519 = vst [vmem:[%s285 + $0x3a0] sm:$0xff] %v518
            %v520 = vld [vmem:[%s284 + $0x3a8] sm:$0xff]
            %521 = vst [vmem:[%s285 + $0x3a8] sm:$0xff] %v520
            %v522 = vld [vmem:[%s284 + $0x3b0] sm:$0xff]
            %523 = vst [vmem:[%s285 + $0x3b0] sm:$0xff] %v522
            %v524 = vld [vmem:[%s284 + $0x3b8] sm:$0xff]
            %525 = vst [vmem:[%s285 + $0x3b8] sm:$0xff] %v524
            %v526 = vld [vmem:[%s284 + $0x3c0] sm:$0xff]
            %527 = vst [vmem:[%s285 + $0x3c0] sm:$0xff] %v526
            %v528 = vld [vmem:[%s284 + $0x3c8] sm:$0xff]
            %529 = vst [vmem:[%s285 + $0x3c8] sm:$0xff] %v528
            %v530 = vld [vmem:[%s284 + $0x3d0] sm:$0xff]
            %531 = vst [vmem:[%s285 + $0x3d0] sm:$0xff] %v530
            %v532 = vld [vmem:[%s284 + $0x3d8] sm:$0xff]
            %533 = vst [vmem:[%s285 + $0x3d8] sm:$0xff] %v532
            %v534 = vld [vmem:[%s284 + $0x3e0] sm:$0xff]
            %535 = vst [vmem:[%s285 + $0x3e0] sm:$0xff] %v534
            %v536 = vld [vmem:[%s284 + $0x3e8] sm:$0xff]
            %537 = vst [vmem:[%s285 + $0x3e8] sm:$0xff] %v536
            %v538 = vld [vmem:[%s284 + $0x3f0] sm:$0xff]
            %539 = vst [vmem:[%s285 + $0x3f0] sm:$0xff] %v538
            %v540 = vld [vmem:[%s284 + $0x3f8] sm:$0xff]
            %541 = vst [vmem:[%s285 + $0x3f8] sm:$0xff] %v540
          $region29: #{reverse.6} parent=23 // loop_footer
            %s283 = sadd.s32 1, %s279
          $region30: #{reverse.6} parent=23 // loop_footer_branch
            %278 = sbr.rel target = $region26
          $region31: #{reverse.6} parent=23 // loop_exit
            _
        $region24: #{reverse.6} parent=8 // pred_fallthru
          _
        // Predicated region
        $region32: #{reverse.6} parent=8 // pred_check
          _
        $region33: #{reverse.6} parent=8 // pred_check_branch
          %543 = sbr.rel target = $region35
        $region34: #{reverse.6} parent=8 // pred_region
          _
        $region35: #{reverse.6} parent=8 // pred_fallthru
          _
      $region9: #{reverse.6} parent=4 // pred_fallthru
        _
      // Predicated region
      $region10: #{reverse.6} parent=4 // pred_check
        _
      $region11: #{reverse.6} parent=4 // pred_check_branch
        %10 = sbr.rel target = $region13
      $region12: #{reverse.6} parent=4 // pred_region
        loop: start=0, step=1, limit=1
        $region14: #{reverse.6} parent=12 // loop_pre_header
          _
        $region15: #{reverse.6} parent=12 // loop_header
          %s13 = sphi 0, %s17
          %p14 = scmp.ge.s32.totalorder %s13, 1
          %s18 = sphi %s0, %s0
          %s19 = sphi [#allocation0], [#allocation0]
        $region16: #{reverse.6} parent=12 // loop_header_branch
          %16 = sbr.rel (%p14) target = $region20
        $region17: #{reverse.6} parent=12 // loop_body
          %v20 = vld [vmem:[%s18] sm:$0xff]
          %21 = vst [vmem:[%s19] sm:$0xff] %v20
          %v22 = vld [vmem:[%s18 + $0x8] sm:$0xff]
          %23 = vst [vmem:[%s19 + $0x8] sm:$0xff] %v22
          %v24 = vld [vmem:[%s18 + $0x10] sm:$0xff]
          %25 = vst [vmem:[%s19 + $0x10] sm:$0xff] %v24
          %v26 = vld [vmem:[%s18 + $0x18] sm:$0xff]
          %27 = vst [vmem:[%s19 + $0x18] sm:$0xff] %v26
          %v28 = vld [vmem:[%s18 + $0x20] sm:$0xff]
          %29 = vst [vmem:[%s19 + $0x20] sm:$0xff] %v28
          %v30 = vld [vmem:[%s18 + $0x28] sm:$0xff]
          %31 = vst [vmem:[%s19 + $0x28] sm:$0xff] %v30
          %v32 = vld [vmem:[%s18 + $0x30] sm:$0xff]
          %33 = vst [vmem:[%s19 + $0x30] sm:$0xff] %v32
          %v34 = vld [vmem:[%s18 + $0x38] sm:$0xff]
          %35 = vst [vmem:[%s19 + $0x38] sm:$0xff] %v34
          %v36 = vld [vmem:[%s18 + $0x40] sm:$0xff]
          %37 = vst [vmem:[%s19 + $0x40] sm:$0xff] %v36
          %v38 = vld [vmem:[%s18 + $0x48] sm:$0xff]
          %39 = vst [vmem:[%s19 + $0x48] sm:$0xff] %v38
          %v40 = vld [vmem:[%s18 + $0x50] sm:$0xff]
          %41 = vst [vmem:[%s19 + $0x50] sm:$0xff] %v40
          %v42 = vld [vmem:[%s18 + $0x58] sm:$0xff]
          %43 = vst [vmem:[%s19 + $0x58] sm:$0xff] %v42
          %v44 = vld [vmem:[%s18 + $0x60] sm:$0xff]
          %45 = vst [vmem:[%s19 + $0x60] sm:$0xff] %v44
          %v46 = vld [vmem:[%s18 + $0x68] sm:$0xff]
          %47 = vst [vmem:[%s19 + $0x68] sm:$0xff] %v46
          %v48 = vld [vmem:[%s18 + $0x70] sm:$0xff]
          %49 = vst [vmem:[%s19 + $0x70] sm:$0xff] %v48
          %v50 = vld [vmem:[%s18 + $0x78] sm:$0xff]
          %51 = vst [vmem:[%s19 + $0x78] sm:$0xff] %v50
          %v52 = vld [vmem:[%s18 + $0x80] sm:$0xff]
          %53 = vst [vmem:[%s19 + $0x80] sm:$0xff] %v52
          %v54 = vld [vmem:[%s18 + $0x88] sm:$0xff]
          %55 = vst [vmem:[%s19 + $0x88] sm:$0xff] %v54
          %v56 = vld [vmem:[%s18 + $0x90] sm:$0xff]
          %57 = vst [vmem:[%s19 + $0x90] sm:$0xff] %v56
          %v58 = vld [vmem:[%s18 + $0x98] sm:$0xff]
          %59 = vst [vmem:[%s19 + $0x98] sm:$0xff] %v58
          %v60 = vld [vmem:[%s18 + $0xa0] sm:$0xff]
          %61 = vst [vmem:[%s19 + $0xa0] sm:$0xff] %v60
          %v62 = vld [vmem:[%s18 + $0xa8] sm:$0xff]
          %63 = vst [vmem:[%s19 + $0xa8] sm:$0xff] %v62
          %v64 = vld [vmem:[%s18 + $0xb0] sm:$0xff]
          %65 = vst [vmem:[%s19 + $0xb0] sm:$0xff] %v64
          %v66 = vld [vmem:[%s18 + $0xb8] sm:$0xff]
          %67 = vst [vmem:[%s19 + $0xb8] sm:$0xff] %v66
          %v68 = vld [vmem:[%s18 + $0xc0] sm:$0xff]
          %69 = vst [vmem:[%s19 + $0xc0] sm:$0xff] %v68
          %v70 = vld [vmem:[%s18 + $0xc8] sm:$0xff]
          %71 = vst [vmem:[%s19 + $0xc8] sm:$0xff] %v70
          %v72 = vld [vmem:[%s18 + $0xd0] sm:$0xff]
          %73 = vst [vmem:[%s19 + $0xd0] sm:$0xff] %v72
          %v74 = vld [vmem:[%s18 + $0xd8] sm:$0xff]
          %75 = vst [vmem:[%s19 + $0xd8] sm:$0xff] %v74
          %v76 = vld [vmem:[%s18 + $0xe0] sm:$0xff]
          %77 = vst [vmem:[%s19 + $0xe0] sm:$0xff] %v76
          %v78 = vld [vmem:[%s18 + $0xe8] sm:$0xff]
          %79 = vst [vmem:[%s19 + $0xe8] sm:$0xff] %v78
          %v80 = vld [vmem:[%s18 + $0xf0] sm:$0xff]
          %81 = vst [vmem:[%s19 + $0xf0] sm:$0xff] %v80
          %v82 = vld [vmem:[%s18 + $0xf8] sm:$0xff]
          %83 = vst [vmem:[%s19 + $0xf8] sm:$0xff] %v82
          %v84 = vld [vmem:[%s18 + $0x100] sm:$0xff]
          %85 = vst [vmem:[%s19 + $0x100] sm:$0xff] %v84
          %v86 = vld [vmem:[%s18 + $0x108] sm:$0xff]
          %87 = vst [vmem:[%s19 + $0x108] sm:$0xff] %v86
          %v88 = vld [vmem:[%s18 + $0x110] sm:$0xff]
          %89 = vst [vmem:[%s19 + $0x110] sm:$0xff] %v88
          %v90 = vld [vmem:[%s18 + $0x118] sm:$0xff]
          %91 = vst [vmem:[%s19 + $0x118] sm:$0xff] %v90
          %v92 = vld [vmem:[%s18 + $0x120] sm:$0xff]
          %93 = vst [vmem:[%s19 + $0x120] sm:$0xff] %v92
          %v94 = vld [vmem:[%s18 + $0x128] sm:$0xff]
          %95 = vst [vmem:[%s19 + $0x128] sm:$0xff] %v94
          %v96 = vld [vmem:[%s18 + $0x130] sm:$0xff]
          %97 = vst [vmem:[%s19 + $0x130] sm:$0xff] %v96
          %v98 = vld [vmem:[%s18 + $0x138] sm:$0xff]
          %99 = vst [vmem:[%s19 + $0x138] sm:$0xff] %v98
          %v100 = vld [vmem:[%s18 + $0x140] sm:$0xff]
          %101 = vst [vmem:[%s19 + $0x140] sm:$0xff] %v100
          %v102 = vld [vmem:[%s18 + $0x148] sm:$0xff]
          %103 = vst [vmem:[%s19 + $0x148] sm:$0xff] %v102
          %v104 = vld [vmem:[%s18 + $0x150] sm:$0xff]
          %105 = vst [vmem:[%s19 + $0x150] sm:$0xff] %v104
          %v106 = vld [vmem:[%s18 + $0x158] sm:$0xff]
          %107 = vst [vmem:[%s19 + $0x158] sm:$0xff] %v106
          %v108 = vld [vmem:[%s18 + $0x160] sm:$0xff]
          %109 = vst [vmem:[%s19 + $0x160] sm:$0xff] %v108
          %v110 = vld [vmem:[%s18 + $0x168] sm:$0xff]
          %111 = vst [vmem:[%s19 + $0x168] sm:$0xff] %v110
          %v112 = vld [vmem:[%s18 + $0x170] sm:$0xff]
          %113 = vst [vmem:[%s19 + $0x170] sm:$0xff] %v112
          %v114 = vld [vmem:[%s18 + $0x178] sm:$0xff]
          %115 = vst [vmem:[%s19 + $0x178] sm:$0xff] %v114
          %v116 = vld [vmem:[%s18 + $0x180] sm:$0xff]
          %117 = vst [vmem:[%s19 + $0x180] sm:$0xff] %v116
          %v118 = vld [vmem:[%s18 + $0x188] sm:$0xff]
          %119 = vst [vmem:[%s19 + $0x188] sm:$0xff] %v118
          %v120 = vld [vmem:[%s18 + $0x190] sm:$0xff]
          %121 = vst [vmem:[%s19 + $0x190] sm:$0xff] %v120
          %v122 = vld [vmem:[%s18 + $0x198] sm:$0xff]
          %123 = vst [vmem:[%s19 + $0x198] sm:$0xff] %v122
          %v124 = vld [vmem:[%s18 + $0x1a0] sm:$0xff]
          %125 = vst [vmem:[%s19 + $0x1a0] sm:$0xff] %v124
          %v126 = vld [vmem:[%s18 + $0x1a8] sm:$0xff]
          %127 = vst [vmem:[%s19 + $0x1a8] sm:$0xff] %v126
          %v128 = vld [vmem:[%s18 + $0x1b0] sm:$0xff]
          %129 = vst [vmem:[%s19 + $0x1b0] sm:$0xff] %v128
          %v130 = vld [vmem:[%s18 + $0x1b8] sm:$0xff]
          %131 = vst [vmem:[%s19 + $0x1b8] sm:$0xff] %v130
          %v132 = vld [vmem:[%s18 + $0x1c0] sm:$0xff]
          %133 = vst [vmem:[%s19 + $0x1c0] sm:$0xff] %v132
          %v134 = vld [vmem:[%s18 + $0x1c8] sm:$0xff]
          %135 = vst [vmem:[%s19 + $0x1c8] sm:$0xff] %v134
          %v136 = vld [vmem:[%s18 + $0x1d0] sm:$0xff]
          %137 = vst [vmem:[%s19 + $0x1d0] sm:$0xff] %v136
          %v138 = vld [vmem:[%s18 + $0x1d8] sm:$0xff]
          %139 = vst [vmem:[%s19 + $0x1d8] sm:$0xff] %v138
          %v140 = vld [vmem:[%s18 + $0x1e0] sm:$0xff]
          %141 = vst [vmem:[%s19 + $0x1e0] sm:$0xff] %v140
          %v142 = vld [vmem:[%s18 + $0x1e8] sm:$0xff]
          %143 = vst [vmem:[%s19 + $0x1e8] sm:$0xff] %v142
          %v144 = vld [vmem:[%s18 + $0x1f0] sm:$0xff]
          %145 = vst [vmem:[%s19 + $0x1f0] sm:$0xff] %v144
          %v146 = vld [vmem:[%s18 + $0x1f8] sm:$0xff]
          %147 = vst [vmem:[%s19 + $0x1f8] sm:$0xff] %v146
          %v148 = vld [vmem:[%s18 + $0x200] sm:$0xff]
          %149 = vst [vmem:[%s19 + $0x200] sm:$0xff] %v148
          %v150 = vld [vmem:[%s18 + $0x208] sm:$0xff]
          %151 = vst [vmem:[%s19 + $0x208] sm:$0xff] %v150
          %v152 = vld [vmem:[%s18 + $0x210] sm:$0xff]
          %153 = vst [vmem:[%s19 + $0x210] sm:$0xff] %v152
          %v154 = vld [vmem:[%s18 + $0x218] sm:$0xff]
          %155 = vst [vmem:[%s19 + $0x218] sm:$0xff] %v154
          %v156 = vld [vmem:[%s18 + $0x220] sm:$0xff]
          %157 = vst [vmem:[%s19 + $0x220] sm:$0xff] %v156
          %v158 = vld [vmem:[%s18 + $0x228] sm:$0xff]
          %159 = vst [vmem:[%s19 + $0x228] sm:$0xff] %v158
          %v160 = vld [vmem:[%s18 + $0x230] sm:$0xff]
          %161 = vst [vmem:[%s19 + $0x230] sm:$0xff] %v160
          %v162 = vld [vmem:[%s18 + $0x238] sm:$0xff]
          %163 = vst [vmem:[%s19 + $0x238] sm:$0xff] %v162
          %v164 = vld [vmem:[%s18 + $0x240] sm:$0xff]
          %165 = vst [vmem:[%s19 + $0x240] sm:$0xff] %v164
          %v166 = vld [vmem:[%s18 + $0x248] sm:$0xff]
          %167 = vst [vmem:[%s19 + $0x248] sm:$0xff] %v166
          %v168 = vld [vmem:[%s18 + $0x250] sm:$0xff]
          %169 = vst [vmem:[%s19 + $0x250] sm:$0xff] %v168
          %v170 = vld [vmem:[%s18 + $0x258] sm:$0xff]
          %171 = vst [vmem:[%s19 + $0x258] sm:$0xff] %v170
          %v172 = vld [vmem:[%s18 + $0x260] sm:$0xff]
          %173 = vst [vmem:[%s19 + $0x260] sm:$0xff] %v172
          %v174 = vld [vmem:[%s18 + $0x268] sm:$0xff]
          %175 = vst [vmem:[%s19 + $0x268] sm:$0xff] %v174
          %v176 = vld [vmem:[%s18 + $0x270] sm:$0xff]
          %177 = vst [vmem:[%s19 + $0x270] sm:$0xff] %v176
          %v178 = vld [vmem:[%s18 + $0x278] sm:$0xff]
          %179 = vst [vmem:[%s19 + $0x278] sm:$0xff] %v178
          %v180 = vld [vmem:[%s18 + $0x280] sm:$0xff]
          %181 = vst [vmem:[%s19 + $0x280] sm:$0xff] %v180
          %v182 = vld [vmem:[%s18 + $0x288] sm:$0xff]
          %183 = vst [vmem:[%s19 + $0x288] sm:$0xff] %v182
          %v184 = vld [vmem:[%s18 + $0x290] sm:$0xff]
          %185 = vst [vmem:[%s19 + $0x290] sm:$0xff] %v184
          %v186 = vld [vmem:[%s18 + $0x298] sm:$0xff]
          %187 = vst [vmem:[%s19 + $0x298] sm:$0xff] %v186
          %v188 = vld [vmem:[%s18 + $0x2a0] sm:$0xff]
          %189 = vst [vmem:[%s19 + $0x2a0] sm:$0xff] %v188
          %v190 = vld [vmem:[%s18 + $0x2a8] sm:$0xff]
          %191 = vst [vmem:[%s19 + $0x2a8] sm:$0xff] %v190
          %v192 = vld [vmem:[%s18 + $0x2b0] sm:$0xff]
          %193 = vst [vmem:[%s19 + $0x2b0] sm:$0xff] %v192
          %v194 = vld [vmem:[%s18 + $0x2b8] sm:$0xff]
          %195 = vst [vmem:[%s19 + $0x2b8] sm:$0xff] %v194
          %v196 = vld [vmem:[%s18 + $0x2c0] sm:$0xff]
          %197 = vst [vmem:[%s19 + $0x2c0] sm:$0xff] %v196
          %v198 = vld [vmem:[%s18 + $0x2c8] sm:$0xff]
          %199 = vst [vmem:[%s19 + $0x2c8] sm:$0xff] %v198
          %v200 = vld [vmem:[%s18 + $0x2d0] sm:$0xff]
          %201 = vst [vmem:[%s19 + $0x2d0] sm:$0xff] %v200
          %v202 = vld [vmem:[%s18 + $0x2d8] sm:$0xff]
          %203 = vst [vmem:[%s19 + $0x2d8] sm:$0xff] %v202
          %v204 = vld [vmem:[%s18 + $0x2e0] sm:$0xff]
          %205 = vst [vmem:[%s19 + $0x2e0] sm:$0xff] %v204
          %v206 = vld [vmem:[%s18 + $0x2e8] sm:$0xff]
          %207 = vst [vmem:[%s19 + $0x2e8] sm:$0xff] %v206
          %v208 = vld [vmem:[%s18 + $0x2f0] sm:$0xff]
          %209 = vst [vmem:[%s19 + $0x2f0] sm:$0xff] %v208
          %v210 = vld [vmem:[%s18 + $0x2f8] sm:$0xff]
          %211 = vst [vmem:[%s19 + $0x2f8] sm:$0xff] %v210
          %v212 = vld [vmem:[%s18 + $0x300] sm:$0xff]
          %213 = vst [vmem:[%s19 + $0x300] sm:$0xff] %v212
          %v214 = vld [vmem:[%s18 + $0x308] sm:$0xff]
          %215 = vst [vmem:[%s19 + $0x308] sm:$0xff] %v214
          %v216 = vld [vmem:[%s18 + $0x310] sm:$0xff]
          %217 = vst [vmem:[%s19 + $0x310] sm:$0xff] %v216
          %v218 = vld [vmem:[%s18 + $0x318] sm:$0xff]
          %219 = vst [vmem:[%s19 + $0x318] sm:$0xff] %v218
          %v220 = vld [vmem:[%s18 + $0x320] sm:$0xff]
          %221 = vst [vmem:[%s19 + $0x320] sm:$0xff] %v220
          %v222 = vld [vmem:[%s18 + $0x328] sm:$0xff]
          %223 = vst [vmem:[%s19 + $0x328] sm:$0xff] %v222
          %v224 = vld [vmem:[%s18 + $0x330] sm:$0xff]
          %225 = vst [vmem:[%s19 + $0x330] sm:$0xff] %v224
          %v226 = vld [vmem:[%s18 + $0x338] sm:$0xff]
          %227 = vst [vmem:[%s19 + $0x338] sm:$0xff] %v226
          %v228 = vld [vmem:[%s18 + $0x340] sm:$0xff]
          %229 = vst [vmem:[%s19 + $0x340] sm:$0xff] %v228
          %v230 = vld [vmem:[%s18 + $0x348] sm:$0xff]
          %231 = vst [vmem:[%s19 + $0x348] sm:$0xff] %v230
          %v232 = vld [vmem:[%s18 + $0x350] sm:$0xff]
          %233 = vst [vmem:[%s19 + $0x350] sm:$0xff] %v232
          %v234 = vld [vmem:[%s18 + $0x358] sm:$0xff]
          %235 = vst [vmem:[%s19 + $0x358] sm:$0xff] %v234
          %v236 = vld [vmem:[%s18 + $0x360] sm:$0xff]
          %237 = vst [vmem:[%s19 + $0x360] sm:$0xff] %v236
          %v238 = vld [vmem:[%s18 + $0x368] sm:$0xff]
          %239 = vst [vmem:[%s19 + $0x368] sm:$0xff] %v238
          %v240 = vld [vmem:[%s18 + $0x370] sm:$0xff]
          %241 = vst [vmem:[%s19 + $0x370] sm:$0xff] %v240
          %v242 = vld [vmem:[%s18 + $0x378] sm:$0xff]
          %243 = vst [vmem:[%s19 + $0x378] sm:$0xff] %v242
          %v244 = vld [vmem:[%s18 + $0x380] sm:$0xff]
          %245 = vst [vmem:[%s19 + $0x380] sm:$0xff] %v244
          %v246 = vld [vmem:[%s18 + $0x388] sm:$0xff]
          %247 = vst [vmem:[%s19 + $0x388] sm:$0xff] %v246
          %v248 = vld [vmem:[%s18 + $0x390] sm:$0xff]
          %249 = vst [vmem:[%s19 + $0x390] sm:$0xff] %v248
          %v250 = vld [vmem:[%s18 + $0x398] sm:$0xff]
          %251 = vst [vmem:[%s19 + $0x398] sm:$0xff] %v250
          %v252 = vld [vmem:[%s18 + $0x3a0] sm:$0xff]
          %253 = vst [vmem:[%s19 + $0x3a0] sm:$0xff] %v252
          %v254 = vld [vmem:[%s18 + $0x3a8] sm:$0xff]
          %255 = vst [vmem:[%s19 + $0x3a8] sm:$0xff] %v254
          %v256 = vld [vmem:[%s18 + $0x3b0] sm:$0xff]
          %257 = vst [vmem:[%s19 + $0x3b0] sm:$0xff] %v256
          %v258 = vld [vmem:[%s18 + $0x3b8] sm:$0xff]
          %259 = vst [vmem:[%s19 + $0x3b8] sm:$0xff] %v258
          %v260 = vld [vmem:[%s18 + $0x3c0] sm:$0xff]
          %261 = vst [vmem:[%s19 + $0x3c0] sm:$0xff] %v260
          %v262 = vld [vmem:[%s18 + $0x3c8] sm:$0xff]
          %263 = vst [vmem:[%s19 + $0x3c8] sm:$0xff] %v262
          %v264 = vld [vmem:[%s18 + $0x3d0] sm:$0xff]
          %265 = vst [vmem:[%s19 + $0x3d0] sm:$0xff] %v264
          %v266 = vld [vmem:[%s18 + $0x3d8] sm:$0xff]
          %267 = vst [vmem:[%s19 + $0x3d8] sm:$0xff] %v266
          %v268 = vld [vmem:[%s18 + $0x3e0] sm:$0xff]
          %269 = vst [vmem:[%s19 + $0x3e0] sm:$0xff] %v268
          %v270 = vld [vmem:[%s18 + $0x3e8] sm:$0xff]
          %271 = vst [vmem:[%s19 + $0x3e8] sm:$0xff] %v270
          %v272 = vld [vmem:[%s18 + $0x3f0] sm:$0xff]
          %273 = vst [vmem:[%s19 + $0x3f0] sm:$0xff] %v272
          %v274 = vld [vmem:[%s18 + $0x3f8] sm:$0xff]
          %275 = vst [vmem:[%s19 + $0x3f8] sm:$0xff] %v274
        $region18: #{reverse.6} parent=12 // loop_footer
          %s17 = sadd.s32 1, %s13
        $region19: #{reverse.6} parent=12 // loop_footer_branch
          %12 = sbr.rel target = $region15
        $region20: #{reverse.6} parent=12 // loop_exit
          _
      $region13: #{reverse.6} parent=4 // pred_fallthru
        _
    $region5: #{reverse.6} parent=1 // pred_fallthru
      _
    %544 = vnop
    %v545 = vld [vmem:[#allocation0] sm:$0xff]
    %546 = vperm.xlu0 %4, %v545
    %v547 = vpop.permute.xlu0 %546
    %548 = vst [vmem:[#allocation1] sm:$0xff] %v547
    %s549 = scalar_lea.vmem [#allocation1], 8
    %s550 = scalar_lea.vmem [#allocation0], 8
    %v551 = vld [vmem:[%s550] sm:$0xff]
    %552 = vperm.xlu0 %4, %v551
    %v553 = vpop.permute.xlu0 %552
    %554 = vst [vmem:[%s549] sm:$0xff] %v553
    %s555 = scalar_lea.vmem [#allocation1], 16
    %s556 = scalar_lea.vmem [#allocation0], 16
    %v557 = vld [vmem:[%s556] sm:$0xff]
    %558 = vperm.xlu0 %4, %v557
    %v559 = vpop.permute.xlu0 %558
    %560 = vst [vmem:[%s555] sm:$0xff] %v559
    %s561 = scalar_lea.vmem %s555, 8 [#allocation1]
    %s562 = scalar_lea.vmem %s556, 8 [#allocation0]
    %v563 = vld [vmem:[%s562] sm:$0xff]
    %564 = vperm.xlu0 %4, %v563
    %v565 = vpop.permute.xlu0 %564
    %566 = vst [vmem:[%s561] sm:$0xff] %v565
    %s567 = scalar_lea.vmem [#allocation1], 32
    %s568 = scalar_lea.vmem [#allocation0], 32
    %v569 = vld [vmem:[%s568] sm:$0xff]
    %570 = vperm.xlu0 %4, %v569
    %v571 = vpop.permute.xlu0 %570
    %572 = vst [vmem:[%s567] sm:$0xff] %v571
    %s573 = scalar_lea.vmem %s567, 8 [#allocation1]
    %s574 = scalar_lea.vmem %s568, 8 [#allocation0]
    %v575 = vld [vmem:[%s574] sm:$0xff]
    %576 = vperm.xlu0 %4, %v575
    %v577 = vpop.permute.xlu0 %576
    %578 = vst [vmem:[%s573] sm:$0xff] %v577
    %s579 = scalar_lea.vmem [#allocation1], 48
    %s580 = scalar_lea.vmem [#allocation0], 48
    %v581 = vld [vmem:[%s580] sm:$0xff]
    %582 = vperm.xlu0 %4, %v581
    %v583 = vpop.permute.xlu0 %582
    %584 = vst [vmem:[%s579] sm:$0xff] %v583
    %s585 = scalar_lea.vmem %s579, 8 [#allocation1]
    %s586 = scalar_lea.vmem %s580, 8 [#allocation0]
    %v587 = vld [vmem:[%s586] sm:$0xff]
    %588 = vperm.xlu0 %4, %v587
    %v589 = vpop.permute.xlu0 %588
    %590 = vst [vmem:[%s585] sm:$0xff] %v589
    %s591 = scalar_lea.vmem [#allocation1], 64
    %s592 = scalar_lea.vmem [#allocation0], 64
    %v593 = vld [vmem:[%s592] sm:$0xff]
    %594 = vperm.xlu0 %4, %v593
    %v595 = vpop.permute.xlu0 %594
    %596 = vst [vmem:[%s591] sm:$0xff] %v595
    %s597 = scalar_lea.vmem %s591, 8 [#allocation1]
    %s598 = scalar_lea.vmem %s592, 8 [#allocation0]
    %v599 = vld [vmem:[%s598] sm:$0xff]
    %600 = vperm.xlu0 %4, %v599
    %v601 = vpop.permute.xlu0 %600
    %602 = vst [vmem:[%s597] sm:$0xff] %v601
    %s603 = scalar_lea.vmem [#allocation1], 80
    %s604 = scalar_lea.vmem [#allocation0], 80
    %v605 = vld [vmem:[%s604] sm:$0xff]
    %606 = vperm.xlu0 %4, %v605
    %v607 = vpop.permute.xlu0 %606
    %608 = vst [vmem:[%s603] sm:$0xff] %v607
    %s609 = scalar_lea.vmem %s603, 8 [#allocation1]
    %s610 = scalar_lea.vmem %s604, 8 [#allocation0]
    %v611 = vld [vmem:[%s610] sm:$0xff]
    %612 = vperm.xlu0 %4, %v611
    %v613 = vpop.permute.xlu0 %612
    %614 = vst [vmem:[%s609] sm:$0xff] %v613
    %s615 = scalar_lea.vmem [#allocation1], 96
    %s616 = scalar_lea.vmem [#allocation0], 96
    %v617 = vld [vmem:[%s616] sm:$0xff]
    %618 = vperm.xlu0 %4, %v617
    %v619 = vpop.permute.xlu0 %618
    %620 = vst [vmem:[%s615] sm:$0xff] %v619
    %s621 = scalar_lea.vmem %s615, 8 [#allocation1]
    %s622 = scalar_lea.vmem %s616, 8 [#allocation0]
    %v623 = vld [vmem:[%s622] sm:$0xff]
    %624 = vperm.xlu0 %4, %v623
    %v625 = vpop.permute.xlu0 %624
    %626 = vst [vmem:[%s621] sm:$0xff] %v625
    %s627 = scalar_lea.vmem [#allocation1], 112
    %s628 = scalar_lea.vmem [#allocation0], 112
    %v629 = vld [vmem:[%s628] sm:$0xff]
    %630 = vperm.xlu0 %4, %v629
    %v631 = vpop.permute.xlu0 %630
    %632 = vst [vmem:[%s627] sm:$0xff] %v631
    %s633 = scalar_lea.vmem %s627, 8 [#allocation1]
    %s634 = scalar_lea.vmem %s628, 8 [#allocation0]
    %v635 = vld [vmem:[%s634] sm:$0xff]
    %636 = vperm.xlu0 %4, %v635
    %v637 = vpop.permute.xlu0 %636
    %638 = vst [vmem:[%s633] sm:$0xff] %v637
    %s639 = scalar_lea.vmem [#allocation1], 128
    %s640 = scalar_lea.vmem [#allocation0], 128
    %v641 = vld [vmem:[%s640] sm:$0xff]
    %642 = vperm.xlu0 %4, %v641
    %v643 = vpop.permute.xlu0 %642
    %644 = vst [vmem:[%s639] sm:$0xff] %v643
    %s645 = scalar_lea.vmem %s639, 8 [#allocation1]
    %s646 = scalar_lea.vmem %s640, 8 [#allocation0]
    %v647 = vld [vmem:[%s646] sm:$0xff]
    %648 = vperm.xlu0 %4, %v647
    %v649 = vpop.permute.xlu0 %648
    %650 = vst [vmem:[%s645] sm:$0xff] %v649
    %s651 = scalar_lea.vmem [#allocation1], 144
    %s652 = scalar_lea.vmem [#allocation0], 144
    %v653 = vld [vmem:[%s652] sm:$0xff]
    %654 = vperm.xlu0 %4, %v653
    %v655 = vpop.permute.xlu0 %654
    %656 = vst [vmem:[%s651] sm:$0xff] %v655
    %s657 = scalar_lea.vmem %s651, 8 [#allocation1]
    %s658 = scalar_lea.vmem %s652, 8 [#allocation0]
    %v659 = vld [vmem:[%s658] sm:$0xff]
    %660 = vperm.xlu0 %4, %v659
    %v661 = vpop.permute.xlu0 %660
    %662 = vst [vmem:[%s657] sm:$0xff] %v661
    %s663 = scalar_lea.vmem [#allocation1], 160
    %s664 = scalar_lea.vmem [#allocation0], 160
    %v665 = vld [vmem:[%s664] sm:$0xff]
    %666 = vperm.xlu0 %4, %v665
    %v667 = vpop.permute.xlu0 %666
    %668 = vst [vmem:[%s663] sm:$0xff] %v667
    %s669 = scalar_lea.vmem %s663, 8 [#allocation1]
    %s670 = scalar_lea.vmem %s664, 8 [#allocation0]
    %v671 = vld [vmem:[%s670] sm:$0xff]
    %672 = vperm.xlu0 %4, %v671
    %v673 = vpop.permute.xlu0 %672
    %674 = vst [vmem:[%s669] sm:$0xff] %v673
    %s675 = scalar_lea.vmem [#allocation1], 176
    %s676 = scalar_lea.vmem [#allocation0], 176
    %v677 = vld [vmem:[%s676] sm:$0xff]
    %678 = vperm.xlu0 %4, %v677
    %v679 = vpop.permute.xlu0 %678
    %680 = vst [vmem:[%s675] sm:$0xff] %v679
    %s681 = scalar_lea.vmem %s675, 8 [#allocation1]
    %s682 = scalar_lea.vmem %s676, 8 [#allocation0]
    %v683 = vld [vmem:[%s682] sm:$0xff]
    %684 = vperm.xlu0 %4, %v683
    %v685 = vpop.permute.xlu0 %684
    %686 = vst [vmem:[%s681] sm:$0xff] %v685
    %s687 = scalar_lea.vmem [#allocation1], 192
    %s688 = scalar_lea.vmem [#allocation0], 192
    %v689 = vld [vmem:[%s688] sm:$0xff]
    %690 = vperm.xlu0 %4, %v689
    %v691 = vpop.permute.xlu0 %690
    %692 = vst [vmem:[%s687] sm:$0xff] %v691
    %s693 = scalar_lea.vmem %s687, 8 [#allocation1]
    %s694 = scalar_lea.vmem %s688, 8 [#allocation0]
    %v695 = vld [vmem:[%s694] sm:$0xff]
    %696 = vperm.xlu0 %4, %v695
    %v697 = vpop.permute.xlu0 %696
    %698 = vst [vmem:[%s693] sm:$0xff] %v697
    %s699 = scalar_lea.vmem [#allocation1], 208
    %s700 = scalar_lea.vmem [#allocation0], 208
    %v701 = vld [vmem:[%s700] sm:$0xff]
    %702 = vperm.xlu0 %4, %v701
    %v703 = vpop.permute.xlu0 %702
    %704 = vst [vmem:[%s699] sm:$0xff] %v703
    %s705 = scalar_lea.vmem %s699, 8 [#allocation1]
    %s706 = scalar_lea.vmem %s700, 8 [#allocation0]
    %v707 = vld [vmem:[%s706] sm:$0xff]
    %708 = vperm.xlu0 %4, %v707
    %v709 = vpop.permute.xlu0 %708
    %710 = vst [vmem:[%s705] sm:$0xff] %v709
    %s711 = scalar_lea.vmem [#allocation1], 224
    %s712 = scalar_lea.vmem [#allocation0], 224
    %v713 = vld [vmem:[%s712] sm:$0xff]
    %714 = vperm.xlu0 %4, %v713
    %v715 = vpop.permute.xlu0 %714
    %716 = vst [vmem:[%s711] sm:$0xff] %v715
    %s717 = scalar_lea.vmem %s711, 8 [#allocation1]
    %s718 = scalar_lea.vmem %s712, 8 [#allocation0]
    %v719 = vld [vmem:[%s718] sm:$0xff]
    %720 = vperm.xlu0 %4, %v719
    %v721 = vpop.permute.xlu0 %720
    %722 = vst [vmem:[%s717] sm:$0xff] %v721
    %s723 = scalar_lea.vmem [#allocation1], 240
    %s724 = scalar_lea.vmem [#allocation0], 240
    %v725 = vld [vmem:[%s724] sm:$0xff]
    %726 = vperm.xlu0 %4, %v725
    %v727 = vpop.permute.xlu0 %726
    %728 = vst [vmem:[%s723] sm:$0xff] %v727
    %s729 = scalar_lea.vmem %s723, 8 [#allocation1]
    %s730 = scalar_lea.vmem %s724, 8 [#allocation0]
    %v731 = vld [vmem:[%s730] sm:$0xff]
    %732 = vperm.xlu0 %4, %v731
    %v733 = vpop.permute.xlu0 %732
    %734 = vst [vmem:[%s729] sm:$0xff] %v733
    %s735 = scalar_lea.vmem [#allocation1], 256
    %s736 = scalar_lea.vmem [#allocation0], 256
    %v737 = vld [vmem:[%s736] sm:$0xff]
    %738 = vperm.xlu0 %4, %v737
    %v739 = vpop.permute.xlu0 %738
    %740 = vst [vmem:[%s735] sm:$0xff] %v739
    %s741 = scalar_lea.vmem %s735, 8 [#allocation1]
    %s742 = scalar_lea.vmem %s736, 8 [#allocation0]
    %v743 = vld [vmem:[%s742] sm:$0xff]
    %744 = vperm.xlu0 %4, %v743
    %v745 = vpop.permute.xlu0 %744
    %746 = vst [vmem:[%s741] sm:$0xff] %v745
    %s747 = scalar_lea.vmem [#allocation1], 272
    %s748 = scalar_lea.vmem [#allocation0], 272
    %v749 = vld [vmem:[%s748] sm:$0xff]
    %750 = vperm.xlu0 %4, %v749
    %v751 = vpop.permute.xlu0 %750
    %752 = vst [vmem:[%s747] sm:$0xff] %v751
    %s753 = scalar_lea.vmem %s747, 8 [#allocation1]
    %s754 = scalar_lea.vmem %s748, 8 [#allocation0]
    %v755 = vld [vmem:[%s754] sm:$0xff]
    %756 = vperm.xlu0 %4, %v755
    %v757 = vpop.permute.xlu0 %756
    %758 = vst [vmem:[%s753] sm:$0xff] %v757
    %s759 = scalar_lea.vmem [#allocation1], 288
    %s760 = scalar_lea.vmem [#allocation0], 288
    %v761 = vld [vmem:[%s760] sm:$0xff]
    %762 = vperm.xlu0 %4, %v761
    %v763 = vpop.permute.xlu0 %762
    %764 = vst [vmem:[%s759] sm:$0xff] %v763
    %s765 = scalar_lea.vmem %s759, 8 [#allocation1]
    %s766 = scalar_lea.vmem %s760, 8 [#allocation0]
    %v767 = vld [vmem:[%s766] sm:$0xff]
    %768 = vperm.xlu0 %4, %v767
    %v769 = vpop.permute.xlu0 %768
    %770 = vst [vmem:[%s765] sm:$0xff] %v769
    %s771 = scalar_lea.vmem [#allocation1], 304
    %s772 = scalar_lea.vmem [#allocation0], 304
    %v773 = vld [vmem:[%s772] sm:$0xff]
    %774 = vperm.xlu0 %4, %v773
    %v775 = vpop.permute.xlu0 %774
    %776 = vst [vmem:[%s771] sm:$0xff] %v775
    %s777 = scalar_lea.vmem %s771, 8 [#allocation1]
    %s778 = scalar_lea.vmem %s772, 8 [#allocation0]
    %v779 = vld [vmem:[%s778] sm:$0xff]
    %780 = vperm.xlu0 %4, %v779
    %v781 = vpop.permute.xlu0 %780
    %782 = vst [vmem:[%s777] sm:$0xff] %v781
    %s783 = scalar_lea.vmem [#allocation1], 320
    %s784 = scalar_lea.vmem [#allocation0], 320
    %v785 = vld [vmem:[%s784] sm:$0xff]
    %786 = vperm.xlu0 %4, %v785
    %v787 = vpop.permute.xlu0 %786
    %788 = vst [vmem:[%s783] sm:$0xff] %v787
    %s789 = scalar_lea.vmem %s783, 8 [#allocation1]
    %s790 = scalar_lea.vmem %s784, 8 [#allocation0]
    %v791 = vld [vmem:[%s790] sm:$0xff]
    %792 = vperm.xlu0 %4, %v791
    %v793 = vpop.permute.xlu0 %792
    %794 = vst [vmem:[%s789] sm:$0xff] %v793
    %s795 = scalar_lea.vmem [#allocation1], 336
    %s796 = scalar_lea.vmem [#allocation0], 336
    %v797 = vld [vmem:[%s796] sm:$0xff]
    %798 = vperm.xlu0 %4, %v797
    %v799 = vpop.permute.xlu0 %798
    %800 = vst [vmem:[%s795] sm:$0xff] %v799
    %s801 = scalar_lea.vmem %s795, 8 [#allocation1]
    %s802 = scalar_lea.vmem %s796, 8 [#allocation0]
    %v803 = vld [vmem:[%s802] sm:$0xff]
    %804 = vperm.xlu0 %4, %v803
    %v805 = vpop.permute.xlu0 %804
    %806 = vst [vmem:[%s801] sm:$0xff] %v805
    %s807 = scalar_lea.vmem [#allocation1], 352
    %s808 = scalar_lea.vmem [#allocation0], 352
    %v809 = vld [vmem:[%s808] sm:$0xff]
    %810 = vperm.xlu0 %4, %v809
    %v811 = vpop.permute.xlu0 %810
    %812 = vst [vmem:[%s807] sm:$0xff] %v811
    %s813 = scalar_lea.vmem %s807, 8 [#allocation1]
    %s814 = scalar_lea.vmem %s808, 8 [#allocation0]
    %v815 = vld [vmem:[%s814] sm:$0xff]
    %816 = vperm.xlu0 %4, %v815
    %v817 = vpop.permute.xlu0 %816
    %818 = vst [vmem:[%s813] sm:$0xff] %v817
    %s819 = scalar_lea.vmem [#allocation1], 368
    %s820 = scalar_lea.vmem [#allocation0], 368
    %v821 = vld [vmem:[%s820] sm:$0xff]
    %822 = vperm.xlu0 %4, %v821
    %v823 = vpop.permute.xlu0 %822
    %824 = vst [vmem:[%s819] sm:$0xff] %v823
    %s825 = scalar_lea.vmem %s819, 8 [#allocation1]
    %s826 = scalar_lea.vmem %s820, 8 [#allocation0]
    %v827 = vld [vmem:[%s826] sm:$0xff]
    %828 = vperm.xlu0 %4, %v827
    %v829 = vpop.permute.xlu0 %828
    %830 = vst [vmem:[%s825] sm:$0xff] %v829
    %s831 = scalar_lea.vmem [#allocation1], 384
    %s832 = scalar_lea.vmem [#allocation0], 384
    %v833 = vld [vmem:[%s832] sm:$0xff]
    %834 = vperm.xlu0 %4, %v833
    %v835 = vpop.permute.xlu0 %834
    %836 = vst [vmem:[%s831] sm:$0xff] %v835
    %s837 = scalar_lea.vmem %s831, 8 [#allocation1]
    %s838 = scalar_lea.vmem %s832, 8 [#allocation0]
    %v839 = vld [vmem:[%s838] sm:$0xff]
    %840 = vperm.xlu0 %4, %v839
    %v841 = vpop.permute.xlu0 %840
    %842 = vst [vmem:[%s837] sm:$0xff] %v841
    %s843 = scalar_lea.vmem [#allocation1], 400
    %s844 = scalar_lea.vmem [#allocation0], 400
    %v845 = vld [vmem:[%s844] sm:$0xff]
    %846 = vperm.xlu0 %4, %v845
    %v847 = vpop.permute.xlu0 %846
    %848 = vst [vmem:[%s843] sm:$0xff] %v847
    %s849 = scalar_lea.vmem %s843, 8 [#allocation1]
    %s850 = scalar_lea.vmem %s844, 8 [#allocation0]
    %v851 = vld [vmem:[%s850] sm:$0xff]
    %852 = vperm.xlu0 %4, %v851
    %v853 = vpop.permute.xlu0 %852
    %854 = vst [vmem:[%s849] sm:$0xff] %v853
    %s855 = scalar_lea.vmem [#allocation1], 416
    %s856 = scalar_lea.vmem [#allocation0], 416
    %v857 = vld [vmem:[%s856] sm:$0xff]
    %858 = vperm.xlu0 %4, %v857
    %v859 = vpop.permute.xlu0 %858
    %860 = vst [vmem:[%s855] sm:$0xff] %v859
    %s861 = scalar_lea.vmem %s855, 8 [#allocation1]
    %s862 = scalar_lea.vmem %s856, 8 [#allocation0]
    %v863 = vld [vmem:[%s862] sm:$0xff]
    %864 = vperm.xlu0 %4, %v863
    %v865 = vpop.permute.xlu0 %864
    %866 = vst [vmem:[%s861] sm:$0xff] %v865
    %s867 = scalar_lea.vmem [#allocation1], 432
    %s868 = scalar_lea.vmem [#allocation0], 432
    %v869 = vld [vmem:[%s868] sm:$0xff]
    %870 = vperm.xlu0 %4, %v869
    %v871 = vpop.permute.xlu0 %870
    %872 = vst [vmem:[%s867] sm:$0xff] %v871
    %s873 = scalar_lea.vmem %s867, 8 [#allocation1]
    %s874 = scalar_lea.vmem %s868, 8 [#allocation0]
    %v875 = vld [vmem:[%s874] sm:$0xff]
    %876 = vperm.xlu0 %4, %v875
    %v877 = vpop.permute.xlu0 %876
    %878 = vst [vmem:[%s873] sm:$0xff] %v877
    %s879 = scalar_lea.vmem [#allocation1], 448
    %s880 = scalar_lea.vmem [#allocation0], 448
    %v881 = vld [vmem:[%s880] sm:$0xff]
    %882 = vperm.xlu0 %4, %v881
    %v883 = vpop.permute.xlu0 %882
    %884 = vst [vmem:[%s879] sm:$0xff] %v883
    %s885 = scalar_lea.vmem %s879, 8 [#allocation1]
    %s886 = scalar_lea.vmem %s880, 8 [#allocation0]
    %v887 = vld [vmem:[%s886] sm:$0xff]
    %888 = vperm.xlu0 %4, %v887
    %v889 = vpop.permute.xlu0 %888
    %890 = vst [vmem:[%s885] sm:$0xff] %v889
    %s891 = scalar_lea.vmem [#allocation1], 464
    %s892 = scalar_lea.vmem [#allocation0], 464
    %v893 = vld [vmem:[%s892] sm:$0xff]
    %894 = vperm.xlu0 %4, %v893
    %v895 = vpop.permute.xlu0 %894
    %896 = vst [vmem:[%s891] sm:$0xff] %v895
    %s897 = scalar_lea.vmem %s891, 8 [#allocation1]
    %s898 = scalar_lea.vmem %s892, 8 [#allocation0]
    %v899 = vld [vmem:[%s898] sm:$0xff]
    %900 = vperm.xlu0 %4, %v899
    %v901 = vpop.permute.xlu0 %900
    %902 = vst [vmem:[%s897] sm:$0xff] %v901
    %s903 = scalar_lea.vmem [#allocation1], 480
    %s904 = scalar_lea.vmem [#allocation0], 480
    %v905 = vld [vmem:[%s904] sm:$0xff]
    %906 = vperm.xlu0 %4, %v905
    %v907 = vpop.permute.xlu0 %906
    %908 = vst [vmem:[%s903] sm:$0xff] %v907
    %s909 = scalar_lea.vmem %s903, 8 [#allocation1]
    %s910 = scalar_lea.vmem %s904, 8 [#allocation0]
    %v911 = vld [vmem:[%s910] sm:$0xff]
    %912 = vperm.xlu0 %4, %v911
    %v913 = vpop.permute.xlu0 %912
    %914 = vst [vmem:[%s909] sm:$0xff] %v913
    %s915 = scalar_lea.vmem [#allocation1], 496
    %s916 = scalar_lea.vmem [#allocation0], 496
    %v917 = vld [vmem:[%s916] sm:$0xff]
    %918 = vperm.xlu0 %4, %v917
    %v919 = vpop.permute.xlu0 %918
    %920 = vst [vmem:[%s915] sm:$0xff] %v919
    %s921 = scalar_lea.vmem %s915, 8 [#allocation1]
    %s922 = scalar_lea.vmem %s916, 8 [#allocation0]
    %v923 = vld [vmem:[%s922] sm:$0xff]
    %924 = vperm.xlu0 %4, %v923
    %v925 = vpop.permute.xlu0 %924
    %926 = vst [vmem:[%s921] sm:$0xff] %v925
    %s927 = scalar_lea.vmem [#allocation1], 512
    %s928 = scalar_lea.vmem [#allocation0], 512
    %v929 = vld [vmem:[%s928] sm:$0xff]
    %930 = vperm.xlu0 %4, %v929
    %v931 = vpop.permute.xlu0 %930
    %932 = vst [vmem:[%s927] sm:$0xff] %v931
    %s933 = scalar_lea.vmem %s927, 8 [#allocation1]
    %s934 = scalar_lea.vmem %s928, 8 [#allocation0]
    %v935 = vld [vmem:[%s934] sm:$0xff]
    %936 = vperm.xlu0 %4, %v935
    %v937 = vpop.permute.xlu0 %936
    %938 = vst [vmem:[%s933] sm:$0xff] %v937
    %s939 = scalar_lea.vmem [#allocation1], 528
    %s940 = scalar_lea.vmem [#allocation0], 528
    %v941 = vld [vmem:[%s940] sm:$0xff]
    %942 = vperm.xlu0 %4, %v941
    %v943 = vpop.permute.xlu0 %942
    %944 = vst [vmem:[%s939] sm:$0xff] %v943
    %s945 = scalar_lea.vmem %s939, 8 [#allocation1]
    %s946 = scalar_lea.vmem %s940, 8 [#allocation0]
    %v947 = vld [vmem:[%s946] sm:$0xff]
    %948 = vperm.xlu0 %4, %v947
    %v949 = vpop.permute.xlu0 %948
    %950 = vst [vmem:[%s945] sm:$0xff] %v949
    %s951 = scalar_lea.vmem [#allocation1], 544
    %s952 = scalar_lea.vmem [#allocation0], 544
    %v953 = vld [vmem:[%s952] sm:$0xff]
    %954 = vperm.xlu0 %4, %v953
    %v955 = vpop.permute.xlu0 %954
    %956 = vst [vmem:[%s951] sm:$0xff] %v955
    %s957 = scalar_lea.vmem %s951, 8 [#allocation1]
    %s958 = scalar_lea.vmem %s952, 8 [#allocation0]
    %v959 = vld [vmem:[%s958] sm:$0xff]
    %960 = vperm.xlu0 %4, %v959
    %v961 = vpop.permute.xlu0 %960
    %962 = vst [vmem:[%s957] sm:$0xff] %v961
    %s963 = scalar_lea.vmem [#allocation1], 560
    %s964 = scalar_lea.vmem [#allocation0], 560
    %v965 = vld [vmem:[%s964] sm:$0xff]
    %966 = vperm.xlu0 %4, %v965
    %v967 = vpop.permute.xlu0 %966
    %968 = vst [vmem:[%s963] sm:$0xff] %v967
    %s969 = scalar_lea.vmem %s963, 8 [#allocation1]
    %s970 = scalar_lea.vmem %s964, 8 [#allocation0]
    %v971 = vld [vmem:[%s970] sm:$0xff]
    %972 = vperm.xlu0 %4, %v971
    %v973 = vpop.permute.xlu0 %972
    %974 = vst [vmem:[%s969] sm:$0xff] %v973
    %s975 = scalar_lea.vmem [#allocation1], 576
    %s976 = scalar_lea.vmem [#allocation0], 576
    %v977 = vld [vmem:[%s976] sm:$0xff]
    %978 = vperm.xlu0 %4, %v977
    %v979 = vpop.permute.xlu0 %978
    %980 = vst [vmem:[%s975] sm:$0xff] %v979
    %s981 = scalar_lea.vmem %s975, 8 [#allocation1]
    %s982 = scalar_lea.vmem %s976, 8 [#allocation0]
    %v983 = vld [vmem:[%s982] sm:$0xff]
    %984 = vperm.xlu0 %4, %v983
    %v985 = vpop.permute.xlu0 %984
    %986 = vst [vmem:[%s981] sm:$0xff] %v985
    %s987 = scalar_lea.vmem [#allocation1], 592
    %s988 = scalar_lea.vmem [#allocation0], 592
    %v989 = vld [vmem:[%s988] sm:$0xff]
    %990 = vperm.xlu0 %4, %v989
    %v991 = vpop.permute.xlu0 %990
    %992 = vst [vmem:[%s987] sm:$0xff] %v991
    %s993 = scalar_lea.vmem %s987, 8 [#allocation1]
    %s994 = scalar_lea.vmem %s988, 8 [#allocation0]
    %v995 = vld [vmem:[%s994] sm:$0xff]
    %996 = vperm.xlu0 %4, %v995
    %v997 = vpop.permute.xlu0 %996
    %998 = vst [vmem:[%s993] sm:$0xff] %v997
    %s999 = scalar_lea.vmem [#allocation1], 608
    %s1000 = scalar_lea.vmem [#allocation0], 608
    %v1001 = vld [vmem:[%s1000] sm:$0xff]
    %1002 = vperm.xlu0 %4, %v1001
    %v1003 = vpop.permute.xlu0 %1002
    %1004 = vst [vmem:[%s999] sm:$0xff] %v1003
    %s1005 = scalar_lea.vmem %s999, 8 [#allocation1]
    %s1006 = scalar_lea.vmem %s1000, 8 [#allocation0]
    %v1007 = vld [vmem:[%s1006] sm:$0xff]
    %1008 = vperm.xlu0 %4, %v1007
    %v1009 = vpop.permute.xlu0 %1008
    %1010 = vst [vmem:[%s1005] sm:$0xff] %v1009
    %s1011 = scalar_lea.vmem [#allocation1], 624
    %s1012 = scalar_lea.vmem [#allocation0], 624
    %v1013 = vld [vmem:[%s1012] sm:$0xff]
    %1014 = vperm.xlu0 %4, %v1013
    %v1015 = vpop.permute.xlu0 %1014
    %1016 = vst [vmem:[%s1011] sm:$0xff] %v1015
    %s1017 = scalar_lea.vmem %s1011, 8 [#allocation1]
    %s1018 = scalar_lea.vmem %s1012, 8 [#allocation0]
    %v1019 = vld [vmem:[%s1018] sm:$0xff]
    %1020 = vperm.xlu0 %4, %v1019
    %v1021 = vpop.permute.xlu0 %1020
    %1022 = vst [vmem:[%s1017] sm:$0xff] %v1021
    %s1023 = scalar_lea.vmem [#allocation1], 640
    %s1024 = scalar_lea.vmem [#allocation0], 640
    %v1025 = vld [vmem:[%s1024] sm:$0xff]
    %1026 = vperm.xlu0 %4, %v1025
    %v1027 = vpop.permute.xlu0 %1026
    %1028 = vst [vmem:[%s1023] sm:$0xff] %v1027
    %s1029 = scalar_lea.vmem %s1023, 8 [#allocation1]
    %s1030 = scalar_lea.vmem %s1024, 8 [#allocation0]
    %v1031 = vld [vmem:[%s1030] sm:$0xff]
    %1032 = vperm.xlu0 %4, %v1031
    %v1033 = vpop.permute.xlu0 %1032
    %1034 = vst [vmem:[%s1029] sm:$0xff] %v1033
    %s1035 = scalar_lea.vmem [#allocation1], 656
    %s1036 = scalar_lea.vmem [#allocation0], 656
    %v1037 = vld [vmem:[%s1036] sm:$0xff]
    %1038 = vperm.xlu0 %4, %v1037
    %v1039 = vpop.permute.xlu0 %1038
    %1040 = vst [vmem:[%s1035] sm:$0xff] %v1039
    %s1041 = scalar_lea.vmem %s1035, 8 [#allocation1]
    %s1042 = scalar_lea.vmem %s1036, 8 [#allocation0]
    %v1043 = vld [vmem:[%s1042] sm:$0xff]
    %1044 = vperm.xlu0 %4, %v1043
    %v1045 = vpop.permute.xlu0 %1044
    %1046 = vst [vmem:[%s1041] sm:$0xff] %v1045
    %s1047 = scalar_lea.vmem [#allocation1], 672
    %s1048 = scalar_lea.vmem [#allocation0], 672
    %v1049 = vld [vmem:[%s1048] sm:$0xff]
    %1050 = vperm.xlu0 %4, %v1049
    %v1051 = vpop.permute.xlu0 %1050
    %1052 = vst [vmem:[%s1047] sm:$0xff] %v1051
    %s1053 = scalar_lea.vmem %s1047, 8 [#allocation1]
    %s1054 = scalar_lea.vmem %s1048, 8 [#allocation0]
    %v1055 = vld [vmem:[%s1054] sm:$0xff]
    %1056 = vperm.xlu0 %4, %v1055
    %v1057 = vpop.permute.xlu0 %1056
    %1058 = vst [vmem:[%s1053] sm:$0xff] %v1057
    %s1059 = scalar_lea.vmem [#allocation1], 688
    %s1060 = scalar_lea.vmem [#allocation0], 688
    %v1061 = vld [vmem:[%s1060] sm:$0xff]
    %1062 = vperm.xlu0 %4, %v1061
    %v1063 = vpop.permute.xlu0 %1062
    %1064 = vst [vmem:[%s1059] sm:$0xff] %v1063
    %s1065 = scalar_lea.vmem %s1059, 8 [#allocation1]
    %s1066 = scalar_lea.vmem %s1060, 8 [#allocation0]
    %v1067 = vld [vmem:[%s1066] sm:$0xff]
    %1068 = vperm.xlu0 %4, %v1067
    %v1069 = vpop.permute.xlu0 %1068
    %1070 = vst [vmem:[%s1065] sm:$0xff] %v1069
    %s1071 = scalar_lea.vmem [#allocation1], 704
    %s1072 = scalar_lea.vmem [#allocation0], 704
    %v1073 = vld [vmem:[%s1072] sm:$0xff]
    %1074 = vperm.xlu0 %4, %v1073
    %v1075 = vpop.permute.xlu0 %1074
    %1076 = vst [vmem:[%s1071] sm:$0xff] %v1075
    %s1077 = scalar_lea.vmem %s1071, 8 [#allocation1]
    %s1078 = scalar_lea.vmem %s1072, 8 [#allocation0]
    %v1079 = vld [vmem:[%s1078] sm:$0xff]
    %1080 = vperm.xlu0 %4, %v1079
    %v1081 = vpop.permute.xlu0 %1080
    %1082 = vst [vmem:[%s1077] sm:$0xff] %v1081
    %s1083 = scalar_lea.vmem [#allocation1], 720
    %s1084 = scalar_lea.vmem [#allocation0], 720
    %v1085 = vld [vmem:[%s1084] sm:$0xff]
    %1086 = vperm.xlu0 %4, %v1085
    %v1087 = vpop.permute.xlu0 %1086
    %1088 = vst [vmem:[%s1083] sm:$0xff] %v1087
    %s1089 = scalar_lea.vmem %s1083, 8 [#allocation1]
    %s1090 = scalar_lea.vmem %s1084, 8 [#allocation0]
    %v1091 = vld [vmem:[%s1090] sm:$0xff]
    %1092 = vperm.xlu0 %4, %v1091
    %v1093 = vpop.permute.xlu0 %1092
    %1094 = vst [vmem:[%s1089] sm:$0xff] %v1093
    %s1095 = scalar_lea.vmem [#allocation1], 736
    %s1096 = scalar_lea.vmem [#allocation0], 736
    %v1097 = vld [vmem:[%s1096] sm:$0xff]
    %1098 = vperm.xlu0 %4, %v1097
    %v1099 = vpop.permute.xlu0 %1098
    %1100 = vst [vmem:[%s1095] sm:$0xff] %v1099
    %s1101 = scalar_lea.vmem %s1095, 8 [#allocation1]
    %s1102 = scalar_lea.vmem %s1096, 8 [#allocation0]
    %v1103 = vld [vmem:[%s1102] sm:$0xff]
    %1104 = vperm.xlu0 %4, %v1103
    %v1105 = vpop.permute.xlu0 %1104
    %1106 = vst [vmem:[%s1101] sm:$0xff] %v1105
    %s1107 = scalar_lea.vmem [#allocation1], 752
    %s1108 = scalar_lea.vmem [#allocation0], 752
    %v1109 = vld [vmem:[%s1108] sm:$0xff]
    %1110 = vperm.xlu0 %4, %v1109
    %v1111 = vpop.permute.xlu0 %1110
    %1112 = vst [vmem:[%s1107] sm:$0xff] %v1111
    %s1113 = scalar_lea.vmem %s1107, 8 [#allocation1]
    %s1114 = scalar_lea.vmem %s1108, 8 [#allocation0]
    %v1115 = vld [vmem:[%s1114] sm:$0xff]
    %1116 = vperm.xlu0 %4, %v1115
    %v1117 = vpop.permute.xlu0 %1116
    %1118 = vst [vmem:[%s1113] sm:$0xff] %v1117
    %s1119 = scalar_lea.vmem [#allocation1], 768
    %s1120 = scalar_lea.vmem [#allocation0], 768
    %v1121 = vld [vmem:[%s1120] sm:$0xff]
    %1122 = vperm.xlu0 %4, %v1121
    %v1123 = vpop.permute.xlu0 %1122
    %1124 = vst [vmem:[%s1119] sm:$0xff] %v1123
    %s1125 = scalar_lea.vmem %s1119, 8 [#allocation1]
    %s1126 = scalar_lea.vmem %s1120, 8 [#allocation0]
    %v1127 = vld [vmem:[%s1126] sm:$0xff]
    %1128 = vperm.xlu0 %4, %v1127
    %v1129 = vpop.permute.xlu0 %1128
    %1130 = vst [vmem:[%s1125] sm:$0xff] %v1129
    %s1131 = scalar_lea.vmem [#allocation1], 784
    %s1132 = scalar_lea.vmem [#allocation0], 784
    %v1133 = vld [vmem:[%s1132] sm:$0xff]
    %1134 = vperm.xlu0 %4, %v1133
    %v1135 = vpop.permute.xlu0 %1134
    %1136 = vst [vmem:[%s1131] sm:$0xff] %v1135
    %s1137 = scalar_lea.vmem %s1131, 8 [#allocation1]
    %s1138 = scalar_lea.vmem %s1132, 8 [#allocation0]
    %v1139 = vld [vmem:[%s1138] sm:$0xff]
    %1140 = vperm.xlu0 %4, %v1139
    %v1141 = vpop.permute.xlu0 %1140
    %1142 = vst [vmem:[%s1137] sm:$0xff] %v1141
    %s1143 = scalar_lea.vmem [#allocation1], 800
    %s1144 = scalar_lea.vmem [#allocation0], 800
    %v1145 = vld [vmem:[%s1144] sm:$0xff]
    %1146 = vperm.xlu0 %4, %v1145
    %v1147 = vpop.permute.xlu0 %1146
    %1148 = vst [vmem:[%s1143] sm:$0xff] %v1147
    %s1149 = scalar_lea.vmem %s1143, 8 [#allocation1]
    %s1150 = scalar_lea.vmem %s1144, 8 [#allocation0]
    %v1151 = vld [vmem:[%s1150] sm:$0xff]
    %1152 = vperm.xlu0 %4, %v1151
    %v1153 = vpop.permute.xlu0 %1152
    %1154 = vst [vmem:[%s1149] sm:$0xff] %v1153
    %s1155 = scalar_lea.vmem [#allocation1], 816
    %s1156 = scalar_lea.vmem [#allocation0], 816
    %v1157 = vld [vmem:[%s1156] sm:$0xff]
    %1158 = vperm.xlu0 %4, %v1157
    %v1159 = vpop.permute.xlu0 %1158
    %1160 = vst [vmem:[%s1155] sm:$0xff] %v1159
    %s1161 = scalar_lea.vmem %s1155, 8 [#allocation1]
    %s1162 = scalar_lea.vmem %s1156, 8 [#allocation0]
    %v1163 = vld [vmem:[%s1162] sm:$0xff]
    %1164 = vperm.xlu0 %4, %v1163
    %v1165 = vpop.permute.xlu0 %1164
    %1166 = vst [vmem:[%s1161] sm:$0xff] %v1165
    %s1167 = scalar_lea.vmem [#allocation1], 832
    %s1168 = scalar_lea.vmem [#allocation0], 832
    %v1169 = vld [vmem:[%s1168] sm:$0xff]
    %1170 = vperm.xlu0 %4, %v1169
    %v1171 = vpop.permute.xlu0 %1170
    %1172 = vst [vmem:[%s1167] sm:$0xff] %v1171
    %s1173 = scalar_lea.vmem %s1167, 8 [#allocation1]
    %s1174 = scalar_lea.vmem %s1168, 8 [#allocation0]
    %v1175 = vld [vmem:[%s1174] sm:$0xff]
    %1176 = vperm.xlu0 %4, %v1175
    %v1177 = vpop.permute.xlu0 %1176
    %1178 = vst [vmem:[%s1173] sm:$0xff] %v1177
    %s1179 = scalar_lea.vmem [#allocation1], 848
    %s1180 = scalar_lea.vmem [#allocation0], 848
    %v1181 = vld [vmem:[%s1180] sm:$0xff]
    %1182 = vperm.xlu0 %4, %v1181
    %v1183 = vpop.permute.xlu0 %1182
    %1184 = vst [vmem:[%s1179] sm:$0xff] %v1183
    %s1185 = scalar_lea.vmem %s1179, 8 [#allocation1]
    %s1186 = scalar_lea.vmem %s1180, 8 [#allocation0]
    %v1187 = vld [vmem:[%s1186] sm:$0xff]
    %1188 = vperm.xlu0 %4, %v1187
    %v1189 = vpop.permute.xlu0 %1188
    %1190 = vst [vmem:[%s1185] sm:$0xff] %v1189
    %s1191 = scalar_lea.vmem [#allocation1], 864
    %s1192 = scalar_lea.vmem [#allocation0], 864
    %v1193 = vld [vmem:[%s1192] sm:$0xff]
    %1194 = vperm.xlu0 %4, %v1193
    %v1195 = vpop.permute.xlu0 %1194
    %1196 = vst [vmem:[%s1191] sm:$0xff] %v1195
    %s1197 = scalar_lea.vmem %s1191, 8 [#allocation1]
    %s1198 = scalar_lea.vmem %s1192, 8 [#allocation0]
    %v1199 = vld [vmem:[%s1198] sm:$0xff]
    %1200 = vperm.xlu0 %4, %v1199
    %v1201 = vpop.permute.xlu0 %1200
    %1202 = vst [vmem:[%s1197] sm:$0xff] %v1201
    %s1203 = scalar_lea.vmem [#allocation1], 880
    %s1204 = scalar_lea.vmem [#allocation0], 880
    %v1205 = vld [vmem:[%s1204] sm:$0xff]
    %1206 = vperm.xlu0 %4, %v1205
    %v1207 = vpop.permute.xlu0 %1206
    %1208 = vst [vmem:[%s1203] sm:$0xff] %v1207
    %s1209 = scalar_lea.vmem %s1203, 8 [#allocation1]
    %s1210 = scalar_lea.vmem %s1204, 8 [#allocation0]
    %v1211 = vld [vmem:[%s1210] sm:$0xff]
    %1212 = vperm.xlu0 %4, %v1211
    %v1213 = vpop.permute.xlu0 %1212
    %1214 = vst [vmem:[%s1209] sm:$0xff] %v1213
    %s1215 = scalar_lea.vmem [#allocation1], 896
    %s1216 = scalar_lea.vmem [#allocation0], 896
    %v1217 = vld [vmem:[%s1216] sm:$0xff]
    %1218 = vperm.xlu0 %4, %v1217
    %v1219 = vpop.permute.xlu0 %1218
    %1220 = vst [vmem:[%s1215] sm:$0xff] %v1219
    %s1221 = scalar_lea.vmem %s1215, 8 [#allocation1]
    %s1222 = scalar_lea.vmem %s1216, 8 [#allocation0]
    %v1223 = vld [vmem:[%s1222] sm:$0xff]
    %1224 = vperm.xlu0 %4, %v1223
    %v1225 = vpop.permute.xlu0 %1224
    %1226 = vst [vmem:[%s1221] sm:$0xff] %v1225
    %s1227 = scalar_lea.vmem [#allocation1], 912
    %s1228 = scalar_lea.vmem [#allocation0], 912
    %v1229 = vld [vmem:[%s1228] sm:$0xff]
    %1230 = vperm.xlu0 %4, %v1229
    %v1231 = vpop.permute.xlu0 %1230
    %1232 = vst [vmem:[%s1227] sm:$0xff] %v1231
    %s1233 = scalar_lea.vmem %s1227, 8 [#allocation1]
    %s1234 = scalar_lea.vmem %s1228, 8 [#allocation0]
    %v1235 = vld [vmem:[%s1234] sm:$0xff]
    %1236 = vperm.xlu0 %4, %v1235
    %v1237 = vpop.permute.xlu0 %1236
    %1238 = vst [vmem:[%s1233] sm:$0xff] %v1237
    %s1239 = scalar_lea.vmem [#allocation1], 928
    %s1240 = scalar_lea.vmem [#allocation0], 928
    %v1241 = vld [vmem:[%s1240] sm:$0xff]
    %1242 = vperm.xlu0 %4, %v1241
    %v1243 = vpop.permute.xlu0 %1242
    %1244 = vst [vmem:[%s1239] sm:$0xff] %v1243
    %s1245 = scalar_lea.vmem %s1239, 8 [#allocation1]
    %s1246 = scalar_lea.vmem %s1240, 8 [#allocation0]
    %v1247 = vld [vmem:[%s1246] sm:$0xff]
    %1248 = vperm.xlu0 %4, %v1247
    %v1249 = vpop.permute.xlu0 %1248
    %1250 = vst [vmem:[%s1245] sm:$0xff] %v1249
    %s1251 = scalar_lea.vmem [#allocation1], 944
    %s1252 = scalar_lea.vmem [#allocation0], 944
    %v1253 = vld [vmem:[%s1252] sm:$0xff]
    %1254 = vperm.xlu0 %4, %v1253
    %v1255 = vpop.permute.xlu0 %1254
    %1256 = vst [vmem:[%s1251] sm:$0xff] %v1255
    %s1257 = scalar_lea.vmem %s1251, 8 [#allocation1]
    %s1258 = scalar_lea.vmem %s1252, 8 [#allocation0]
    %v1259 = vld [vmem:[%s1258] sm:$0xff]
    %1260 = vperm.xlu0 %4, %v1259
    %v1261 = vpop.permute.xlu0 %1260
    %1262 = vst [vmem:[%s1257] sm:$0xff] %v1261
    %s1263 = scalar_lea.vmem [#allocation1], 960
    %s1264 = scalar_lea.vmem [#allocation0], 960
    %v1265 = vld [vmem:[%s1264] sm:$0xff]
    %1266 = vperm.xlu0 %4, %v1265
    %v1267 = vpop.permute.xlu0 %1266
    %1268 = vst [vmem:[%s1263] sm:$0xff] %v1267
    %s1269 = scalar_lea.vmem %s1263, 8 [#allocation1]
    %s1270 = scalar_lea.vmem %s1264, 8 [#allocation0]
    %v1271 = vld [vmem:[%s1270] sm:$0xff]
    %1272 = vperm.xlu0 %4, %v1271
    %v1273 = vpop.permute.xlu0 %1272
    %1274 = vst [vmem:[%s1269] sm:$0xff] %v1273
    %s1275 = scalar_lea.vmem [#allocation1], 976
    %s1276 = scalar_lea.vmem [#allocation0], 976
    %v1277 = vld [vmem:[%s1276] sm:$0xff]
    %1278 = vperm.xlu0 %4, %v1277
    %v1279 = vpop.permute.xlu0 %1278
    %1280 = vst [vmem:[%s1275] sm:$0xff] %v1279
    %s1281 = scalar_lea.vmem %s1275, 8 [#allocation1]
    %s1282 = scalar_lea.vmem %s1276, 8 [#allocation0]
    %v1283 = vld [vmem:[%s1282] sm:$0xff]
    %1284 = vperm.xlu0 %4, %v1283
    %v1285 = vpop.permute.xlu0 %1284
    %1286 = vst [vmem:[%s1281] sm:$0xff] %v1285
    %s1287 = scalar_lea.vmem [#allocation1], 992
    %s1288 = scalar_lea.vmem [#allocation0], 992
    %v1289 = vld [vmem:[%s1288] sm:$0xff]
    %1290 = vperm.xlu0 %4, %v1289
    %v1291 = vpop.permute.xlu0 %1290
    %1292 = vst [vmem:[%s1287] sm:$0xff] %v1291
    %s1293 = scalar_lea.vmem %s1287, 8 [#allocation1]
    %s1294 = scalar_lea.vmem %s1288, 8 [#allocation0]
    %v1295 = vld [vmem:[%s1294] sm:$0xff]
    %1296 = vperm.xlu0 %4, %v1295
    %v1297 = vpop.permute.xlu0 %1296
    %1298 = vst [vmem:[%s1293] sm:$0xff] %v1297
    %s1299 = scalar_lea.vmem [#allocation1], 1008
    %s1300 = scalar_lea.vmem [#allocation0], 1008
    %v1301 = vld [vmem:[%s1300] sm:$0xff]
    %1302 = vperm.xlu0 %4, %v1301
    %v1303 = vpop.permute.xlu0 %1302
    %1304 = vst [vmem:[%s1299] sm:$0xff] %v1303
    %s1305 = scalar_lea.vmem %s1299, 8 [#allocation1]
    %s1306 = scalar_lea.vmem %s1300, 8 [#allocation0]
    %v1307 = vld [vmem:[%s1306] sm:$0xff]
    %1308 = vperm.xlu0 %4, %v1307
    %v1309 = vpop.permute.xlu0 %1308
    %1310 = vst [vmem:[%s1305] sm:$0xff] %v1309
    // Predicated region
    $region36: #{reverse.6} parent=1 // pred_check
      _
    $region37: #{reverse.6} parent=1 // pred_check_branch
      %1312 = sbr.rel (0) target = $region39
    $region38: #{reverse.6} parent=1 // pred_region
      // Predicated region
      $region40: #{reverse.6} parent=38 // pred_check
        _
      $region41: #{reverse.6} parent=38 // pred_check_branch
        %1314 = sbr.rel (0) target = $region43
      $region42: #{reverse.6} parent=38 // pred_region
        // Predicated region
        $region55: #{reverse.6} parent=42 // pred_check
          _
        $region56: #{reverse.6} parent=42 // pred_check_branch
          %1583 = sbr.rel (0) target = $region58
        $region57: #{reverse.6} parent=42 // pred_region
          loop: start=0, step=1, limit=1
          $region59: #{reverse.6} parent=57 // loop_pre_header
            _
          $region60: #{reverse.6} parent=57 // loop_header
            %s1585 = sphi 0, %s1589
            %p1586 = scmp.ge.s32.totalorder %s1585, 1
            %s1590 = sphi [#allocation1], [#allocation1]
            %s1591 = sphi %s1, %s1
          $region61: #{reverse.6} parent=57 // loop_header_branch
            %1588 = sbr.rel (%p1586) target = $region65
          $region62: #{reverse.6} parent=57 // loop_body
            %v1592 = vld [vmem:[%s1590] sm:$0xff]
            %1593 = vst [vmem:[%s1591] sm:$0xff] %v1592
            %v1594 = vld [vmem:[%s1590 + $0x8] sm:$0xff]
            %1595 = vst [vmem:[%s1591 + $0x8] sm:$0xff] %v1594
            %v1596 = vld [vmem:[%s1590 + $0x10] sm:$0xff]
            %1597 = vst [vmem:[%s1591 + $0x10] sm:$0xff] %v1596
            %v1598 = vld [vmem:[%s1590 + $0x18] sm:$0xff]
            %1599 = vst [vmem:[%s1591 + $0x18] sm:$0xff] %v1598
            %v1600 = vld [vmem:[%s1590 + $0x20] sm:$0xff]
            %1601 = vst [vmem:[%s1591 + $0x20] sm:$0xff] %v1600
            %v1602 = vld [vmem:[%s1590 + $0x28] sm:$0xff]
            %1603 = vst [vmem:[%s1591 + $0x28] sm:$0xff] %v1602
            %v1604 = vld [vmem:[%s1590 + $0x30] sm:$0xff]
            %1605 = vst [vmem:[%s1591 + $0x30] sm:$0xff] %v1604
            %v1606 = vld [vmem:[%s1590 + $0x38] sm:$0xff]
            %1607 = vst [vmem:[%s1591 + $0x38] sm:$0xff] %v1606
            %v1608 = vld [vmem:[%s1590 + $0x40] sm:$0xff]
            %1609 = vst [vmem:[%s1591 + $0x40] sm:$0xff] %v1608
            %v1610 = vld [vmem:[%s1590 + $0x48] sm:$0xff]
            %1611 = vst [vmem:[%s1591 + $0x48] sm:$0xff] %v1610
            %v1612 = vld [vmem:[%s1590 + $0x50] sm:$0xff]
            %1613 = vst [vmem:[%s1591 + $0x50] sm:$0xff] %v1612
            %v1614 = vld [vmem:[%s1590 + $0x58] sm:$0xff]
            %1615 = vst [vmem:[%s1591 + $0x58] sm:$0xff] %v1614
            %v1616 = vld [vmem:[%s1590 + $0x60] sm:$0xff]
            %1617 = vst [vmem:[%s1591 + $0x60] sm:$0xff] %v1616
            %v1618 = vld [vmem:[%s1590 + $0x68] sm:$0xff]
            %1619 = vst [vmem:[%s1591 + $0x68] sm:$0xff] %v1618
            %v1620 = vld [vmem:[%s1590 + $0x70] sm:$0xff]
            %1621 = vst [vmem:[%s1591 + $0x70] sm:$0xff] %v1620
            %v1622 = vld [vmem:[%s1590 + $0x78] sm:$0xff]
            %1623 = vst [vmem:[%s1591 + $0x78] sm:$0xff] %v1622
            %v1624 = vld [vmem:[%s1590 + $0x80] sm:$0xff]
            %1625 = vst [vmem:[%s1591 + $0x80] sm:$0xff] %v1624
            %v1626 = vld [vmem:[%s1590 + $0x88] sm:$0xff]
            %1627 = vst [vmem:[%s1591 + $0x88] sm:$0xff] %v1626
            %v1628 = vld [vmem:[%s1590 + $0x90] sm:$0xff]
            %1629 = vst [vmem:[%s1591 + $0x90] sm:$0xff] %v1628
            %v1630 = vld [vmem:[%s1590 + $0x98] sm:$0xff]
            %1631 = vst [vmem:[%s1591 + $0x98] sm:$0xff] %v1630
            %v1632 = vld [vmem:[%s1590 + $0xa0] sm:$0xff]
            %1633 = vst [vmem:[%s1591 + $0xa0] sm:$0xff] %v1632
            %v1634 = vld [vmem:[%s1590 + $0xa8] sm:$0xff]
            %1635 = vst [vmem:[%s1591 + $0xa8] sm:$0xff] %v1634
            %v1636 = vld [vmem:[%s1590 + $0xb0] sm:$0xff]
            %1637 = vst [vmem:[%s1591 + $0xb0] sm:$0xff] %v1636
            %v1638 = vld [vmem:[%s1590 + $0xb8] sm:$0xff]
            %1639 = vst [vmem:[%s1591 + $0xb8] sm:$0xff] %v1638
            %v1640 = vld [vmem:[%s1590 + $0xc0] sm:$0xff]
            %1641 = vst [vmem:[%s1591 + $0xc0] sm:$0xff] %v1640
            %v1642 = vld [vmem:[%s1590 + $0xc8] sm:$0xff]
            %1643 = vst [vmem:[%s1591 + $0xc8] sm:$0xff] %v1642
            %v1644 = vld [vmem:[%s1590 + $0xd0] sm:$0xff]
            %1645 = vst [vmem:[%s1591 + $0xd0] sm:$0xff] %v1644
            %v1646 = vld [vmem:[%s1590 + $0xd8] sm:$0xff]
            %1647 = vst [vmem:[%s1591 + $0xd8] sm:$0xff] %v1646
            %v1648 = vld [vmem:[%s1590 + $0xe0] sm:$0xff]
            %1649 = vst [vmem:[%s1591 + $0xe0] sm:$0xff] %v1648
            %v1650 = vld [vmem:[%s1590 + $0xe8] sm:$0xff]
            %1651 = vst [vmem:[%s1591 + $0xe8] sm:$0xff] %v1650
            %v1652 = vld [vmem:[%s1590 + $0xf0] sm:$0xff]
            %1653 = vst [vmem:[%s1591 + $0xf0] sm:$0xff] %v1652
            %v1654 = vld [vmem:[%s1590 + $0xf8] sm:$0xff]
            %1655 = vst [vmem:[%s1591 + $0xf8] sm:$0xff] %v1654
            %v1656 = vld [vmem:[%s1590 + $0x100] sm:$0xff]
            %1657 = vst [vmem:[%s1591 + $0x100] sm:$0xff] %v1656
            %v1658 = vld [vmem:[%s1590 + $0x108] sm:$0xff]
            %1659 = vst [vmem:[%s1591 + $0x108] sm:$0xff] %v1658
            %v1660 = vld [vmem:[%s1590 + $0x110] sm:$0xff]
            %1661 = vst [vmem:[%s1591 + $0x110] sm:$0xff] %v1660
            %v1662 = vld [vmem:[%s1590 + $0x118] sm:$0xff]
            %1663 = vst [vmem:[%s1591 + $0x118] sm:$0xff] %v1662
            %v1664 = vld [vmem:[%s1590 + $0x120] sm:$0xff]
            %1665 = vst [vmem:[%s1591 + $0x120] sm:$0xff] %v1664
            %v1666 = vld [vmem:[%s1590 + $0x128] sm:$0xff]
            %1667 = vst [vmem:[%s1591 + $0x128] sm:$0xff] %v1666
            %v1668 = vld [vmem:[%s1590 + $0x130] sm:$0xff]
            %1669 = vst [vmem:[%s1591 + $0x130] sm:$0xff] %v1668
            %v1670 = vld [vmem:[%s1590 + $0x138] sm:$0xff]
            %1671 = vst [vmem:[%s1591 + $0x138] sm:$0xff] %v1670
            %v1672 = vld [vmem:[%s1590 + $0x140] sm:$0xff]
            %1673 = vst [vmem:[%s1591 + $0x140] sm:$0xff] %v1672
            %v1674 = vld [vmem:[%s1590 + $0x148] sm:$0xff]
            %1675 = vst [vmem:[%s1591 + $0x148] sm:$0xff] %v1674
            %v1676 = vld [vmem:[%s1590 + $0x150] sm:$0xff]
            %1677 = vst [vmem:[%s1591 + $0x150] sm:$0xff] %v1676
            %v1678 = vld [vmem:[%s1590 + $0x158] sm:$0xff]
            %1679 = vst [vmem:[%s1591 + $0x158] sm:$0xff] %v1678
            %v1680 = vld [vmem:[%s1590 + $0x160] sm:$0xff]
            %1681 = vst [vmem:[%s1591 + $0x160] sm:$0xff] %v1680
            %v1682 = vld [vmem:[%s1590 + $0x168] sm:$0xff]
            %1683 = vst [vmem:[%s1591 + $0x168] sm:$0xff] %v1682
            %v1684 = vld [vmem:[%s1590 + $0x170] sm:$0xff]
            %1685 = vst [vmem:[%s1591 + $0x170] sm:$0xff] %v1684
            %v1686 = vld [vmem:[%s1590 + $0x178] sm:$0xff]
            %1687 = vst [vmem:[%s1591 + $0x178] sm:$0xff] %v1686
            %v1688 = vld [vmem:[%s1590 + $0x180] sm:$0xff]
            %1689 = vst [vmem:[%s1591 + $0x180] sm:$0xff] %v1688
            %v1690 = vld [vmem:[%s1590 + $0x188] sm:$0xff]
            %1691 = vst [vmem:[%s1591 + $0x188] sm:$0xff] %v1690
            %v1692 = vld [vmem:[%s1590 + $0x190] sm:$0xff]
            %1693 = vst [vmem:[%s1591 + $0x190] sm:$0xff] %v1692
            %v1694 = vld [vmem:[%s1590 + $0x198] sm:$0xff]
            %1695 = vst [vmem:[%s1591 + $0x198] sm:$0xff] %v1694
            %v1696 = vld [vmem:[%s1590 + $0x1a0] sm:$0xff]
            %1697 = vst [vmem:[%s1591 + $0x1a0] sm:$0xff] %v1696
            %v1698 = vld [vmem:[%s1590 + $0x1a8] sm:$0xff]
            %1699 = vst [vmem:[%s1591 + $0x1a8] sm:$0xff] %v1698
            %v1700 = vld [vmem:[%s1590 + $0x1b0] sm:$0xff]
            %1701 = vst [vmem:[%s1591 + $0x1b0] sm:$0xff] %v1700
            %v1702 = vld [vmem:[%s1590 + $0x1b8] sm:$0xff]
            %1703 = vst [vmem:[%s1591 + $0x1b8] sm:$0xff] %v1702
            %v1704 = vld [vmem:[%s1590 + $0x1c0] sm:$0xff]
            %1705 = vst [vmem:[%s1591 + $0x1c0] sm:$0xff] %v1704
            %v1706 = vld [vmem:[%s1590 + $0x1c8] sm:$0xff]
            %1707 = vst [vmem:[%s1591 + $0x1c8] sm:$0xff] %v1706
            %v1708 = vld [vmem:[%s1590 + $0x1d0] sm:$0xff]
            %1709 = vst [vmem:[%s1591 + $0x1d0] sm:$0xff] %v1708
            %v1710 = vld [vmem:[%s1590 + $0x1d8] sm:$0xff]
            %1711 = vst [vmem:[%s1591 + $0x1d8] sm:$0xff] %v1710
            %v1712 = vld [vmem:[%s1590 + $0x1e0] sm:$0xff]
            %1713 = vst [vmem:[%s1591 + $0x1e0] sm:$0xff] %v1712
            %v1714 = vld [vmem:[%s1590 + $0x1e8] sm:$0xff]
            %1715 = vst [vmem:[%s1591 + $0x1e8] sm:$0xff] %v1714
            %v1716 = vld [vmem:[%s1590 + $0x1f0] sm:$0xff]
            %1717 = vst [vmem:[%s1591 + $0x1f0] sm:$0xff] %v1716
            %v1718 = vld [vmem:[%s1590 + $0x1f8] sm:$0xff]
            %1719 = vst [vmem:[%s1591 + $0x1f8] sm:$0xff] %v1718
            %v1720 = vld [vmem:[%s1590 + $0x200] sm:$0xff]
            %1721 = vst [vmem:[%s1591 + $0x200] sm:$0xff] %v1720
            %v1722 = vld [vmem:[%s1590 + $0x208] sm:$0xff]
            %1723 = vst [vmem:[%s1591 + $0x208] sm:$0xff] %v1722
            %v1724 = vld [vmem:[%s1590 + $0x210] sm:$0xff]
            %1725 = vst [vmem:[%s1591 + $0x210] sm:$0xff] %v1724
            %v1726 = vld [vmem:[%s1590 + $0x218] sm:$0xff]
            %1727 = vst [vmem:[%s1591 + $0x218] sm:$0xff] %v1726
            %v1728 = vld [vmem:[%s1590 + $0x220] sm:$0xff]
            %1729 = vst [vmem:[%s1591 + $0x220] sm:$0xff] %v1728
            %v1730 = vld [vmem:[%s1590 + $0x228] sm:$0xff]
            %1731 = vst [vmem:[%s1591 + $0x228] sm:$0xff] %v1730
            %v1732 = vld [vmem:[%s1590 + $0x230] sm:$0xff]
            %1733 = vst [vmem:[%s1591 + $0x230] sm:$0xff] %v1732
            %v1734 = vld [vmem:[%s1590 + $0x238] sm:$0xff]
            %1735 = vst [vmem:[%s1591 + $0x238] sm:$0xff] %v1734
            %v1736 = vld [vmem:[%s1590 + $0x240] sm:$0xff]
            %1737 = vst [vmem:[%s1591 + $0x240] sm:$0xff] %v1736
            %v1738 = vld [vmem:[%s1590 + $0x248] sm:$0xff]
            %1739 = vst [vmem:[%s1591 + $0x248] sm:$0xff] %v1738
            %v1740 = vld [vmem:[%s1590 + $0x250] sm:$0xff]
            %1741 = vst [vmem:[%s1591 + $0x250] sm:$0xff] %v1740
            %v1742 = vld [vmem:[%s1590 + $0x258] sm:$0xff]
            %1743 = vst [vmem:[%s1591 + $0x258] sm:$0xff] %v1742
            %v1744 = vld [vmem:[%s1590 + $0x260] sm:$0xff]
            %1745 = vst [vmem:[%s1591 + $0x260] sm:$0xff] %v1744
            %v1746 = vld [vmem:[%s1590 + $0x268] sm:$0xff]
            %1747 = vst [vmem:[%s1591 + $0x268] sm:$0xff] %v1746
            %v1748 = vld [vmem:[%s1590 + $0x270] sm:$0xff]
            %1749 = vst [vmem:[%s1591 + $0x270] sm:$0xff] %v1748
            %v1750 = vld [vmem:[%s1590 + $0x278] sm:$0xff]
            %1751 = vst [vmem:[%s1591 + $0x278] sm:$0xff] %v1750
            %v1752 = vld [vmem:[%s1590 + $0x280] sm:$0xff]
            %1753 = vst [vmem:[%s1591 + $0x280] sm:$0xff] %v1752
            %v1754 = vld [vmem:[%s1590 + $0x288] sm:$0xff]
            %1755 = vst [vmem:[%s1591 + $0x288] sm:$0xff] %v1754
            %v1756 = vld [vmem:[%s1590 + $0x290] sm:$0xff]
            %1757 = vst [vmem:[%s1591 + $0x290] sm:$0xff] %v1756
            %v1758 = vld [vmem:[%s1590 + $0x298] sm:$0xff]
            %1759 = vst [vmem:[%s1591 + $0x298] sm:$0xff] %v1758
            %v1760 = vld [vmem:[%s1590 + $0x2a0] sm:$0xff]
            %1761 = vst [vmem:[%s1591 + $0x2a0] sm:$0xff] %v1760
            %v1762 = vld [vmem:[%s1590 + $0x2a8] sm:$0xff]
            %1763 = vst [vmem:[%s1591 + $0x2a8] sm:$0xff] %v1762
            %v1764 = vld [vmem:[%s1590 + $0x2b0] sm:$0xff]
            %1765 = vst [vmem:[%s1591 + $0x2b0] sm:$0xff] %v1764
            %v1766 = vld [vmem:[%s1590 + $0x2b8] sm:$0xff]
            %1767 = vst [vmem:[%s1591 + $0x2b8] sm:$0xff] %v1766
            %v1768 = vld [vmem:[%s1590 + $0x2c0] sm:$0xff]
            %1769 = vst [vmem:[%s1591 + $0x2c0] sm:$0xff] %v1768
            %v1770 = vld [vmem:[%s1590 + $0x2c8] sm:$0xff]
            %1771 = vst [vmem:[%s1591 + $0x2c8] sm:$0xff] %v1770
            %v1772 = vld [vmem:[%s1590 + $0x2d0] sm:$0xff]
            %1773 = vst [vmem:[%s1591 + $0x2d0] sm:$0xff] %v1772
            %v1774 = vld [vmem:[%s1590 + $0x2d8] sm:$0xff]
            %1775 = vst [vmem:[%s1591 + $0x2d8] sm:$0xff] %v1774
            %v1776 = vld [vmem:[%s1590 + $0x2e0] sm:$0xff]
            %1777 = vst [vmem:[%s1591 + $0x2e0] sm:$0xff] %v1776
            %v1778 = vld [vmem:[%s1590 + $0x2e8] sm:$0xff]
            %1779 = vst [vmem:[%s1591 + $0x2e8] sm:$0xff] %v1778
            %v1780 = vld [vmem:[%s1590 + $0x2f0] sm:$0xff]
            %1781 = vst [vmem:[%s1591 + $0x2f0] sm:$0xff] %v1780
            %v1782 = vld [vmem:[%s1590 + $0x2f8] sm:$0xff]
            %1783 = vst [vmem:[%s1591 + $0x2f8] sm:$0xff] %v1782
            %v1784 = vld [vmem:[%s1590 + $0x300] sm:$0xff]
            %1785 = vst [vmem:[%s1591 + $0x300] sm:$0xff] %v1784
            %v1786 = vld [vmem:[%s1590 + $0x308] sm:$0xff]
            %1787 = vst [vmem:[%s1591 + $0x308] sm:$0xff] %v1786
            %v1788 = vld [vmem:[%s1590 + $0x310] sm:$0xff]
            %1789 = vst [vmem:[%s1591 + $0x310] sm:$0xff] %v1788
            %v1790 = vld [vmem:[%s1590 + $0x318] sm:$0xff]
            %1791 = vst [vmem:[%s1591 + $0x318] sm:$0xff] %v1790
            %v1792 = vld [vmem:[%s1590 + $0x320] sm:$0xff]
            %1793 = vst [vmem:[%s1591 + $0x320] sm:$0xff] %v1792
            %v1794 = vld [vmem:[%s1590 + $0x328] sm:$0xff]
            %1795 = vst [vmem:[%s1591 + $0x328] sm:$0xff] %v1794
            %v1796 = vld [vmem:[%s1590 + $0x330] sm:$0xff]
            %1797 = vst [vmem:[%s1591 + $0x330] sm:$0xff] %v1796
            %v1798 = vld [vmem:[%s1590 + $0x338] sm:$0xff]
            %1799 = vst [vmem:[%s1591 + $0x338] sm:$0xff] %v1798
            %v1800 = vld [vmem:[%s1590 + $0x340] sm:$0xff]
            %1801 = vst [vmem:[%s1591 + $0x340] sm:$0xff] %v1800
            %v1802 = vld [vmem:[%s1590 + $0x348] sm:$0xff]
            %1803 = vst [vmem:[%s1591 + $0x348] sm:$0xff] %v1802
            %v1804 = vld [vmem:[%s1590 + $0x350] sm:$0xff]
            %1805 = vst [vmem:[%s1591 + $0x350] sm:$0xff] %v1804
            %v1806 = vld [vmem:[%s1590 + $0x358] sm:$0xff]
            %1807 = vst [vmem:[%s1591 + $0x358] sm:$0xff] %v1806
            %v1808 = vld [vmem:[%s1590 + $0x360] sm:$0xff]
            %1809 = vst [vmem:[%s1591 + $0x360] sm:$0xff] %v1808
            %v1810 = vld [vmem:[%s1590 + $0x368] sm:$0xff]
            %1811 = vst [vmem:[%s1591 + $0x368] sm:$0xff] %v1810
            %v1812 = vld [vmem:[%s1590 + $0x370] sm:$0xff]
            %1813 = vst [vmem:[%s1591 + $0x370] sm:$0xff] %v1812
            %v1814 = vld [vmem:[%s1590 + $0x378] sm:$0xff]
            %1815 = vst [vmem:[%s1591 + $0x378] sm:$0xff] %v1814
            %v1816 = vld [vmem:[%s1590 + $0x380] sm:$0xff]
            %1817 = vst [vmem:[%s1591 + $0x380] sm:$0xff] %v1816
            %v1818 = vld [vmem:[%s1590 + $0x388] sm:$0xff]
            %1819 = vst [vmem:[%s1591 + $0x388] sm:$0xff] %v1818
            %v1820 = vld [vmem:[%s1590 + $0x390] sm:$0xff]
            %1821 = vst [vmem:[%s1591 + $0x390] sm:$0xff] %v1820
            %v1822 = vld [vmem:[%s1590 + $0x398] sm:$0xff]
            %1823 = vst [vmem:[%s1591 + $0x398] sm:$0xff] %v1822
            %v1824 = vld [vmem:[%s1590 + $0x3a0] sm:$0xff]
            %1825 = vst [vmem:[%s1591 + $0x3a0] sm:$0xff] %v1824
            %v1826 = vld [vmem:[%s1590 + $0x3a8] sm:$0xff]
            %1827 = vst [vmem:[%s1591 + $0x3a8] sm:$0xff] %v1826
            %v1828 = vld [vmem:[%s1590 + $0x3b0] sm:$0xff]
            %1829 = vst [vmem:[%s1591 + $0x3b0] sm:$0xff] %v1828
            %v1830 = vld [vmem:[%s1590 + $0x3b8] sm:$0xff]
            %1831 = vst [vmem:[%s1591 + $0x3b8] sm:$0xff] %v1830
            %v1832 = vld [vmem:[%s1590 + $0x3c0] sm:$0xff]
            %1833 = vst [vmem:[%s1591 + $0x3c0] sm:$0xff] %v1832
            %v1834 = vld [vmem:[%s1590 + $0x3c8] sm:$0xff]
            %1835 = vst [vmem:[%s1591 + $0x3c8] sm:$0xff] %v1834
            %v1836 = vld [vmem:[%s1590 + $0x3d0] sm:$0xff]
            %1837 = vst [vmem:[%s1591 + $0x3d0] sm:$0xff] %v1836
            %v1838 = vld [vmem:[%s1590 + $0x3d8] sm:$0xff]
            %1839 = vst [vmem:[%s1591 + $0x3d8] sm:$0xff] %v1838
            %v1840 = vld [vmem:[%s1590 + $0x3e0] sm:$0xff]
            %1841 = vst [vmem:[%s1591 + $0x3e0] sm:$0xff] %v1840
            %v1842 = vld [vmem:[%s1590 + $0x3e8] sm:$0xff]
            %1843 = vst [vmem:[%s1591 + $0x3e8] sm:$0xff] %v1842
            %v1844 = vld [vmem:[%s1590 + $0x3f0] sm:$0xff]
            %1845 = vst [vmem:[%s1591 + $0x3f0] sm:$0xff] %v1844
            %v1846 = vld [vmem:[%s1590 + $0x3f8] sm:$0xff]
            %1847 = vst [vmem:[%s1591 + $0x3f8] sm:$0xff] %v1846
          $region63: #{reverse.6} parent=57 // loop_footer
            %s1589 = sadd.s32 1, %s1585
          $region64: #{reverse.6} parent=57 // loop_footer_branch
            %1584 = sbr.rel target = $region60
          $region65: #{reverse.6} parent=57 // loop_exit
            _
        $region58: #{reverse.6} parent=42 // pred_fallthru
          _
        // Predicated region
        $region66: #{reverse.6} parent=42 // pred_check
          _
        $region67: #{reverse.6} parent=42 // pred_check_branch
          %1849 = sbr.rel target = $region69
        $region68: #{reverse.6} parent=42 // pred_region
          _
        $region69: #{reverse.6} parent=42 // pred_fallthru
          _
      $region43: #{reverse.6} parent=38 // pred_fallthru
        _
      // Predicated region
      $region44: #{reverse.6} parent=38 // pred_check
        _
      $region45: #{reverse.6} parent=38 // pred_check_branch
        %1316 = sbr.rel target = $region47
      $region46: #{reverse.6} parent=38 // pred_region
        loop: start=0, step=1, limit=1
        $region48: #{reverse.6} parent=46 // loop_pre_header
          _
        $region49: #{reverse.6} parent=46 // loop_header
          %s1319 = sphi 0, %s1323
          %p1320 = scmp.ge.s32.totalorder %s1319, 1
          %s1324 = sphi [#allocation1], [#allocation1]
          %s1325 = sphi %s1, %s1
        $region50: #{reverse.6} parent=46 // loop_header_branch
          %1322 = sbr.rel (%p1320) target = $region54
        $region51: #{reverse.6} parent=46 // loop_body
          %v1326 = vld [vmem:[%s1324] sm:$0xff]
          %1327 = vst [vmem:[%s1325] sm:$0xff] %v1326
          %v1328 = vld [vmem:[%s1324 + $0x8] sm:$0xff]
          %1329 = vst [vmem:[%s1325 + $0x8] sm:$0xff] %v1328
          %v1330 = vld [vmem:[%s1324 + $0x10] sm:$0xff]
          %1331 = vst [vmem:[%s1325 + $0x10] sm:$0xff] %v1330
          %v1332 = vld [vmem:[%s1324 + $0x18] sm:$0xff]
          %1333 = vst [vmem:[%s1325 + $0x18] sm:$0xff] %v1332
          %v1334 = vld [vmem:[%s1324 + $0x20] sm:$0xff]
          %1335 = vst [vmem:[%s1325 + $0x20] sm:$0xff] %v1334
          %v1336 = vld [vmem:[%s1324 + $0x28] sm:$0xff]
          %1337 = vst [vmem:[%s1325 + $0x28] sm:$0xff] %v1336
          %v1338 = vld [vmem:[%s1324 + $0x30] sm:$0xff]
          %1339 = vst [vmem:[%s1325 + $0x30] sm:$0xff] %v1338
          %v1340 = vld [vmem:[%s1324 + $0x38] sm:$0xff]
          %1341 = vst [vmem:[%s1325 + $0x38] sm:$0xff] %v1340
          %v1342 = vld [vmem:[%s1324 + $0x40] sm:$0xff]
          %1343 = vst [vmem:[%s1325 + $0x40] sm:$0xff] %v1342
          %v1344 = vld [vmem:[%s1324 + $0x48] sm:$0xff]
          %1345 = vst [vmem:[%s1325 + $0x48] sm:$0xff] %v1344
          %v1346 = vld [vmem:[%s1324 + $0x50] sm:$0xff]
          %1347 = vst [vmem:[%s1325 + $0x50] sm:$0xff] %v1346
          %v1348 = vld [vmem:[%s1324 + $0x58] sm:$0xff]
          %1349 = vst [vmem:[%s1325 + $0x58] sm:$0xff] %v1348
          %v1350 = vld [vmem:[%s1324 + $0x60] sm:$0xff]
          %1351 = vst [vmem:[%s1325 + $0x60] sm:$0xff] %v1350
          %v1352 = vld [vmem:[%s1324 + $0x68] sm:$0xff]
          %1353 = vst [vmem:[%s1325 + $0x68] sm:$0xff] %v1352
          %v1354 = vld [vmem:[%s1324 + $0x70] sm:$0xff]
          %1355 = vst [vmem:[%s1325 + $0x70] sm:$0xff] %v1354
          %v1356 = vld [vmem:[%s1324 + $0x78] sm:$0xff]
          %1357 = vst [vmem:[%s1325 + $0x78] sm:$0xff] %v1356
          %v1358 = vld [vmem:[%s1324 + $0x80] sm:$0xff]
          %1359 = vst [vmem:[%s1325 + $0x80] sm:$0xff] %v1358
          %v1360 = vld [vmem:[%s1324 + $0x88] sm:$0xff]
          %1361 = vst [vmem:[%s1325 + $0x88] sm:$0xff] %v1360
          %v1362 = vld [vmem:[%s1324 + $0x90] sm:$0xff]
          %1363 = vst [vmem:[%s1325 + $0x90] sm:$0xff] %v1362
          %v1364 = vld [vmem:[%s1324 + $0x98] sm:$0xff]
          %1365 = vst [vmem:[%s1325 + $0x98] sm:$0xff] %v1364
          %v1366 = vld [vmem:[%s1324 + $0xa0] sm:$0xff]
          %1367 = vst [vmem:[%s1325 + $0xa0] sm:$0xff] %v1366
          %v1368 = vld [vmem:[%s1324 + $0xa8] sm:$0xff]
          %1369 = vst [vmem:[%s1325 + $0xa8] sm:$0xff] %v1368
          %v1370 = vld [vmem:[%s1324 + $0xb0] sm:$0xff]
          %1371 = vst [vmem:[%s1325 + $0xb0] sm:$0xff] %v1370
          %v1372 = vld [vmem:[%s1324 + $0xb8] sm:$0xff]
          %1373 = vst [vmem:[%s1325 + $0xb8] sm:$0xff] %v1372
          %v1374 = vld [vmem:[%s1324 + $0xc0] sm:$0xff]
          %1375 = vst [vmem:[%s1325 + $0xc0] sm:$0xff] %v1374
          %v1376 = vld [vmem:[%s1324 + $0xc8] sm:$0xff]
          %1377 = vst [vmem:[%s1325 + $0xc8] sm:$0xff] %v1376
          %v1378 = vld [vmem:[%s1324 + $0xd0] sm:$0xff]
          %1379 = vst [vmem:[%s1325 + $0xd0] sm:$0xff] %v1378
          %v1380 = vld [vmem:[%s1324 + $0xd8] sm:$0xff]
          %1381 = vst [vmem:[%s1325 + $0xd8] sm:$0xff] %v1380
          %v1382 = vld [vmem:[%s1324 + $0xe0] sm:$0xff]
          %1383 = vst [vmem:[%s1325 + $0xe0] sm:$0xff] %v1382
          %v1384 = vld [vmem:[%s1324 + $0xe8] sm:$0xff]
          %1385 = vst [vmem:[%s1325 + $0xe8] sm:$0xff] %v1384
          %v1386 = vld [vmem:[%s1324 + $0xf0] sm:$0xff]
          %1387 = vst [vmem:[%s1325 + $0xf0] sm:$0xff] %v1386
          %v1388 = vld [vmem:[%s1324 + $0xf8] sm:$0xff]
          %1389 = vst [vmem:[%s1325 + $0xf8] sm:$0xff] %v1388
          %v1390 = vld [vmem:[%s1324 + $0x100] sm:$0xff]
          %1391 = vst [vmem:[%s1325 + $0x100] sm:$0xff] %v1390
          %v1392 = vld [vmem:[%s1324 + $0x108] sm:$0xff]
          %1393 = vst [vmem:[%s1325 + $0x108] sm:$0xff] %v1392
          %v1394 = vld [vmem:[%s1324 + $0x110] sm:$0xff]
          %1395 = vst [vmem:[%s1325 + $0x110] sm:$0xff] %v1394
          %v1396 = vld [vmem:[%s1324 + $0x118] sm:$0xff]
          %1397 = vst [vmem:[%s1325 + $0x118] sm:$0xff] %v1396
          %v1398 = vld [vmem:[%s1324 + $0x120] sm:$0xff]
          %1399 = vst [vmem:[%s1325 + $0x120] sm:$0xff] %v1398
          %v1400 = vld [vmem:[%s1324 + $0x128] sm:$0xff]
          %1401 = vst [vmem:[%s1325 + $0x128] sm:$0xff] %v1400
          %v1402 = vld [vmem:[%s1324 + $0x130] sm:$0xff]
          %1403 = vst [vmem:[%s1325 + $0x130] sm:$0xff] %v1402
          %v1404 = vld [vmem:[%s1324 + $0x138] sm:$0xff]
          %1405 = vst [vmem:[%s1325 + $0x138] sm:$0xff] %v1404
          %v1406 = vld [vmem:[%s1324 + $0x140] sm:$0xff]
          %1407 = vst [vmem:[%s1325 + $0x140] sm:$0xff] %v1406
          %v1408 = vld [vmem:[%s1324 + $0x148] sm:$0xff]
          %1409 = vst [vmem:[%s1325 + $0x148] sm:$0xff] %v1408
          %v1410 = vld [vmem:[%s1324 + $0x150] sm:$0xff]
          %1411 = vst [vmem:[%s1325 + $0x150] sm:$0xff] %v1410
          %v1412 = vld [vmem:[%s1324 + $0x158] sm:$0xff]
          %1413 = vst [vmem:[%s1325 + $0x158] sm:$0xff] %v1412
          %v1414 = vld [vmem:[%s1324 + $0x160] sm:$0xff]
          %1415 = vst [vmem:[%s1325 + $0x160] sm:$0xff] %v1414
          %v1416 = vld [vmem:[%s1324 + $0x168] sm:$0xff]
          %1417 = vst [vmem:[%s1325 + $0x168] sm:$0xff] %v1416
          %v1418 = vld [vmem:[%s1324 + $0x170] sm:$0xff]
          %1419 = vst [vmem:[%s1325 + $0x170] sm:$0xff] %v1418
          %v1420 = vld [vmem:[%s1324 + $0x178] sm:$0xff]
          %1421 = vst [vmem:[%s1325 + $0x178] sm:$0xff] %v1420
          %v1422 = vld [vmem:[%s1324 + $0x180] sm:$0xff]
          %1423 = vst [vmem:[%s1325 + $0x180] sm:$0xff] %v1422
          %v1424 = vld [vmem:[%s1324 + $0x188] sm:$0xff]
          %1425 = vst [vmem:[%s1325 + $0x188] sm:$0xff] %v1424
          %v1426 = vld [vmem:[%s1324 + $0x190] sm:$0xff]
          %1427 = vst [vmem:[%s1325 + $0x190] sm:$0xff] %v1426
          %v1428 = vld [vmem:[%s1324 + $0x198] sm:$0xff]
          %1429 = vst [vmem:[%s1325 + $0x198] sm:$0xff] %v1428
          %v1430 = vld [vmem:[%s1324 + $0x1a0] sm:$0xff]
          %1431 = vst [vmem:[%s1325 + $0x1a0] sm:$0xff] %v1430
          %v1432 = vld [vmem:[%s1324 + $0x1a8] sm:$0xff]
          %1433 = vst [vmem:[%s1325 + $0x1a8] sm:$0xff] %v1432
          %v1434 = vld [vmem:[%s1324 + $0x1b0] sm:$0xff]
          %1435 = vst [vmem:[%s1325 + $0x1b0] sm:$0xff] %v1434
          %v1436 = vld [vmem:[%s1324 + $0x1b8] sm:$0xff]
          %1437 = vst [vmem:[%s1325 + $0x1b8] sm:$0xff] %v1436
          %v1438 = vld [vmem:[%s1324 + $0x1c0] sm:$0xff]
          %1439 = vst [vmem:[%s1325 + $0x1c0] sm:$0xff] %v1438
          %v1440 = vld [vmem:[%s1324 + $0x1c8] sm:$0xff]
          %1441 = vst [vmem:[%s1325 + $0x1c8] sm:$0xff] %v1440
          %v1442 = vld [vmem:[%s1324 + $0x1d0] sm:$0xff]
          %1443 = vst [vmem:[%s1325 + $0x1d0] sm:$0xff] %v1442
          %v1444 = vld [vmem:[%s1324 + $0x1d8] sm:$0xff]
          %1445 = vst [vmem:[%s1325 + $0x1d8] sm:$0xff] %v1444
          %v1446 = vld [vmem:[%s1324 + $0x1e0] sm:$0xff]
          %1447 = vst [vmem:[%s1325 + $0x1e0] sm:$0xff] %v1446
          %v1448 = vld [vmem:[%s1324 + $0x1e8] sm:$0xff]
          %1449 = vst [vmem:[%s1325 + $0x1e8] sm:$0xff] %v1448
          %v1450 = vld [vmem:[%s1324 + $0x1f0] sm:$0xff]
          %1451 = vst [vmem:[%s1325 + $0x1f0] sm:$0xff] %v1450
          %v1452 = vld [vmem:[%s1324 + $0x1f8] sm:$0xff]
          %1453 = vst [vmem:[%s1325 + $0x1f8] sm:$0xff] %v1452
          %v1454 = vld [vmem:[%s1324 + $0x200] sm:$0xff]
          %1455 = vst [vmem:[%s1325 + $0x200] sm:$0xff] %v1454
          %v1456 = vld [vmem:[%s1324 + $0x208] sm:$0xff]
          %1457 = vst [vmem:[%s1325 + $0x208] sm:$0xff] %v1456
          %v1458 = vld [vmem:[%s1324 + $0x210] sm:$0xff]
          %1459 = vst [vmem:[%s1325 + $0x210] sm:$0xff] %v1458
          %v1460 = vld [vmem:[%s1324 + $0x218] sm:$0xff]
          %1461 = vst [vmem:[%s1325 + $0x218] sm:$0xff] %v1460
          %v1462 = vld [vmem:[%s1324 + $0x220] sm:$0xff]
          %1463 = vst [vmem:[%s1325 + $0x220] sm:$0xff] %v1462
          %v1464 = vld [vmem:[%s1324 + $0x228] sm:$0xff]
          %1465 = vst [vmem:[%s1325 + $0x228] sm:$0xff] %v1464
          %v1466 = vld [vmem:[%s1324 + $0x230] sm:$0xff]
          %1467 = vst [vmem:[%s1325 + $0x230] sm:$0xff] %v1466
          %v1468 = vld [vmem:[%s1324 + $0x238] sm:$0xff]
          %1469 = vst [vmem:[%s1325 + $0x238] sm:$0xff] %v1468
          %v1470 = vld [vmem:[%s1324 + $0x240] sm:$0xff]
          %1471 = vst [vmem:[%s1325 + $0x240] sm:$0xff] %v1470
          %v1472 = vld [vmem:[%s1324 + $0x248] sm:$0xff]
          %1473 = vst [vmem:[%s1325 + $0x248] sm:$0xff] %v1472
          %v1474 = vld [vmem:[%s1324 + $0x250] sm:$0xff]
          %1475 = vst [vmem:[%s1325 + $0x250] sm:$0xff] %v1474
          %v1476 = vld [vmem:[%s1324 + $0x258] sm:$0xff]
          %1477 = vst [vmem:[%s1325 + $0x258] sm:$0xff] %v1476
          %v1478 = vld [vmem:[%s1324 + $0x260] sm:$0xff]
          %1479 = vst [vmem:[%s1325 + $0x260] sm:$0xff] %v1478
          %v1480 = vld [vmem:[%s1324 + $0x268] sm:$0xff]
          %1481 = vst [vmem:[%s1325 + $0x268] sm:$0xff] %v1480
          %v1482 = vld [vmem:[%s1324 + $0x270] sm:$0xff]
          %1483 = vst [vmem:[%s1325 + $0x270] sm:$0xff] %v1482
          %v1484 = vld [vmem:[%s1324 + $0x278] sm:$0xff]
          %1485 = vst [vmem:[%s1325 + $0x278] sm:$0xff] %v1484
          %v1486 = vld [vmem:[%s1324 + $0x280] sm:$0xff]
          %1487 = vst [vmem:[%s1325 + $0x280] sm:$0xff] %v1486
          %v1488 = vld [vmem:[%s1324 + $0x288] sm:$0xff]
          %1489 = vst [vmem:[%s1325 + $0x288] sm:$0xff] %v1488
          %v1490 = vld [vmem:[%s1324 + $0x290] sm:$0xff]
          %1491 = vst [vmem:[%s1325 + $0x290] sm:$0xff] %v1490
          %v1492 = vld [vmem:[%s1324 + $0x298] sm:$0xff]
          %1493 = vst [vmem:[%s1325 + $0x298] sm:$0xff] %v1492
          %v1494 = vld [vmem:[%s1324 + $0x2a0] sm:$0xff]
          %1495 = vst [vmem:[%s1325 + $0x2a0] sm:$0xff] %v1494
          %v1496 = vld [vmem:[%s1324 + $0x2a8] sm:$0xff]
          %1497 = vst [vmem:[%s1325 + $0x2a8] sm:$0xff] %v1496
          %v1498 = vld [vmem:[%s1324 + $0x2b0] sm:$0xff]
          %1499 = vst [vmem:[%s1325 + $0x2b0] sm:$0xff] %v1498
          %v1500 = vld [vmem:[%s1324 + $0x2b8] sm:$0xff]
          %1501 = vst [vmem:[%s1325 + $0x2b8] sm:$0xff] %v1500
          %v1502 = vld [vmem:[%s1324 + $0x2c0] sm:$0xff]
          %1503 = vst [vmem:[%s1325 + $0x2c0] sm:$0xff] %v1502
          %v1504 = vld [vmem:[%s1324 + $0x2c8] sm:$0xff]
          %1505 = vst [vmem:[%s1325 + $0x2c8] sm:$0xff] %v1504
          %v1506 = vld [vmem:[%s1324 + $0x2d0] sm:$0xff]
          %1507 = vst [vmem:[%s1325 + $0x2d0] sm:$0xff] %v1506
          %v1508 = vld [vmem:[%s1324 + $0x2d8] sm:$0xff]
          %1509 = vst [vmem:[%s1325 + $0x2d8] sm:$0xff] %v1508
          %v1510 = vld [vmem:[%s1324 + $0x2e0] sm:$0xff]
          %1511 = vst [vmem:[%s1325 + $0x2e0] sm:$0xff] %v1510
          %v1512 = vld [vmem:[%s1324 + $0x2e8] sm:$0xff]
          %1513 = vst [vmem:[%s1325 + $0x2e8] sm:$0xff] %v1512
          %v1514 = vld [vmem:[%s1324 + $0x2f0] sm:$0xff]
          %1515 = vst [vmem:[%s1325 + $0x2f0] sm:$0xff] %v1514
          %v1516 = vld [vmem:[%s1324 + $0x2f8] sm:$0xff]
          %1517 = vst [vmem:[%s1325 + $0x2f8] sm:$0xff] %v1516
          %v1518 = vld [vmem:[%s1324 + $0x300] sm:$0xff]
          %1519 = vst [vmem:[%s1325 + $0x300] sm:$0xff] %v1518
          %v1520 = vld [vmem:[%s1324 + $0x308] sm:$0xff]
          %1521 = vst [vmem:[%s1325 + $0x308] sm:$0xff] %v1520
          %v1522 = vld [vmem:[%s1324 + $0x310] sm:$0xff]
          %1523 = vst [vmem:[%s1325 + $0x310] sm:$0xff] %v1522
          %v1524 = vld [vmem:[%s1324 + $0x318] sm:$0xff]
          %1525 = vst [vmem:[%s1325 + $0x318] sm:$0xff] %v1524
          %v1526 = vld [vmem:[%s1324 + $0x320] sm:$0xff]
          %1527 = vst [vmem:[%s1325 + $0x320] sm:$0xff] %v1526
          %v1528 = vld [vmem:[%s1324 + $0x328] sm:$0xff]
          %1529 = vst [vmem:[%s1325 + $0x328] sm:$0xff] %v1528
          %v1530 = vld [vmem:[%s1324 + $0x330] sm:$0xff]
          %1531 = vst [vmem:[%s1325 + $0x330] sm:$0xff] %v1530
          %v1532 = vld [vmem:[%s1324 + $0x338] sm:$0xff]
          %1533 = vst [vmem:[%s1325 + $0x338] sm:$0xff] %v1532
          %v1534 = vld [vmem:[%s1324 + $0x340] sm:$0xff]
          %1535 = vst [vmem:[%s1325 + $0x340] sm:$0xff] %v1534
          %v1536 = vld [vmem:[%s1324 + $0x348] sm:$0xff]
          %1537 = vst [vmem:[%s1325 + $0x348] sm:$0xff] %v1536
          %v1538 = vld [vmem:[%s1324 + $0x350] sm:$0xff]
          %1539 = vst [vmem:[%s1325 + $0x350] sm:$0xff] %v1538
          %v1540 = vld [vmem:[%s1324 + $0x358] sm:$0xff]
          %1541 = vst [vmem:[%s1325 + $0x358] sm:$0xff] %v1540
          %v1542 = vld [vmem:[%s1324 + $0x360] sm:$0xff]
          %1543 = vst [vmem:[%s1325 + $0x360] sm:$0xff] %v1542
          %v1544 = vld [vmem:[%s1324 + $0x368] sm:$0xff]
          %1545 = vst [vmem:[%s1325 + $0x368] sm:$0xff] %v1544
          %v1546 = vld [vmem:[%s1324 + $0x370] sm:$0xff]
          %1547 = vst [vmem:[%s1325 + $0x370] sm:$0xff] %v1546
          %v1548 = vld [vmem:[%s1324 + $0x378] sm:$0xff]
          %1549 = vst [vmem:[%s1325 + $0x378] sm:$0xff] %v1548
          %v1550 = vld [vmem:[%s1324 + $0x380] sm:$0xff]
          %1551 = vst [vmem:[%s1325 + $0x380] sm:$0xff] %v1550
          %v1552 = vld [vmem:[%s1324 + $0x388] sm:$0xff]
          %1553 = vst [vmem:[%s1325 + $0x388] sm:$0xff] %v1552
          %v1554 = vld [vmem:[%s1324 + $0x390] sm:$0xff]
          %1555 = vst [vmem:[%s1325 + $0x390] sm:$0xff] %v1554
          %v1556 = vld [vmem:[%s1324 + $0x398] sm:$0xff]
          %1557 = vst [vmem:[%s1325 + $0x398] sm:$0xff] %v1556
          %v1558 = vld [vmem:[%s1324 + $0x3a0] sm:$0xff]
          %1559 = vst [vmem:[%s1325 + $0x3a0] sm:$0xff] %v1558
          %v1560 = vld [vmem:[%s1324 + $0x3a8] sm:$0xff]
          %1561 = vst [vmem:[%s1325 + $0x3a8] sm:$0xff] %v1560
          %v1562 = vld [vmem:[%s1324 + $0x3b0] sm:$0xff]
          %1563 = vst [vmem:[%s1325 + $0x3b0] sm:$0xff] %v1562
          %v1564 = vld [vmem:[%s1324 + $0x3b8] sm:$0xff]
          %1565 = vst [vmem:[%s1325 + $0x3b8] sm:$0xff] %v1564
          %v1566 = vld [vmem:[%s1324 + $0x3c0] sm:$0xff]
          %1567 = vst [vmem:[%s1325 + $0x3c0] sm:$0xff] %v1566
          %v1568 = vld [vmem:[%s1324 + $0x3c8] sm:$0xff]
          %1569 = vst [vmem:[%s1325 + $0x3c8] sm:$0xff] %v1568
          %v1570 = vld [vmem:[%s1324 + $0x3d0] sm:$0xff]
          %1571 = vst [vmem:[%s1325 + $0x3d0] sm:$0xff] %v1570
          %v1572 = vld [vmem:[%s1324 + $0x3d8] sm:$0xff]
          %1573 = vst [vmem:[%s1325 + $0x3d8] sm:$0xff] %v1572
          %v1574 = vld [vmem:[%s1324 + $0x3e0] sm:$0xff]
          %1575 = vst [vmem:[%s1325 + $0x3e0] sm:$0xff] %v1574
          %v1576 = vld [vmem:[%s1324 + $0x3e8] sm:$0xff]
          %1577 = vst [vmem:[%s1325 + $0x3e8] sm:$0xff] %v1576
          %v1578 = vld [vmem:[%s1324 + $0x3f0] sm:$0xff]
          %1579 = vst [vmem:[%s1325 + $0x3f0] sm:$0xff] %v1578
          %v1580 = vld [vmem:[%s1324 + $0x3f8] sm:$0xff]
          %1581 = vst [vmem:[%s1325 + $0x3f8] sm:$0xff] %v1580
        $region52: #{reverse.6} parent=46 // loop_footer
          %s1323 = sadd.s32 1, %s1319
        $region53: #{reverse.6} parent=46 // loop_footer_branch
          %1318 = sbr.rel target = $region49
        $region54: #{reverse.6} parent=46 // loop_exit
          _
      $region47: #{reverse.6} parent=38 // pred_fallthru
        _
    $region39: #{reverse.6} parent=1 // pred_fallthru
      _
    %1850 = vnop

</llo_original>
